<compile_context>
chip_gen: v6e
topology: v6e:2x2x1
jax: 0.10.0
libtpu: 0.0.40
codegen_flags: <defaults>
</compile_context>

<pallas_src>
import jax
import jax.numpy as jnp
from jax.experimental import pallas as pl
from jax.experimental.pallas import tpu as pltpu

KER = 3
BN_EPS = 1e-5
LRELU_SLOPE = 0.2

_VMEM = pl.BlockSpec(memory_space=pltpu.MemorySpace.VMEM)


# ----------------------------------------------------------------------------
# Fused Pallas kernel
# ----------------------------------------------------------------------------
def _make_fused_kernel(n_blocks, n_batch, h0, w0):
    """Fused head + body + tail kernel.

    Activations are channel-major and flat over (n, h, w):
        act[c, n*h0*w0 + h*w0 + w]
    A VALID 3x3 conv output at flat position m reads m + kh*w0 + kw, so each
    conv is 9 static lane slices + one sublane concat (im2col, K = 9*Cin) and
    a single MXU matmul whose result keeps the spatial axis lane-dense.
    Flat positions whose (h, w) fall outside the shrinking valid window hold
    garbage; they are excluded from the BatchNorm statistics via per-layer
    masks and zeroed before feeding the next layer.  The flat width shrinks by
    (2*w0 + 2) per layer so every slice stays in bounds without padding.
    """
    m0 = n_batch * h0 * w0
    maxd = 2 * w0 + 2          # largest stencil offset in flat coordinates

    def kernel(*refs):
        x_ref = refs[0]
        blk_refs = refs[1:1 + 4 * n_blocks]
        wt_ref, bt_ref = refs[1 + 4 * n_blocks:3 + 4 * n_blocks]
        o_ref = refs[-1]
        f32 = jnp.float32

        def im2col(act, width_out):
            cols = []
            for kh in range(KER):
                for kw in range(KER):
                    d = kh * w0 + kw
                    cols.append(act[:, d:d + width_out])
            return jnp.concatenate(cols, axis=0)          # (9*Cin, width_out)

        act = x_ref[...]                                  # (Cin0, m0)

        for li in range(n_blocks):
            w_ref, g_ref, b_ref, m_ref = blk_refs[4 * li:4 * li + 4]
            width_out = m0 - (li + 1) * maxd
            hv = h0 - 2 * (li + 1)
            wv = w0 - 2 * (li + 1)
            inv_count = 1.0 / float(n_batch * hv * wv)

            patches = im2col(act, width_out)              # (9*Cin, width_out)
            acc = jnp.dot(w_ref[...], patches,
                          preferred_element_type=f32)     # (Cout, width_out)

            # BatchNorm (training-mode forward): one-pass masked statistics
            # over the valid output positions only.
            mask = m_ref[...]                             # (1, width_out)
            accm = acc * mask
            mean = jnp.sum(accm, axis=1, keepdims=True) * inv_count
            ex2 = jnp.sum(accm * acc, axis=1, keepdims=True) * inv_count
            var = jnp.maximum(ex2 - mean * mean, 0.0)
            scale = g_ref[...] * jax.lax.rsqrt(var + BN_EPS)
            shift = b_ref[...] - mean * scale
            yv = acc * scale + shift
            # LeakyReLU(0.2)
            yv = jnp.where(yv >= 0.0, yv, LRELU_SLOPE * yv)
            # zero the invalid (garbage) positions before the next conv.
            act = yv * mask

        # tail: conv + bias + tanh.  The crop / skip-add / NCHW re-layout of
        # this ~13 KB result is done by XLA in the wrapper.
        width_out = m0 - (n_blocks + 1) * maxd
        patches = im2col(act, width_out)
        acc = jnp.dot(wt_ref[...], patches, preferred_element_type=f32)
        acc = acc + bt_ref[...]
        o_ref[...] = jnp.tanh(acc)

    return kernel


# ----------------------------------------------------------------------------
# Wrapper: param re-layout, masks, single pallas_call, tiny XLA epilogue
# ----------------------------------------------------------------------------
@jax.jit
def generator_forward(x_nchw, y_nchw, params):
    """Full GeneratorConcatSkip2CleanAdd forward.  Inputs/outputs are NCHW."""
    f32 = jnp.float32
    x = x_nchw.astype(f32)
    y = y_nchw.astype(f32)
    n, c0, h, w = x.shape
    nc_im = y.shape[1]
    blocks = params["blocks"]
    n_blocks = len(blocks)
    m0 = n * h * w
    maxd = 2 * w + 2

    # ---- host/XLA-side prep (all tiny, fused by XLA) -----------------------
    # Pad the head input channels to a multiple of 8 so the in-kernel im2col
    # concatenation stays sublane-aligned.
    c0p = -(-c0 // 8) * 8
    if c0p != c0:
        x = jnp.pad(x, ((0, 0), (0, c0p - c0), (0, 0), (0, 0)))
    # channel-major flat layout (C, N*H*W)
    x_flat = jnp.transpose(x, (1, 0, 2, 3)).reshape(c0p, m0)

    # flat-position (h, w) coordinate grids for the validity masks
    gh = jnp.broadcast_to(jnp.arange(h)[None, :, None], (n, h, w)).reshape(1, m0)
    gw = jnp.broadcast_to(jnp.arange(w)[None, None, :], (n, h, w)).reshape(1, m0)

    inputs = [x_flat]
    flops = 0
    for li, (wgt, _bias, gamma, beta) in enumerate(blocks):
        kh, kw, cin, cout = wgt.shape
        if li == 0 and cin != c0p:                 # match padded input channels
            wgt = jnp.pad(wgt, ((0, 0), (0, 0), (0, c0p - cin), (0, 0)))
            cin = c0p
        # (Cout, K) with K ordered (kh, kw, ci) to match the in-kernel im2col.
        w_t = wgt.reshape(kh * kw * cin, cout).T
        width = m0 - (li + 1) * maxd
        hv, wv = h - 2 * (li + 1), w - 2 * (li + 1)
        mask = ((gh[:, :width] < hv) & (gw[:, :width] < wv)).astype(f32)
        # NOTE: the conv bias is dropped for BN blocks -- BatchNorm's batch
        # mean subtraction cancels it exactly.
        inputs += [w_t, gamma.reshape(-1, 1), beta.reshape(-1, 1), mask]
        flops += 2 * width * (kh * kw * cin) * cout

    tail_w, tail_b = params["tail"]
    kh, kw, cin, cout = tail_w.shape
    width_tail = m0 - (n_blocks + 1) * maxd
    inputs += [tail_w.reshape(kh * kw * cin, cout).T, tail_b.reshape(-1, 1)]
    flops += 2 * width_tail * (kh * kw * cin) * cout

    bytes_accessed = sum(int(v.size) * v.dtype.itemsize for v in inputs)
    bytes_accessed += cout * width_tail * 4
    cost = pl.CostEstimate(flops=int(flops),
                           transcendentals=int(cout * width_tail + 8 * n_blocks),
                           bytes_accessed=int(bytes_accessed))

    tail_flat = pl.pallas_call(
        _make_fused_kernel(n_blocks, n, h, w),
        out_shape=jax.ShapeDtypeStruct((cout, width_tail), f32),
        in_specs=[_VMEM] * len(inputs),
        out_specs=_VMEM,
        cost_estimate=cost,
    )(*inputs)

    # ---- epilogue (XLA, a few KB): de-flatten, crop, skip-add, NCHW --------
    hf = h - 2 * (n_blocks + 1)
    wf = w - 2 * (n_blocks + 1)
    full = jnp.concatenate(
        [tail_flat, jnp.zeros((cout, m0 - width_tail), f32)], axis=1)
    out = jnp.transpose(full.reshape(cout, n, h, w), (1, 0, 2, 3))[:, :, :hf, :wf]
    ind = (h - hf) // 2
    y_crop = y[:, :, ind:h - ind, ind:w - ind]
    return out + y_crop


# ----------------------------------------------------------------------------
# Pure-JAX reference (for correctness check only)
# ----------------------------------------------------------------------------
def _ref_conv(x, w, b):
    out = jax.lax.conv_general_dilated(
        x, w, window_strides=(1, 1), padding="VALID",
        dimension_numbers=("NHWC", "HWIO", "NHWC"))
    return out + b.reshape(1, 1, 1, -1)


def ref_forward(x_nchw, y_nchw, params):
    x = jnp.transpose(x_nchw, (0, 2, 3, 1)).astype(jnp.float32)
    y = jnp.transpose(y_nchw, (0, 2, 3, 1)).astype(jnp.float32)
    for (w, b, g, beta) in params["blocks"]:
        x = _ref_conv(x, w, b)
        mean = jnp.mean(x, axis=(0, 1, 2), keepdims=True)
        var = jnp.mean((x - mean) ** 2, axis=(0, 1, 2), keepdims=True)
        x = (x - mean) * jax.lax.rsqrt(var + BN_EPS)
        x = x * g.reshape(1, 1, 1, -1) + beta.reshape(1, 1, 1, -1)
        x = jnp.where(x >= 0, x, LRELU_SLOPE * x)
    tail_w, tail_b = params["tail"]
    x = jnp.tanh(_ref_conv(x, tail_w, tail_b))
    ind = (y.shape[1] - x.shape[1]) // 2
    y = y[:, ind:y.shape[1] - ind, ind:y.shape[2] - ind, :]
    return jnp.transpose(x + y, (0, 3, 1, 2))


# ----------------------------------------------------------------------------
# Deterministic parameter construction (synthetic init, not a checkpoint)
# ----------------------------------------------------------------------------
def make_params(key, nc_im=3, nfc=8, min_nfc=8, num_layer=5):
    params = {"blocks": []}
    in_c = nc_im + 1
    out_c = nfc
    n_blocks = 1 + (num_layer - 2)                # head + body
    for i in range(n_blocks):
        key, kw_, kb_, kg_, kbt_ = jax.random.split(key, 5)
        w = 0.1 * jax.random.normal(kw_, (KER, KER, in_c, out_c), jnp.float32)
        b = 0.05 * jax.random.normal(kb_, (out_c,), jnp.float32)
        g = 1.0 + 0.1 * jax.random.normal(kg_, (out_c,), jnp.float32)
        beta = 0.05 * jax.random.normal(kbt_, (out_c,), jnp.float32)
        params["blocks"].append((w, b, g, beta))
        in_c = out_c
        if i < n_blocks - 1:
            N_i = int(nfc / (2 ** (i + 1)))
            out_c = max(N_i, min_nfc)
    key, kw_, kb_ = jax.random.split(key, 3)
    tail_w = 0.1 * jax.random.normal(kw_, (KER, KER, in_c, nc_im), jnp.float32)
    tail_b = 0.05 * jax.random.normal(kb_, (nc_im,), jnp.float32)
    params["tail"] = (tail_w, tail_b)
    return params


if __name__ == "__main__":
    key = jax.random.PRNGKey(0)
    k_p, k_x, k_y = jax.random.split(key, 3)

    nc_im, num_layer = 3, 5
    B, H, W = 2, 26, 26                            # 5 valid 3x3 convs: 26 -> 16
    params = make_params(k_p, nc_im=nc_im, nfc=8, min_nfc=8, num_layer=num_layer)

    # PyTorch-convention NCHW inputs: x has nc_im+1 channels, y has nc_im.
    x = jax.random.normal(k_x, (B, nc_im + 1, H, W), jnp.float32)
    y = jax.random.normal(k_y, (B, nc_im, H, W), jnp.float32)

    out = jax.block_until_ready(generator_forward(x, y, params))
    ref = jax.block_until_ready(ref_forward(x, y, params))

    assert out.shape == (B, nc_im, H - 2 * num_layer, W - 2 * num_layer), out.shape
    assert bool(jnp.all(jnp.isfinite(out)))
    max_err = float(jnp.max(jnp.abs(out - ref)))
    assert bool(jnp.allclose(out, ref, rtol=2e-3, atol=2e-3)), max_err

    print("KERNEL_OK")
</pallas_src>

<mosaic_0001>
module attributes {stable_mosaic.version = 11 : i64} {
  func.func @kernel(%arg0: memref<8x1352xf32, #tpu.memory_space<vmem>>, %arg1: memref<8x72xf32, #tpu.memory_space<vmem>>, %arg2: memref<8x1xf32, #tpu.memory_space<vmem>>, %arg3: memref<8x1xf32, #tpu.memory_space<vmem>>, %arg4: memref<1x1298xf32, #tpu.memory_space<vmem>>, %arg5: memref<8x72xf32, #tpu.memory_space<vmem>>, %arg6: memref<8x1xf32, #tpu.memory_space<vmem>>, %arg7: memref<8x1xf32, #tpu.memory_space<vmem>>, %arg8: memref<1x1244xf32, #tpu.memory_space<vmem>>, %arg9: memref<8x72xf32, #tpu.memory_space<vmem>>, %arg10: memref<8x1xf32, #tpu.memory_space<vmem>>, %arg11: memref<8x1xf32, #tpu.memory_space<vmem>>, %arg12: memref<1x1190xf32, #tpu.memory_space<vmem>>, %arg13: memref<8x72xf32, #tpu.memory_space<vmem>>, %arg14: memref<8x1xf32, #tpu.memory_space<vmem>>, %arg15: memref<8x1xf32, #tpu.memory_space<vmem>>, %arg16: memref<1x1136xf32, #tpu.memory_space<vmem>>, %arg17: memref<3x72xf32, #tpu.memory_space<vmem>>, %arg18: memref<3x1xf32, #tpu.memory_space<vmem>>, %arg19: memref<3x1082xf32, #tpu.memory_space<vmem>>) attributes {dimension_semantics = [], scalar_prefetch = 0 : i64, scratch_operands = 0 : i64, tpu.core_type = #tpu.core_type<tc>} {
    %c0 = arith.constant 0 : index
    %c0_0 = arith.constant 0 : index
    %0 = vector.load %arg0[%c0, %c0_0] : memref<8x1352xf32, #tpu.memory_space<vmem>>, vector<8x1352xf32>
    %1 = vector.extract_strided_slice %0 {offsets = [0, 0], sizes = [8, 1298], strides = [1, 1]} : vector<8x1352xf32> to vector<8x1298xf32>
    %2 = vector.extract_strided_slice %0 {offsets = [0, 1], sizes = [8, 1298], strides = [1, 1]} : vector<8x1352xf32> to vector<8x1298xf32>
    %3 = vector.extract_strided_slice %0 {offsets = [0, 2], sizes = [8, 1298], strides = [1, 1]} : vector<8x1352xf32> to vector<8x1298xf32>
    %4 = vector.extract_strided_slice %0 {offsets = [0, 26], sizes = [8, 1298], strides = [1, 1]} : vector<8x1352xf32> to vector<8x1298xf32>
    %5 = vector.extract_strided_slice %0 {offsets = [0, 27], sizes = [8, 1298], strides = [1, 1]} : vector<8x1352xf32> to vector<8x1298xf32>
    %6 = vector.extract_strided_slice %0 {offsets = [0, 28], sizes = [8, 1298], strides = [1, 1]} : vector<8x1352xf32> to vector<8x1298xf32>
    %7 = vector.extract_strided_slice %0 {offsets = [0, 52], sizes = [8, 1298], strides = [1, 1]} : vector<8x1352xf32> to vector<8x1298xf32>
    %8 = vector.extract_strided_slice %0 {offsets = [0, 53], sizes = [8, 1298], strides = [1, 1]} : vector<8x1352xf32> to vector<8x1298xf32>
    %9 = vector.extract_strided_slice %0 {offsets = [0, 54], sizes = [8, 1298], strides = [1, 1]} : vector<8x1352xf32> to vector<8x1298xf32>
    %10 = tpu.concatenate %1, %2, %3, %4, %5, %6, %7, %8, %9 in 0 : vector<8x1298xf32>, vector<8x1298xf32>, vector<8x1298xf32>, vector<8x1298xf32>, vector<8x1298xf32>, vector<8x1298xf32>, vector<8x1298xf32>, vector<8x1298xf32>, vector<8x1298xf32> -> vector<72x1298xf32>
    %c0_1 = arith.constant 0 : index
    %c0_2 = arith.constant 0 : index
    %11 = vector.load %arg1[%c0_1, %c0_2] : memref<8x72xf32, #tpu.memory_space<vmem>>, vector<8x72xf32>
    %cst = arith.constant dense<0.000000e+00> : vector<8x1298xf32>
    %12 = tpu.matmul %11, %10, %cst {dimension_numbers = #tpu.dot_dimension_numbers<[1], [0], [0], [1], [0, 0, 1, 1], [], []>} : vector<8x72xf32>, vector<72x1298xf32>, vector<8x1298xf32> -> vector<8x1298xf32>
    %c0_3 = arith.constant 0 : index
    %c0_4 = arith.constant 0 : index
    %13 = vector.load %arg4[%c0_3, %c0_4] : memref<1x1298xf32, #tpu.memory_space<vmem>>, vector<1x1298xf32>
    %14 = vector.broadcast %13 : vector<1x1298xf32> to vector<8x1298xf32>
    %15 = arith.mulf %12, %14 : vector<8x1298xf32>
    %cst_5 = arith.constant dense<0.000000e+00> : vector<8xf32>
    %16 = vector.multi_reduction <add>, %15, %cst_5 [1] : vector<8x1298xf32> to vector<8xf32>
    %17 = vector.shape_cast %16 : vector<8xf32> to vector<8x1xf32>
    %cst_6 = arith.constant 8.68055562E-4 : f32
    %18 = vector.broadcast %cst_6 : f32 to vector<8x1xf32>
    %19 = arith.mulf %17, %18 : vector<8x1xf32>
    %20 = arith.mulf %15, %12 : vector<8x1298xf32>
    %cst_7 = arith.constant dense<0.000000e+00> : vector<8xf32>
    %21 = vector.multi_reduction <add>, %20, %cst_7 [1] : vector<8x1298xf32> to vector<8xf32>
    %22 = vector.shape_cast %21 : vector<8xf32> to vector<8x1xf32>
    %cst_8 = arith.constant 8.68055562E-4 : f32
    %23 = vector.broadcast %cst_8 : f32 to vector<8x1xf32>
    %24 = arith.mulf %22, %23 : vector<8x1xf32>
    %25 = arith.mulf %19, %19 : vector<8x1xf32>
    %26 = arith.subf %24, %25 : vector<8x1xf32>
    %cst_9 = arith.constant 0.000000e+00 : f32
    %27 = vector.broadcast %cst_9 : f32 to vector<8x1xf32>
    %28 = arith.maximumf %26, %27 : vector<8x1xf32>
    %c0_10 = arith.constant 0 : index
    %c0_11 = arith.constant 0 : index
    %29 = vector.load %arg2[%c0_10, %c0_11] : memref<8x1xf32, #tpu.memory_space<vmem>>, vector<8x1xf32>
    %cst_12 = arith.constant 9.99999974E-6 : f32
    %30 = vector.broadcast %cst_12 : f32 to vector<8x1xf32>
    %31 = arith.addf %28, %30 : vector<8x1xf32>
    %32 = math.rsqrt %31 : vector<8x1xf32>
    %33 = arith.mulf %29, %32 : vector<8x1xf32>
    %c0_13 = arith.constant 0 : index
    %c0_14 = arith.constant 0 : index
    %34 = vector.load %arg3[%c0_13, %c0_14] : memref<8x1xf32, #tpu.memory_space<vmem>>, vector<8x1xf32>
    %35 = arith.mulf %19, %33 : vector<8x1xf32>
    %36 = arith.subf %34, %35 : vector<8x1xf32>
    %37 = vector.broadcast %33 : vector<8x1xf32> to vector<8x1298xf32>
    %38 = arith.mulf %12, %37 : vector<8x1298xf32>
    %39 = vector.broadcast %36 : vector<8x1xf32> to vector<8x1298xf32>
    %40 = arith.addf %38, %39 : vector<8x1298xf32>
    %cst_15 = arith.constant 0.000000e+00 : f32
    %41 = vector.broadcast %cst_15 : f32 to vector<8x1298xf32>
    %42 = arith.cmpf oge, %40, %41 : vector<8x1298xf32>
    %cst_16 = arith.constant 2.000000e-01 : f32
    %43 = vector.broadcast %cst_16 : f32 to vector<8x1298xf32>
    %44 = arith.mulf %43, %40 : vector<8x1298xf32>
    %45 = arith.select %42, %40, %44 : vector<8x1298xi1>, vector<8x1298xf32>
    %46 = vector.broadcast %13 : vector<1x1298xf32> to vector<8x1298xf32>
    %47 = arith.mulf %45, %46 : vector<8x1298xf32>
    %48 = vector.extract_strided_slice %47 {offsets = [0, 0], sizes = [8, 1244], strides = [1, 1]} : vector<8x1298xf32> to vector<8x1244xf32>
    %49 = vector.extract_strided_slice %47 {offsets = [0, 1], sizes = [8, 1244], strides = [1, 1]} : vector<8x1298xf32> to vector<8x1244xf32>
    %50 = vector.extract_strided_slice %47 {offsets = [0, 2], sizes = [8, 1244], strides = [1, 1]} : vector<8x1298xf32> to vector<8x1244xf32>
    %51 = vector.extract_strided_slice %47 {offsets = [0, 26], sizes = [8, 1244], strides = [1, 1]} : vector<8x1298xf32> to vector<8x1244xf32>
    %52 = vector.extract_strided_slice %47 {offsets = [0, 27], sizes = [8, 1244], strides = [1, 1]} : vector<8x1298xf32> to vector<8x1244xf32>
    %53 = vector.extract_strided_slice %47 {offsets = [0, 28], sizes = [8, 1244], strides = [1, 1]} : vector<8x1298xf32> to vector<8x1244xf32>
    %54 = vector.extract_strided_slice %47 {offsets = [0, 52], sizes = [8, 1244], strides = [1, 1]} : vector<8x1298xf32> to vector<8x1244xf32>
    %55 = vector.extract_strided_slice %47 {offsets = [0, 53], sizes = [8, 1244], strides = [1, 1]} : vector<8x1298xf32> to vector<8x1244xf32>
    %56 = vector.extract_strided_slice %47 {offsets = [0, 54], sizes = [8, 1244], strides = [1, 1]} : vector<8x1298xf32> to vector<8x1244xf32>
    %57 = tpu.concatenate %48, %49, %50, %51, %52, %53, %54, %55, %56 in 0 : vector<8x1244xf32>, vector<8x1244xf32>, vector<8x1244xf32>, vector<8x1244xf32>, vector<8x1244xf32>, vector<8x1244xf32>, vector<8x1244xf32>, vector<8x1244xf32>, vector<8x1244xf32> -> vector<72x1244xf32>
    %c0_17 = arith.constant 0 : index
    %c0_18 = arith.constant 0 : index
    %58 = vector.load %arg5[%c0_17, %c0_18] : memref<8x72xf32, #tpu.memory_space<vmem>>, vector<8x72xf32>
    %cst_19 = arith.constant dense<0.000000e+00> : vector<8x1244xf32>
    %59 = tpu.matmul %58, %57, %cst_19 {dimension_numbers = #tpu.dot_dimension_numbers<[1], [0], [0], [1], [0, 0, 1, 1], [], []>} : vector<8x72xf32>, vector<72x1244xf32>, vector<8x1244xf32> -> vector<8x1244xf32>
    %c0_20 = arith.constant 0 : index
    %c0_21 = arith.constant 0 : index
    %60 = vector.load %arg8[%c0_20, %c0_21] : memref<1x1244xf32, #tpu.memory_space<vmem>>, vector<1x1244xf32>
    %61 = vector.broadcast %60 : vector<1x1244xf32> to vector<8x1244xf32>
    %62 = arith.mulf %59, %61 : vector<8x1244xf32>
    %cst_22 = arith.constant dense<0.000000e+00> : vector<8xf32>
    %63 = vector.multi_reduction <add>, %62, %cst_22 [1] : vector<8x1244xf32> to vector<8xf32>
    %64 = vector.shape_cast %63 : vector<8xf32> to vector<8x1xf32>
    %cst_23 = arith.constant 0.00103305781 : f32
    %65 = vector.broadcast %cst_23 : f32 to vector<8x1xf32>
    %66 = arith.mulf %64, %65 : vector<8x1xf32>
    %67 = arith.mulf %62, %59 : vector<8x1244xf32>
    %cst_24 = arith.constant dense<0.000000e+00> : vector<8xf32>
    %68 = vector.multi_reduction <add>, %67, %cst_24 [1] : vector<8x1244xf32> to vector<8xf32>
    %69 = vector.shape_cast %68 : vector<8xf32> to vector<8x1xf32>
    %cst_25 = arith.constant 0.00103305781 : f32
    %70 = vector.broadcast %cst_25 : f32 to vector<8x1xf32>
    %71 = arith.mulf %69, %70 : vector<8x1xf32>
    %72 = arith.mulf %66, %66 : vector<8x1xf32>
    %73 = arith.subf %71, %72 : vector<8x1xf32>
    %cst_26 = arith.constant 0.000000e+00 : f32
    %74 = vector.broadcast %cst_26 : f32 to vector<8x1xf32>
    %75 = arith.maximumf %73, %74 : vector<8x1xf32>
    %c0_27 = arith.constant 0 : index
    %c0_28 = arith.constant 0 : index
    %76 = vector.load %arg6[%c0_27, %c0_28] : memref<8x1xf32, #tpu.memory_space<vmem>>, vector<8x1xf32>
    %cst_29 = arith.constant 9.99999974E-6 : f32
    %77 = vector.broadcast %cst_29 : f32 to vector<8x1xf32>
    %78 = arith.addf %75, %77 : vector<8x1xf32>
    %79 = math.rsqrt %78 : vector<8x1xf32>
    %80 = arith.mulf %76, %79 : vector<8x1xf32>
    %c0_30 = arith.constant 0 : index
    %c0_31 = arith.constant 0 : index
    %81 = vector.load %arg7[%c0_30, %c0_31] : memref<8x1xf32, #tpu.memory_space<vmem>>, vector<8x1xf32>
    %82 = arith.mulf %66, %80 : vector<8x1xf32>
    %83 = arith.subf %81, %82 : vector<8x1xf32>
    %84 = vector.broadcast %80 : vector<8x1xf32> to vector<8x1244xf32>
    %85 = arith.mulf %59, %84 : vector<8x1244xf32>
    %86 = vector.broadcast %83 : vector<8x1xf32> to vector<8x1244xf32>
    %87 = arith.addf %85, %86 : vector<8x1244xf32>
    %cst_32 = arith.constant 0.000000e+00 : f32
    %88 = vector.broadcast %cst_32 : f32 to vector<8x1244xf32>
    %89 = arith.cmpf oge, %87, %88 : vector<8x1244xf32>
    %cst_33 = arith.constant 2.000000e-01 : f32
    %90 = vector.broadcast %cst_33 : f32 to vector<8x1244xf32>
    %91 = arith.mulf %90, %87 : vector<8x1244xf32>
    %92 = arith.select %89, %87, %91 : vector<8x1244xi1>, vector<8x1244xf32>
    %93 = vector.broadcast %60 : vector<1x1244xf32> to vector<8x1244xf32>
    %94 = arith.mulf %92, %93 : vector<8x1244xf32>
    %95 = vector.extract_strided_slice %94 {offsets = [0, 0], sizes = [8, 1190], strides = [1, 1]} : vector<8x1244xf32> to vector<8x1190xf32>
    %96 = vector.extract_strided_slice %94 {offsets = [0, 1], sizes = [8, 1190], strides = [1, 1]} : vector<8x1244xf32> to vector<8x1190xf32>
    %97 = vector.extract_strided_slice %94 {offsets = [0, 2], sizes = [8, 1190], strides = [1, 1]} : vector<8x1244xf32> to vector<8x1190xf32>
    %98 = vector.extract_strided_slice %94 {offsets = [0, 26], sizes = [8, 1190], strides = [1, 1]} : vector<8x1244xf32> to vector<8x1190xf32>
    %99 = vector.extract_strided_slice %94 {offsets = [0, 27], sizes = [8, 1190], strides = [1, 1]} : vector<8x1244xf32> to vector<8x1190xf32>
    %100 = vector.extract_strided_slice %94 {offsets = [0, 28], sizes = [8, 1190], strides = [1, 1]} : vector<8x1244xf32> to vector<8x1190xf32>
    %101 = vector.extract_strided_slice %94 {offsets = [0, 52], sizes = [8, 1190], strides = [1, 1]} : vector<8x1244xf32> to vector<8x1190xf32>
    %102 = vector.extract_strided_slice %94 {offsets = [0, 53], sizes = [8, 1190], strides = [1, 1]} : vector<8x1244xf32> to vector<8x1190xf32>
    %103 = vector.extract_strided_slice %94 {offsets = [0, 54], sizes = [8, 1190], strides = [1, 1]} : vector<8x1244xf32> to vector<8x1190xf32>
    %104 = tpu.concatenate %95, %96, %97, %98, %99, %100, %101, %102, %103 in 0 : vector<8x1190xf32>, vector<8x1190xf32>, vector<8x1190xf32>, vector<8x1190xf32>, vector<8x1190xf32>, vector<8x1190xf32>, vector<8x1190xf32>, vector<8x1190xf32>, vector<8x1190xf32> -> vector<72x1190xf32>
    %c0_34 = arith.constant 0 : index
    %c0_35 = arith.constant 0 : index
    %105 = vector.load %arg9[%c0_34, %c0_35] : memref<8x72xf32, #tpu.memory_space<vmem>>, vector<8x72xf32>
    %cst_36 = arith.constant dense<0.000000e+00> : vector<8x1190xf32>
    %106 = tpu.matmul %105, %104, %cst_36 {dimension_numbers = #tpu.dot_dimension_numbers<[1], [0], [0], [1], [0, 0, 1, 1], [], []>} : vector<8x72xf32>, vector<72x1190xf32>, vector<8x1190xf32> -> vector<8x1190xf32>
    %c0_37 = arith.constant 0 : index
    %c0_38 = arith.constant 0 : index
    %107 = vector.load %arg12[%c0_37, %c0_38] : memref<1x1190xf32, #tpu.memory_space<vmem>>, vector<1x1190xf32>
    %108 = vector.broadcast %107 : vector<1x1190xf32> to vector<8x1190xf32>
    %109 = arith.mulf %106, %108 : vector<8x1190xf32>
    %cst_39 = arith.constant dense<0.000000e+00> : vector<8xf32>
    %110 = vector.multi_reduction <add>, %109, %cst_39 [1] : vector<8x1190xf32> to vector<8xf32>
    %111 = vector.shape_cast %110 : vector<8xf32> to vector<8x1xf32>
    %cst_40 = arith.constant 1.250000e-03 : f32
    %112 = vector.broadcast %cst_40 : f32 to vector<8x1xf32>
    %113 = arith.mulf %111, %112 : vector<8x1xf32>
    %114 = arith.mulf %109, %106 : vector<8x1190xf32>
    %cst_41 = arith.constant dense<0.000000e+00> : vector<8xf32>
    %115 = vector.multi_reduction <add>, %114, %cst_41 [1] : vector<8x1190xf32> to vector<8xf32>
    %116 = vector.shape_cast %115 : vector<8xf32> to vector<8x1xf32>
    %cst_42 = arith.constant 1.250000e-03 : f32
    %117 = vector.broadcast %cst_42 : f32 to vector<8x1xf32>
    %118 = arith.mulf %116, %117 : vector<8x1xf32>
    %119 = arith.mulf %113, %113 : vector<8x1xf32>
    %120 = arith.subf %118, %119 : vector<8x1xf32>
    %cst_43 = arith.constant 0.000000e+00 : f32
    %121 = vector.broadcast %cst_43 : f32 to vector<8x1xf32>
    %122 = arith.maximumf %120, %121 : vector<8x1xf32>
    %c0_44 = arith.constant 0 : index
    %c0_45 = arith.constant 0 : index
    %123 = vector.load %arg10[%c0_44, %c0_45] : memref<8x1xf32, #tpu.memory_space<vmem>>, vector<8x1xf32>
    %cst_46 = arith.constant 9.99999974E-6 : f32
    %124 = vector.broadcast %cst_46 : f32 to vector<8x1xf32>
    %125 = arith.addf %122, %124 : vector<8x1xf32>
    %126 = math.rsqrt %125 : vector<8x1xf32>
    %127 = arith.mulf %123, %126 : vector<8x1xf32>
    %c0_47 = arith.constant 0 : index
    %c0_48 = arith.constant 0 : index
    %128 = vector.load %arg11[%c0_47, %c0_48] : memref<8x1xf32, #tpu.memory_space<vmem>>, vector<8x1xf32>
    %129 = arith.mulf %113, %127 : vector<8x1xf32>
    %130 = arith.subf %128, %129 : vector<8x1xf32>
    %131 = vector.broadcast %127 : vector<8x1xf32> to vector<8x1190xf32>
    %132 = arith.mulf %106, %131 : vector<8x1190xf32>
    %133 = vector.broadcast %130 : vector<8x1xf32> to vector<8x1190xf32>
    %134 = arith.addf %132, %133 : vector<8x1190xf32>
    %cst_49 = arith.constant 0.000000e+00 : f32
    %135 = vector.broadcast %cst_49 : f32 to vector<8x1190xf32>
    %136 = arith.cmpf oge, %134, %135 : vector<8x1190xf32>
    %cst_50 = arith.constant 2.000000e-01 : f32
    %137 = vector.broadcast %cst_50 : f32 to vector<8x1190xf32>
    %138 = arith.mulf %137, %134 : vector<8x1190xf32>
    %139 = arith.select %136, %134, %138 : vector<8x1190xi1>, vector<8x1190xf32>
    %140 = vector.broadcast %107 : vector<1x1190xf32> to vector<8x1190xf32>
    %141 = arith.mulf %139, %140 : vector<8x1190xf32>
    %142 = vector.extract_strided_slice %141 {offsets = [0, 0], sizes = [8, 1136], strides = [1, 1]} : vector<8x1190xf32> to vector<8x1136xf32>
    %143 = vector.extract_strided_slice %141 {offsets = [0, 1], sizes = [8, 1136], strides = [1, 1]} : vector<8x1190xf32> to vector<8x1136xf32>
    %144 = vector.extract_strided_slice %141 {offsets = [0, 2], sizes = [8, 1136], strides = [1, 1]} : vector<8x1190xf32> to vector<8x1136xf32>
    %145 = vector.extract_strided_slice %141 {offsets = [0, 26], sizes = [8, 1136], strides = [1, 1]} : vector<8x1190xf32> to vector<8x1136xf32>
    %146 = vector.extract_strided_slice %141 {offsets = [0, 27], sizes = [8, 1136], strides = [1, 1]} : vector<8x1190xf32> to vector<8x1136xf32>
    %147 = vector.extract_strided_slice %141 {offsets = [0, 28], sizes = [8, 1136], strides = [1, 1]} : vector<8x1190xf32> to vector<8x1136xf32>
    %148 = vector.extract_strided_slice %141 {offsets = [0, 52], sizes = [8, 1136], strides = [1, 1]} : vector<8x1190xf32> to vector<8x1136xf32>
    %149 = vector.extract_strided_slice %141 {offsets = [0, 53], sizes = [8, 1136], strides = [1, 1]} : vector<8x1190xf32> to vector<8x1136xf32>
    %150 = vector.extract_strided_slice %141 {offsets = [0, 54], sizes = [8, 1136], strides = [1, 1]} : vector<8x1190xf32> to vector<8x1136xf32>
    %151 = tpu.concatenate %142, %143, %144, %145, %146, %147, %148, %149, %150 in 0 : vector<8x1136xf32>, vector<8x1136xf32>, vector<8x1136xf32>, vector<8x1136xf32>, vector<8x1136xf32>, vector<8x1136xf32>, vector<8x1136xf32>, vector<8x1136xf32>, vector<8x1136xf32> -> vector<72x1136xf32>
    %c0_51 = arith.constant 0 : index
    %c0_52 = arith.constant 0 : index
    %152 = vector.load %arg13[%c0_51, %c0_52] : memref<8x72xf32, #tpu.memory_space<vmem>>, vector<8x72xf32>
    %cst_53 = arith.constant dense<0.000000e+00> : vector<8x1136xf32>
    %153 = tpu.matmul %152, %151, %cst_53 {dimension_numbers = #tpu.dot_dimension_numbers<[1], [0], [0], [1], [0, 0, 1, 1], [], []>} : vector<8x72xf32>, vector<72x1136xf32>, vector<8x1136xf32> -> vector<8x1136xf32>
    %c0_54 = arith.constant 0 : index
    %c0_55 = arith.constant 0 : index
    %154 = vector.load %arg16[%c0_54, %c0_55] : memref<1x1136xf32, #tpu.memory_space<vmem>>, vector<1x1136xf32>
    %155 = vector.broadcast %154 : vector<1x1136xf32> to vector<8x1136xf32>
    %156 = arith.mulf %153, %155 : vector<8x1136xf32>
    %cst_56 = arith.constant dense<0.000000e+00> : vector<8xf32>
    %157 = vector.multi_reduction <add>, %156, %cst_56 [1] : vector<8x1136xf32> to vector<8xf32>
    %158 = vector.shape_cast %157 : vector<8xf32> to vector<8x1xf32>
    %cst_57 = arith.constant 0.00154320989 : f32
    %159 = vector.broadcast %cst_57 : f32 to vector<8x1xf32>
    %160 = arith.mulf %158, %159 : vector<8x1xf32>
    %161 = arith.mulf %156, %153 : vector<8x1136xf32>
    %cst_58 = arith.constant dense<0.000000e+00> : vector<8xf32>
    %162 = vector.multi_reduction <add>, %161, %cst_58 [1] : vector<8x1136xf32> to vector<8xf32>
    %163 = vector.shape_cast %162 : vector<8xf32> to vector<8x1xf32>
    %cst_59 = arith.constant 0.00154320989 : f32
    %164 = vector.broadcast %cst_59 : f32 to vector<8x1xf32>
    %165 = arith.mulf %163, %164 : vector<8x1xf32>
    %166 = arith.mulf %160, %160 : vector<8x1xf32>
    %167 = arith.subf %165, %166 : vector<8x1xf32>
    %cst_60 = arith.constant 0.000000e+00 : f32
    %168 = vector.broadcast %cst_60 : f32 to vector<8x1xf32>
    %169 = arith.maximumf %167, %168 : vector<8x1xf32>
    %c0_61 = arith.constant 0 : index
    %c0_62 = arith.constant 0 : index
    %170 = vector.load %arg14[%c0_61, %c0_62] : memref<8x1xf32, #tpu.memory_space<vmem>>, vector<8x1xf32>
    %cst_63 = arith.constant 9.99999974E-6 : f32
    %171 = vector.broadcast %cst_63 : f32 to vector<8x1xf32>
    %172 = arith.addf %169, %171 : vector<8x1xf32>
    %173 = math.rsqrt %172 : vector<8x1xf32>
    %174 = arith.mulf %170, %173 : vector<8x1xf32>
    %c0_64 = arith.constant 0 : index
    %c0_65 = arith.constant 0 : index
    %175 = vector.load %arg15[%c0_64, %c0_65] : memref<8x1xf32, #tpu.memory_space<vmem>>, vector<8x1xf32>
    %176 = arith.mulf %160, %174 : vector<8x1xf32>
    %177 = arith.subf %175, %176 : vector<8x1xf32>
    %178 = vector.broadcast %174 : vector<8x1xf32> to vector<8x1136xf32>
    %179 = arith.mulf %153, %178 : vector<8x1136xf32>
    %180 = vector.broadcast %177 : vector<8x1xf32> to vector<8x1136xf32>
    %181 = arith.addf %179, %180 : vector<8x1136xf32>
    %cst_66 = arith.constant 0.000000e+00 : f32
    %182 = vector.broadcast %cst_66 : f32 to vector<8x1136xf32>
    %183 = arith.cmpf oge, %181, %182 : vector<8x1136xf32>
    %cst_67 = arith.constant 2.000000e-01 : f32
    %184 = vector.broadcast %cst_67 : f32 to vector<8x1136xf32>
    %185 = arith.mulf %184, %181 : vector<8x1136xf32>
    %186 = arith.select %183, %181, %185 : vector<8x1136xi1>, vector<8x1136xf32>
    %187 = vector.broadcast %154 : vector<1x1136xf32> to vector<8x1136xf32>
    %188 = arith.mulf %186, %187 : vector<8x1136xf32>
    %189 = vector.extract_strided_slice %188 {offsets = [0, 0], sizes = [8, 1082], strides = [1, 1]} : vector<8x1136xf32> to vector<8x1082xf32>
    %190 = vector.extract_strided_slice %188 {offsets = [0, 1], sizes = [8, 1082], strides = [1, 1]} : vector<8x1136xf32> to vector<8x1082xf32>
    %191 = vector.extract_strided_slice %188 {offsets = [0, 2], sizes = [8, 1082], strides = [1, 1]} : vector<8x1136xf32> to vector<8x1082xf32>
    %192 = vector.extract_strided_slice %188 {offsets = [0, 26], sizes = [8, 1082], strides = [1, 1]} : vector<8x1136xf32> to vector<8x1082xf32>
    %193 = vector.extract_strided_slice %188 {offsets = [0, 27], sizes = [8, 1082], strides = [1, 1]} : vector<8x1136xf32> to vector<8x1082xf32>
    %194 = vector.extract_strided_slice %188 {offsets = [0, 28], sizes = [8, 1082], strides = [1, 1]} : vector<8x1136xf32> to vector<8x1082xf32>
    %195 = vector.extract_strided_slice %188 {offsets = [0, 52], sizes = [8, 1082], strides = [1, 1]} : vector<8x1136xf32> to vector<8x1082xf32>
    %196 = vector.extract_strided_slice %188 {offsets = [0, 53], sizes = [8, 1082], strides = [1, 1]} : vector<8x1136xf32> to vector<8x1082xf32>
    %197 = vector.extract_strided_slice %188 {offsets = [0, 54], sizes = [8, 1082], strides = [1, 1]} : vector<8x1136xf32> to vector<8x1082xf32>
    %198 = tpu.concatenate %189, %190, %191, %192, %193, %194, %195, %196, %197 in 0 : vector<8x1082xf32>, vector<8x1082xf32>, vector<8x1082xf32>, vector<8x1082xf32>, vector<8x1082xf32>, vector<8x1082xf32>, vector<8x1082xf32>, vector<8x1082xf32>, vector<8x1082xf32> -> vector<72x1082xf32>
    %c0_68 = arith.constant 0 : index
    %c0_69 = arith.constant 0 : index
    %199 = vector.load %arg17[%c0_68, %c0_69] : memref<3x72xf32, #tpu.memory_space<vmem>>, vector<3x72xf32>
    %cst_70 = arith.constant dense<0.000000e+00> : vector<3x1082xf32>
    %200 = tpu.matmul %199, %198, %cst_70 {dimension_numbers = #tpu.dot_dimension_numbers<[1], [0], [0], [1], [0, 0, 1, 1], [], []>} : vector<3x72xf32>, vector<72x1082xf32>, vector<3x1082xf32> -> vector<3x1082xf32>
    %c0_71 = arith.constant 0 : index
    %c0_72 = arith.constant 0 : index
    %201 = vector.load %arg18[%c0_71, %c0_72] : memref<3x1xf32, #tpu.memory_space<vmem>>, vector<3x1xf32>
    %202 = vector.broadcast %201 : vector<3x1xf32> to vector<3x1082xf32>
    %203 = arith.addf %200, %202 : vector<3x1082xf32>
    %204 = math.tanh %203 : vector<3x1082xf32>
    %c0_73 = arith.constant 0 : index
    %c0_74 = arith.constant 0 : index
    %205 = vector.load %arg19[%c0_73, %c0_74] : memref<3x1082xf32, #tpu.memory_space<vmem>>, vector<3x1082xf32>
    tpu.vector_store %arg19[%c0_73, %c0_74], %204 {strides = array<i32>} : memref<3x1082xf32, #tpu.memory_space<vmem>>, vector<3x1082xf32>,
    return
  }
}

</mosaic_0001>

<llo_original>
// kernel: generator_forward.1
$region0: #{generator_forward.1}
  #allocation0 [shape = 'u32[]', space=smem, size = 0x4, offset = 0x4, fixed_abs, tag = 'smem constant byte address 0x4 - core index']
  #allocation1 [shape = 'u32[144,128]{1,0:T(1,128)}', space=vmem, size = 0x12000, scoped, tag = 'internal scratch']
  %s0 = inlined_call_operand.vmem [shape: f32[8,1352], index: 0, kind: input, shape index: {}]
  %s1 = inlined_call_operand.vmem [shape: f32[8,72], index: 1, kind: input, shape index: {}]
  %s2 = inlined_call_operand.vmem [shape: f32[8,1], index: 2, kind: input, shape index: {}]
  %s3 = inlined_call_operand.vmem [shape: f32[8,1], index: 3, kind: input, shape index: {}]
  %s4 = inlined_call_operand.vmem [shape: f32[1,1298], index: 4, kind: input, shape index: {}]
  %s5 = inlined_call_operand.vmem [shape: f32[8,72], index: 5, kind: input, shape index: {}]
  %s6 = inlined_call_operand.vmem [shape: f32[8,1], index: 6, kind: input, shape index: {}]
  %s7 = inlined_call_operand.vmem [shape: f32[8,1], index: 7, kind: input, shape index: {}]
  %s8 = inlined_call_operand.vmem [shape: f32[1,1244], index: 8, kind: input, shape index: {}]
  %s9 = inlined_call_operand.vmem [shape: f32[8,72], index: 9, kind: input, shape index: {}]
  %s10 = inlined_call_operand.vmem [shape: f32[8,1], index: 10, kind: input, shape index: {}]
  %s11 = inlined_call_operand.vmem [shape: f32[8,1], index: 11, kind: input, shape index: {}]
  %s12 = inlined_call_operand.vmem [shape: f32[1,1190], index: 12, kind: input, shape index: {}]
  %s13 = inlined_call_operand.vmem [shape: f32[8,72], index: 13, kind: input, shape index: {}]
  %s14 = inlined_call_operand.vmem [shape: f32[8,1], index: 14, kind: input, shape index: {}]
  %s15 = inlined_call_operand.vmem [shape: f32[8,1], index: 15, kind: input, shape index: {}]
  %s16 = inlined_call_operand.vmem [shape: f32[1,1136], index: 16, kind: input, shape index: {}]
  %s17 = inlined_call_operand.vmem [shape: f32[3,72], index: 17, kind: input, shape index: {}]
  %s18 = inlined_call_operand.vmem [shape: f32[3,1], index: 18, kind: input, shape index: {}]
  %s19 = inlined_call_operand.vmem [shape: f32[3,1082], index: 19, kind: output, shape index: {}]
  %s20 = sld [smem:[#allocation0]]
  $region86: #{generator_forward.1} parent=0
    _
  %s22 = ssub.s32 1, %s20
  %s23 = scalar_select 0, %s22, %s20
  // Predicated region
  $region2: #{generator_forward.1} parent=0 // pred_check
    _
  $region3: #{generator_forward.1} parent=0 // pred_check_branch
    %25 = sbr.rel (0) target = $region5
  $region4: #{generator_forward.1} parent=0 // pred_region
    _
  $region5: #{generator_forward.1} parent=0 // pred_fallthru
    _
  // Predicated region
  $region6: #{generator_forward.1} parent=0 // pred_check
    _
  $region7: #{generator_forward.1} parent=0 // pred_check_branch
    %27 = sbr.rel (0) target = $region9
  $region8: #{generator_forward.1} parent=0 // pred_region
    _
  $region9: #{generator_forward.1} parent=0 // pred_fallthru
    _
  // Predicated region
  $region10: #{generator_forward.1} parent=0 // pred_check
    _
  $region11: #{generator_forward.1} parent=0 // pred_check_branch
    %29 = sbr.rel (0) target = $region13
  $region12: #{generator_forward.1} parent=0 // pred_region
    _
  $region13: #{generator_forward.1} parent=0 // pred_fallthru
    _
  // Predicated region
  $region14: #{generator_forward.1} parent=0 // pred_check
    _
  $region15: #{generator_forward.1} parent=0 // pred_check_branch
    %31 = sbr.rel (0) target = $region17
  $region16: #{generator_forward.1} parent=0 // pred_region
    _
  $region17: #{generator_forward.1} parent=0 // pred_fallthru
    _
  // Predicated region
  $region18: #{generator_forward.1} parent=0 // pred_check
    _
  $region19: #{generator_forward.1} parent=0 // pred_check_branch
    %33 = sbr.rel (0) target = $region21
  $region20: #{generator_forward.1} parent=0 // pred_region
    _
  $region21: #{generator_forward.1} parent=0 // pred_fallthru
    _
  // Predicated region
  $region22: #{generator_forward.1} parent=0 // pred_check
    _
  $region23: #{generator_forward.1} parent=0 // pred_check_branch
    %35 = sbr.rel (0) target = $region25
  $region24: #{generator_forward.1} parent=0 // pred_region
    _
  $region25: #{generator_forward.1} parent=0 // pred_fallthru
    _
  // Predicated region
  $region26: #{generator_forward.1} parent=0 // pred_check
    _
  $region27: #{generator_forward.1} parent=0 // pred_check_branch
    %37 = sbr.rel (0) target = $region29
  $region28: #{generator_forward.1} parent=0 // pred_region
    _
  $region29: #{generator_forward.1} parent=0 // pred_fallthru
    _
  // Predicated region
  $region30: #{generator_forward.1} parent=0 // pred_check
    _
  $region31: #{generator_forward.1} parent=0 // pred_check_branch
    %39 = sbr.rel (0) target = $region33
  $region32: #{generator_forward.1} parent=0 // pred_region
    _
  $region33: #{generator_forward.1} parent=0 // pred_fallthru
    _
  // Predicated region
  $region34: #{generator_forward.1} parent=0 // pred_check
    _
  $region35: #{generator_forward.1} parent=0 // pred_check_branch
    %41 = sbr.rel (0) target = $region37
  $region36: #{generator_forward.1} parent=0 // pred_region
    _
  $region37: #{generator_forward.1} parent=0 // pred_fallthru
    _
  // Predicated region
  $region38: #{generator_forward.1} parent=0 // pred_check
    _
  $region39: #{generator_forward.1} parent=0 // pred_check_branch
    %43 = sbr.rel (0) target = $region41
  $region40: #{generator_forward.1} parent=0 // pred_region
    _
  $region41: #{generator_forward.1} parent=0 // pred_fallthru
    _
  // Predicated region
  $region42: #{generator_forward.1} parent=0 // pred_check
    _
  $region43: #{generator_forward.1} parent=0 // pred_check_branch
    %45 = sbr.rel (0) target = $region45
  $region44: #{generator_forward.1} parent=0 // pred_region
    _
  $region45: #{generator_forward.1} parent=0 // pred_fallthru
    _
  // Predicated region
  $region46: #{generator_forward.1} parent=0 // pred_check
    _
  $region47: #{generator_forward.1} parent=0 // pred_check_branch
    %47 = sbr.rel (0) target = $region49
  $region48: #{generator_forward.1} parent=0 // pred_region
    _
  $region49: #{generator_forward.1} parent=0 // pred_fallthru
    _
  // Predicated region
  $region50: #{generator_forward.1} parent=0 // pred_check
    _
  $region51: #{generator_forward.1} parent=0 // pred_check_branch
    %49 = sbr.rel (0) target = $region53
  $region52: #{generator_forward.1} parent=0 // pred_region
    _
  $region53: #{generator_forward.1} parent=0 // pred_fallthru
    _
  // Predicated region
  $region54: #{generator_forward.1} parent=0 // pred_check
    _
  $region55: #{generator_forward.1} parent=0 // pred_check_branch
    %51 = sbr.rel (0) target = $region57
  $region56: #{generator_forward.1} parent=0 // pred_region
    _
  $region57: #{generator_forward.1} parent=0 // pred_fallthru
    _
  // Predicated region
  $region58: #{generator_forward.1} parent=0 // pred_check
    _
  $region59: #{generator_forward.1} parent=0 // pred_check_branch
    %53 = sbr.rel (0) target = $region61
  $region60: #{generator_forward.1} parent=0 // pred_region
    _
  $region61: #{generator_forward.1} parent=0 // pred_fallthru
    _
  // Predicated region
  $region62: #{generator_forward.1} parent=0 // pred_check
    _
  $region63: #{generator_forward.1} parent=0 // pred_check_branch
    %55 = sbr.rel (0) target = $region65
  $region64: #{generator_forward.1} parent=0 // pred_region
    _
  $region65: #{generator_forward.1} parent=0 // pred_fallthru
    _
  // Predicated region
  $region66: #{generator_forward.1} parent=0 // pred_check
    _
  $region67: #{generator_forward.1} parent=0 // pred_check_branch
    %57 = sbr.rel (0) target = $region69
  $region68: #{generator_forward.1} parent=0 // pred_region
    _
  $region69: #{generator_forward.1} parent=0 // pred_fallthru
    _
  // Predicated region
  $region70: #{generator_forward.1} parent=0 // pred_check
    _
  $region71: #{generator_forward.1} parent=0 // pred_check_branch
    %59 = sbr.rel (0) target = $region73
  $region72: #{generator_forward.1} parent=0 // pred_region
    _
  $region73: #{generator_forward.1} parent=0 // pred_fallthru
    _
  // Predicated region
  $region74: #{generator_forward.1} parent=0 // pred_check
    _
  $region75: #{generator_forward.1} parent=0 // pred_check_branch
    %61 = sbr.rel (0) target = $region77
  $region76: #{generator_forward.1} parent=0 // pred_region
    _
  $region77: #{generator_forward.1} parent=0 // pred_fallthru
    _
  %v62 = vld [vmem:[%s0] sm:$0xff]
  %v63 = vld [vmem:[%s0 + $0x8] sm:$0xff]
  %v64 = vld [vmem:[%s0 + $0x10] sm:$0xff]
  %v65 = vld [vmem:[%s0 + $0x18] sm:$0xff]
  %v66 = vld [vmem:[%s0 + $0x20] sm:$0xff]
  %v67 = vld [vmem:[%s0 + $0x28] sm:$0xff]
  %v68 = vld [vmem:[%s0 + $0x30] sm:$0xff]
  %v69 = vld [vmem:[%s0 + $0x38] sm:$0xff]
  %v70 = vld [vmem:[%s0 + $0x40] sm:$0xff]
  %v71 = vld [vmem:[%s0 + $0x48] sm:$0xff]
  %v72 = vld [vmem:[%s0 + $0x50] sm:$0xff]
  %84 = vrot.lane.b32.xlu0 %v62, 127
  %v85 = vpop.permute.xlu0 %84
  %86 = vrot.lane.b32.xlu0 %v63, 127
  %v87 = vpop.permute.xlu0 %86
  %88 = vrot.lane.b32.xlu0 %v64, 127
  %v89 = vpop.permute.xlu0 %88
  %90 = vrot.lane.b32.xlu0 %v65, 127
  %v91 = vpop.permute.xlu0 %90
  %92 = vrot.lane.b32.xlu0 %v66, 127
  %v93 = vpop.permute.xlu0 %92
  %94 = vrot.lane.b32.xlu0 %v67, 127
  %v95 = vpop.permute.xlu0 %94
  %96 = vrot.lane.b32.xlu0 %v68, 127
  %v97 = vpop.permute.xlu0 %96
  %98 = vrot.lane.b32.xlu0 %v69, 127
  %v99 = vpop.permute.xlu0 %98
  %100 = vrot.lane.b32.xlu0 %v70, 127
  %v101 = vpop.permute.xlu0 %100
  %102 = vrot.lane.b32.xlu0 %v71, 127
  %v103 = vpop.permute.xlu0 %102
  %104 = vrot.lane.b32.xlu0 %v72, 127
  %v105 = vpop.permute.xlu0 %104
  %vm106 = vcmask 1039360
  %v107 = vsel %vm106, %v85, %v87
  %v108 = vsel %vm106, %v87, %v89
  %v109 = vsel %vm106, %v89, %v91
  %v110 = vsel %vm106, %v91, %v93
  %v111 = vsel %vm106, %v93, %v95
  %v112 = vsel %vm106, %v95, %v97
  %v113 = vsel %vm106, %v97, %v99
  %v114 = vsel %vm106, %v99, %v101
  %v115 = vsel %vm106, %v101, %v103
  %v116 = vsel %vm106, %v103, %v105
  %128 = vrot.lane.b32.xlu0 %v62, 126
  %v129 = vpop.permute.xlu0 %128
  %130 = vrot.lane.b32.xlu0 %v63, 126
  %v131 = vpop.permute.xlu0 %130
  %132 = vrot.lane.b32.xlu0 %v64, 126
  %v133 = vpop.permute.xlu0 %132
  %134 = vrot.lane.b32.xlu0 %v65, 126
  %v135 = vpop.permute.xlu0 %134
  %136 = vrot.lane.b32.xlu0 %v66, 126
  %v137 = vpop.permute.xlu0 %136
  %138 = vrot.lane.b32.xlu0 %v67, 126
  %v139 = vpop.permute.xlu0 %138
  %140 = vrot.lane.b32.xlu0 %v68, 126
  %v141 = vpop.permute.xlu0 %140
  %142 = vrot.lane.b32.xlu0 %v69, 126
  %v143 = vpop.permute.xlu0 %142
  %144 = vrot.lane.b32.xlu0 %v70, 126
  %v145 = vpop.permute.xlu0 %144
  %146 = vrot.lane.b32.xlu0 %v71, 126
  %v147 = vpop.permute.xlu0 %146
  %148 = vrot.lane.b32.xlu0 %v72, 126
  %v149 = vpop.permute.xlu0 %148
  %vm150 = vcmask 1031168
  %v151 = vsel %vm150, %v129, %v131
  %v152 = vsel %vm150, %v131, %v133
  %v153 = vsel %vm150, %v133, %v135
  %v154 = vsel %vm150, %v135, %v137
  %v155 = vsel %vm150, %v137, %v139
  %v156 = vsel %vm150, %v139, %v141
  %v157 = vsel %vm150, %v141, %v143
  %v158 = vsel %vm150, %v143, %v145
  %v159 = vsel %vm150, %v145, %v147
  %v160 = vsel %vm150, %v147, %v149
  %172 = vrot.lane.b32.xlu0 %v62, 102
  %v173 = vpop.permute.xlu0 %172
  %174 = vrot.lane.b32.xlu0 %v63, 102
  %v175 = vpop.permute.xlu0 %174
  %176 = vrot.lane.b32.xlu0 %v64, 102
  %v177 = vpop.permute.xlu0 %176
  %178 = vrot.lane.b32.xlu0 %v65, 102
  %v179 = vpop.permute.xlu0 %178
  %180 = vrot.lane.b32.xlu0 %v66, 102
  %v181 = vpop.permute.xlu0 %180
  %182 = vrot.lane.b32.xlu0 %v67, 102
  %v183 = vpop.permute.xlu0 %182
  %184 = vrot.lane.b32.xlu0 %v68, 102
  %v185 = vpop.permute.xlu0 %184
  %186 = vrot.lane.b32.xlu0 %v69, 102
  %v187 = vpop.permute.xlu0 %186
  %188 = vrot.lane.b32.xlu0 %v70, 102
  %v189 = vpop.permute.xlu0 %188
  %190 = vrot.lane.b32.xlu0 %v71, 102
  %v191 = vpop.permute.xlu0 %190
  %192 = vrot.lane.b32.xlu0 %v72, 102
  %v193 = vpop.permute.xlu0 %192
  %vm194 = vcmask 834560
  %v195 = vsel %vm194, %v173, %v175
  %v196 = vsel %vm194, %v175, %v177
  %v197 = vsel %vm194, %v177, %v179
  %v198 = vsel %vm194, %v179, %v181
  %v199 = vsel %vm194, %v181, %v183
  %v200 = vsel %vm194, %v183, %v185
  %v201 = vsel %vm194, %v185, %v187
  %v202 = vsel %vm194, %v187, %v189
  %v203 = vsel %vm194, %v189, %v191
  %v204 = vsel %vm194, %v191, %v193
  %216 = vrot.lane.b32.xlu0 %v62, 101
  %v217 = vpop.permute.xlu0 %216
  %218 = vrot.lane.b32.xlu0 %v63, 101
  %v219 = vpop.permute.xlu0 %218
  %220 = vrot.lane.b32.xlu0 %v64, 101
  %v221 = vpop.permute.xlu0 %220
  %222 = vrot.lane.b32.xlu0 %v65, 101
  %v223 = vpop.permute.xlu0 %222
  %224 = vrot.lane.b32.xlu0 %v66, 101
  %v225 = vpop.permute.xlu0 %224
  %226 = vrot.lane.b32.xlu0 %v67, 101
  %v227 = vpop.permute.xlu0 %226
  %228 = vrot.lane.b32.xlu0 %v68, 101
  %v229 = vpop.permute.xlu0 %228
  %230 = vrot.lane.b32.xlu0 %v69, 101
  %v231 = vpop.permute.xlu0 %230
  %232 = vrot.lane.b32.xlu0 %v70, 101
  %v233 = vpop.permute.xlu0 %232
  %234 = vrot.lane.b32.xlu0 %v71, 101
  %v235 = vpop.permute.xlu0 %234
  %236 = vrot.lane.b32.xlu0 %v72, 101
  %v237 = vpop.permute.xlu0 %236
  %vm238 = vcmask 826368
  %v239 = vsel %vm238, %v217, %v219
  %v240 = vsel %vm238, %v219, %v221
  %v241 = vsel %vm238, %v221, %v223
  %v242 = vsel %vm238, %v223, %v225
  %v243 = vsel %vm238, %v225, %v227
  %v244 = vsel %vm238, %v227, %v229
  %v245 = vsel %vm238, %v229, %v231
  %v246 = vsel %vm238, %v231, %v233
  %v247 = vsel %vm238, %v233, %v235
  %v248 = vsel %vm238, %v235, %v237
  %260 = vrot.lane.b32.xlu0 %v62, 100
  %v261 = vpop.permute.xlu0 %260
  %262 = vrot.lane.b32.xlu0 %v63, 100
  %v263 = vpop.permute.xlu0 %262
  %264 = vrot.lane.b32.xlu0 %v64, 100
  %v265 = vpop.permute.xlu0 %264
  %266 = vrot.lane.b32.xlu0 %v65, 100
  %v267 = vpop.permute.xlu0 %266
  %268 = vrot.lane.b32.xlu0 %v66, 100
  %v269 = vpop.permute.xlu0 %268
  %270 = vrot.lane.b32.xlu0 %v67, 100
  %v271 = vpop.permute.xlu0 %270
  %272 = vrot.lane.b32.xlu0 %v68, 100
  %v273 = vpop.permute.xlu0 %272
  %274 = vrot.lane.b32.xlu0 %v69, 100
  %v275 = vpop.permute.xlu0 %274
  %276 = vrot.lane.b32.xlu0 %v70, 100
  %v277 = vpop.permute.xlu0 %276
  %278 = vrot.lane.b32.xlu0 %v71, 100
  %v279 = vpop.permute.xlu0 %278
  %280 = vrot.lane.b32.xlu0 %v72, 100
  %v281 = vpop.permute.xlu0 %280
  %vm282 = vcmask 818176
  %v283 = vsel %vm282, %v261, %v263
  %v284 = vsel %vm282, %v263, %v265
  %v285 = vsel %vm282, %v265, %v267
  %v286 = vsel %vm282, %v267, %v269
  %v287 = vsel %vm282, %v269, %v271
  %v288 = vsel %vm282, %v271, %v273
  %v289 = vsel %vm282, %v273, %v275
  %v290 = vsel %vm282, %v275, %v277
  %v291 = vsel %vm282, %v277, %v279
  %v292 = vsel %vm282, %v279, %v281
  %304 = vrot.lane.b32.xlu0 %v62, 76
  %v305 = vpop.permute.xlu0 %304
  %306 = vrot.lane.b32.xlu0 %v63, 76
  %v307 = vpop.permute.xlu0 %306
  %308 = vrot.lane.b32.xlu0 %v64, 76
  %v309 = vpop.permute.xlu0 %308
  %310 = vrot.lane.b32.xlu0 %v65, 76
  %v311 = vpop.permute.xlu0 %310
  %312 = vrot.lane.b32.xlu0 %v66, 76
  %v313 = vpop.permute.xlu0 %312
  %314 = vrot.lane.b32.xlu0 %v67, 76
  %v315 = vpop.permute.xlu0 %314
  %316 = vrot.lane.b32.xlu0 %v68, 76
  %v317 = vpop.permute.xlu0 %316
  %318 = vrot.lane.b32.xlu0 %v69, 76
  %v319 = vpop.permute.xlu0 %318
  %320 = vrot.lane.b32.xlu0 %v70, 76
  %v321 = vpop.permute.xlu0 %320
  %322 = vrot.lane.b32.xlu0 %v71, 76
  %v323 = vpop.permute.xlu0 %322
  %324 = vrot.lane.b32.xlu0 %v72, 76
  %v325 = vpop.permute.xlu0 %324
  %vm326 = vcmask 621568
  %v327 = vsel %vm326, %v305, %v307
  %v328 = vsel %vm326, %v307, %v309
  %v329 = vsel %vm326, %v309, %v311
  %v330 = vsel %vm326, %v311, %v313
  %v331 = vsel %vm326, %v313, %v315
  %v332 = vsel %vm326, %v315, %v317
  %v333 = vsel %vm326, %v317, %v319
  %v334 = vsel %vm326, %v319, %v321
  %v335 = vsel %vm326, %v321, %v323
  %v336 = vsel %vm326, %v323, %v325
  %348 = vrot.lane.b32.xlu0 %v62, 75
  %v349 = vpop.permute.xlu0 %348
  %350 = vrot.lane.b32.xlu0 %v63, 75
  %v351 = vpop.permute.xlu0 %350
  %352 = vrot.lane.b32.xlu0 %v64, 75
  %v353 = vpop.permute.xlu0 %352
  %354 = vrot.lane.b32.xlu0 %v65, 75
  %v355 = vpop.permute.xlu0 %354
  %356 = vrot.lane.b32.xlu0 %v66, 75
  %v357 = vpop.permute.xlu0 %356
  %358 = vrot.lane.b32.xlu0 %v67, 75
  %v359 = vpop.permute.xlu0 %358
  %360 = vrot.lane.b32.xlu0 %v68, 75
  %v361 = vpop.permute.xlu0 %360
  %362 = vrot.lane.b32.xlu0 %v69, 75
  %v363 = vpop.permute.xlu0 %362
  %364 = vrot.lane.b32.xlu0 %v70, 75
  %v365 = vpop.permute.xlu0 %364
  %366 = vrot.lane.b32.xlu0 %v71, 75
  %v367 = vpop.permute.xlu0 %366
  %368 = vrot.lane.b32.xlu0 %v72, 75
  %v369 = vpop.permute.xlu0 %368
  %vm370 = vcmask 613376
  %v371 = vsel %vm370, %v349, %v351
  %v372 = vsel %vm370, %v351, %v353
  %v373 = vsel %vm370, %v353, %v355
  %v374 = vsel %vm370, %v355, %v357
  %v375 = vsel %vm370, %v357, %v359
  %v376 = vsel %vm370, %v359, %v361
  %v377 = vsel %vm370, %v361, %v363
  %v378 = vsel %vm370, %v363, %v365
  %v379 = vsel %vm370, %v365, %v367
  %v380 = vsel %vm370, %v367, %v369
  %392 = vrot.lane.b32.xlu0 %v62, 74
  %v393 = vpop.permute.xlu0 %392
  %394 = vrot.lane.b32.xlu0 %v63, 74
  %v395 = vpop.permute.xlu0 %394
  %396 = vrot.lane.b32.xlu0 %v64, 74
  %v397 = vpop.permute.xlu0 %396
  %398 = vrot.lane.b32.xlu0 %v65, 74
  %v399 = vpop.permute.xlu0 %398
  %400 = vrot.lane.b32.xlu0 %v66, 74
  %v401 = vpop.permute.xlu0 %400
  %402 = vrot.lane.b32.xlu0 %v67, 74
  %v403 = vpop.permute.xlu0 %402
  %404 = vrot.lane.b32.xlu0 %v68, 74
  %v405 = vpop.permute.xlu0 %404
  %406 = vrot.lane.b32.xlu0 %v69, 74
  %v407 = vpop.permute.xlu0 %406
  %408 = vrot.lane.b32.xlu0 %v70, 74
  %v409 = vpop.permute.xlu0 %408
  %410 = vrot.lane.b32.xlu0 %v71, 74
  %v411 = vpop.permute.xlu0 %410
  %412 = vrot.lane.b32.xlu0 %v72, 74
  %v413 = vpop.permute.xlu0 %412
  %vm414 = vcmask 605184
  %v415 = vsel %vm414, %v393, %v395
  %v416 = vsel %vm414, %v395, %v397
  %v417 = vsel %vm414, %v397, %v399
  %v418 = vsel %vm414, %v399, %v401
  %v419 = vsel %vm414, %v401, %v403
  %v420 = vsel %vm414, %v403, %v405
  %v421 = vsel %vm414, %v405, %v407
  %v422 = vsel %vm414, %v407, %v409
  %v423 = vsel %vm414, %v409, %v411
  %v424 = vsel %vm414, %v411, %v413
  %v436 = vld [vmem:[%s1] sm:$0xff]
  %vm437 = vcmask 588800
  %v439 = vsel %vm437, %v436, 0
  %441 = vmatprep.subr.mxu0 0.0
  %442 = vmatpush1.msra.mxu0 0.0
  %443 = vmatprep.subr.mxu0 0.0
  %444 = vmatpush1.msra.mxu0 0.0
  %445 = vmatprep.subr.mxu0 0.0
  %446 = vmatpush1.msra.mxu0 0.0
  %447 = vmatprep.subr.mxu0 0.0
  %448 = vmatpush1.msra.mxu0 0.0
  %449 = vmatprep.subr.mxu0 0.0
  %450 = vmatpush1.msra.mxu0 0.0
  %451 = vmatprep.subr.mxu0 0.0
  %452 = vmatpush1.msra.mxu0 0.0
  %453 = vmatprep.subr.mxu0 0.0
  %454 = vmatpush1.msra.mxu0 0.0
  %455 = vmatprep.subr.mxu0 %v416
  %456 = vmatpush1.msra.mxu0 %v415
  %457 = vmatprep.subr.mxu0 %v372
  %458 = vmatpush1.msra.mxu0 %v371
  %459 = vmatprep.subr.mxu0 %v328
  %460 = vmatpush1.msra.mxu0 %v327
  %461 = vmatprep.subr.mxu0 %v284
  %462 = vmatpush1.msra.mxu0 %v283
  %463 = vmatprep.subr.mxu0 %v240
  %464 = vmatpush1.msra.mxu0 %v239
  %465 = vmatprep.subr.mxu0 %v196
  %466 = vmatpush1.msra.mxu0 %v195
  %467 = vmatprep.subr.mxu0 %v152
  %468 = vmatpush1.msra.mxu0 %v151
  %469 = vmatprep.subr.mxu0 %v108
  %470 = vmatpush1.msra.mxu0 %v107
  %471 = vmatprep.subr.mxu0 %v63
  %472 = vmatpush1.msra.mxu0 %v62
  %473 = vmatprep.subr.mxu0 0.0
  %474 = vmatpush2.msra.mxu0 0.0
  %475 = vmatprep.subr.mxu0 0.0
  %476 = vmatpush2.msra.mxu0 0.0
  %477 = vmatprep.subr.mxu0 0.0
  %478 = vmatpush2.msra.mxu0 0.0
  %479 = vmatprep.subr.mxu0 0.0
  %480 = vmatpush2.msra.mxu0 0.0
  %481 = vmatprep.subr.mxu0 0.0
  %482 = vmatpush2.msra.mxu0 0.0
  %483 = vmatprep.subr.mxu0 0.0
  %484 = vmatpush2.msra.mxu0 0.0
  %485 = vmatprep.subr.mxu0 0.0
  %486 = vmatpush2.msra.mxu0 0.0
  %487 = vmatprep.subr.mxu0 0.0
  %488 = vmatpush2.msra.mxu0 0.0
  %489 = vmatprep.subr.mxu0 0.0
  %490 = vmatpush2.msra.mxu0 0.0
  %491 = vmatprep.subr.mxu0 0.0
  %492 = vmatpush2.msra.mxu0 0.0
  %493 = vmatprep.subr.mxu0 0.0
  %494 = vmatpush2.msra.mxu0 0.0
  %495 = vmatprep.subr.mxu0 0.0
  %496 = vmatpush2.msra.mxu0 0.0
  %497 = vmatprep.subr.mxu0 0.0
  %498 = vmatpush2.msra.mxu0 0.0
  %499 = vmatprep.subr.mxu0 0.0
  %500 = vmatpush2.msra.mxu0 0.0
  %501 = vmatprep.subr.mxu0 0.0
  %502 = vmatpush2.msra.mxu0 0.0
  %503 = vmatprep.subr.mxu0 0.0
  %504 = vmatpush2.msra.mxu0 0.0
  %505 = vmatprep.mubr.f32.mxu0 0.0
  %506 = vmatmul.mubr.f32.gmra.mxu0 %v439
  %v507 = vpop.f32.mrf.mxu0
  %v508 = vadd.f32 0.0, %v507
  %v509 = vpop.f32.mrf.mxu0
  %v510 = vadd.f32 0.0, %v509
  %511 = vdwg.mxu0
  %512 = vmatprep.subr.mxu0 0.0
  %513 = vmatpush1.msra.mxu0 0.0
  %514 = vmatprep.subr.mxu0 0.0
  %515 = vmatpush1.msra.mxu0 0.0
  %516 = vmatprep.subr.mxu0 0.0
  %517 = vmatpush1.msra.mxu0 0.0
  %518 = vmatprep.subr.mxu0 0.0
  %519 = vmatpush1.msra.mxu0 0.0
  %520 = vmatprep.subr.mxu0 0.0
  %521 = vmatpush1.msra.mxu0 0.0
  %522 = vmatprep.subr.mxu0 0.0
  %523 = vmatpush1.msra.mxu0 0.0
  %524 = vmatprep.subr.mxu0 0.0
  %525 = vmatpush1.msra.mxu0 0.0
  %526 = vmatprep.subr.mxu0 %v418
  %527 = vmatpush1.msra.mxu0 %v417
  %528 = vmatprep.subr.mxu0 %v374
  %529 = vmatpush1.msra.mxu0 %v373
  %530 = vmatprep.subr.mxu0 %v330
  %531 = vmatpush1.msra.mxu0 %v329
  %532 = vmatprep.subr.mxu0 %v286
  %533 = vmatpush1.msra.mxu0 %v285
  %534 = vmatprep.subr.mxu0 %v242
  %535 = vmatpush1.msra.mxu0 %v241
  %536 = vmatprep.subr.mxu0 %v198
  %537 = vmatpush1.msra.mxu0 %v197
  %538 = vmatprep.subr.mxu0 %v154
  %539 = vmatpush1.msra.mxu0 %v153
  %540 = vmatprep.subr.mxu0 %v110
  %541 = vmatpush1.msra.mxu0 %v109
  %542 = vmatprep.subr.mxu0 %v65
  %543 = vmatpush1.msra.mxu0 %v64
  %544 = vmatprep.subr.mxu0 0.0
  %545 = vmatpush2.msra.mxu0 0.0
  %546 = vmatprep.subr.mxu0 0.0
  %547 = vmatpush2.msra.mxu0 0.0
  %548 = vmatprep.subr.mxu0 0.0
  %549 = vmatpush2.msra.mxu0 0.0
  %550 = vmatprep.subr.mxu0 0.0
  %551 = vmatpush2.msra.mxu0 0.0
  %552 = vmatprep.subr.mxu0 0.0
  %553 = vmatpush2.msra.mxu0 0.0
  %554 = vmatprep.subr.mxu0 0.0
  %555 = vmatpush2.msra.mxu0 0.0
  %556 = vmatprep.subr.mxu0 0.0
  %557 = vmatpush2.msra.mxu0 0.0
  %558 = vmatprep.subr.mxu0 0.0
  %559 = vmatpush2.msra.mxu0 0.0
  %560 = vmatprep.subr.mxu0 0.0
  %561 = vmatpush2.msra.mxu0 0.0
  %562 = vmatprep.subr.mxu0 0.0
  %563 = vmatpush2.msra.mxu0 0.0
  %564 = vmatprep.subr.mxu0 0.0
  %565 = vmatpush2.msra.mxu0 0.0
  %566 = vmatprep.subr.mxu0 0.0
  %567 = vmatpush2.msra.mxu0 0.0
  %568 = vmatprep.subr.mxu0 0.0
  %569 = vmatpush2.msra.mxu0 0.0
  %570 = vmatprep.subr.mxu0 0.0
  %571 = vmatpush2.msra.mxu0 0.0
  %572 = vmatprep.subr.mxu0 0.0
  %573 = vmatpush2.msra.mxu0 0.0
  %574 = vmatprep.subr.mxu0 0.0
  %575 = vmatpush2.msra.mxu0 0.0
  %576 = vmatprep.mubr.f32.mxu0 0.0
  %577 = vmatmul.mubr.f32.gmra.mxu0 %v439
  %v578 = vpop.f32.mrf.mxu0
  %v579 = vadd.f32 0.0, %v578
  %v580 = vpop.f32.mrf.mxu0
  %v581 = vadd.f32 0.0, %v580
  %582 = vdwg.mxu0
  %583 = vmatprep.subr.mxu0 0.0
  %584 = vmatpush1.msra.mxu0 0.0
  %585 = vmatprep.subr.mxu0 0.0
  %586 = vmatpush1.msra.mxu0 0.0
  %587 = vmatprep.subr.mxu0 0.0
  %588 = vmatpush1.msra.mxu0 0.0
  %589 = vmatprep.subr.mxu0 0.0
  %590 = vmatpush1.msra.mxu0 0.0
  %591 = vmatprep.subr.mxu0 0.0
  %592 = vmatpush1.msra.mxu0 0.0
  %593 = vmatprep.subr.mxu0 0.0
  %594 = vmatpush1.msra.mxu0 0.0
  %595 = vmatprep.subr.mxu0 0.0
  %596 = vmatpush1.msra.mxu0 0.0
  %597 = vmatprep.subr.mxu0 %v420
  %598 = vmatpush1.msra.mxu0 %v419
  %599 = vmatprep.subr.mxu0 %v376
  %600 = vmatpush1.msra.mxu0 %v375
  %601 = vmatprep.subr.mxu0 %v332
  %602 = vmatpush1.msra.mxu0 %v331
  %603 = vmatprep.subr.mxu0 %v288
  %604 = vmatpush1.msra.mxu0 %v287
  %605 = vmatprep.subr.mxu0 %v244
  %606 = vmatpush1.msra.mxu0 %v243
  %607 = vmatprep.subr.mxu0 %v200
  %608 = vmatpush1.msra.mxu0 %v199
  %609 = vmatprep.subr.mxu0 %v156
  %610 = vmatpush1.msra.mxu0 %v155
  %611 = vmatprep.subr.mxu0 %v112
  %612 = vmatpush1.msra.mxu0 %v111
  %613 = vmatprep.subr.mxu0 %v67
  %614 = vmatpush1.msra.mxu0 %v66
  %615 = vmatprep.subr.mxu0 0.0
  %616 = vmatpush2.msra.mxu0 0.0
  %617 = vmatprep.subr.mxu0 0.0
  %618 = vmatpush2.msra.mxu0 0.0
  %619 = vmatprep.subr.mxu0 0.0
  %620 = vmatpush2.msra.mxu0 0.0
  %621 = vmatprep.subr.mxu0 0.0
  %622 = vmatpush2.msra.mxu0 0.0
  %623 = vmatprep.subr.mxu0 0.0
  %624 = vmatpush2.msra.mxu0 0.0
  %625 = vmatprep.subr.mxu0 0.0
  %626 = vmatpush2.msra.mxu0 0.0
  %627 = vmatprep.subr.mxu0 0.0
  %628 = vmatpush2.msra.mxu0 0.0
  %629 = vmatprep.subr.mxu0 0.0
  %630 = vmatpush2.msra.mxu0 0.0
  %631 = vmatprep.subr.mxu0 0.0
  %632 = vmatpush2.msra.mxu0 0.0
  %633 = vmatprep.subr.mxu0 0.0
  %634 = vmatpush2.msra.mxu0 0.0
  %635 = vmatprep.subr.mxu0 0.0
  %636 = vmatpush2.msra.mxu0 0.0
  %637 = vmatprep.subr.mxu0 0.0
  %638 = vmatpush2.msra.mxu0 0.0
  %639 = vmatprep.subr.mxu0 0.0
  %640 = vmatpush2.msra.mxu0 0.0
  %641 = vmatprep.subr.mxu0 0.0
  %642 = vmatpush2.msra.mxu0 0.0
  %643 = vmatprep.subr.mxu0 0.0
  %644 = vmatpush2.msra.mxu0 0.0
  %645 = vmatprep.subr.mxu0 0.0
  %646 = vmatpush2.msra.mxu0 0.0
  %647 = vmatprep.mubr.f32.mxu0 0.0
  %648 = vmatmul.mubr.f32.gmra.mxu0 %v439
  %v649 = vpop.f32.mrf.mxu0
  %v650 = vadd.f32 0.0, %v649
  %v651 = vpop.f32.mrf.mxu0
  %v652 = vadd.f32 0.0, %v651
  %653 = vdwg.mxu0
  %654 = vmatprep.subr.mxu0 0.0
  %655 = vmatpush1.msra.mxu0 0.0
  %656 = vmatprep.subr.mxu0 0.0
  %657 = vmatpush1.msra.mxu0 0.0
  %658 = vmatprep.subr.mxu0 0.0
  %659 = vmatpush1.msra.mxu0 0.0
  %660 = vmatprep.subr.mxu0 0.0
  %661 = vmatpush1.msra.mxu0 0.0
  %662 = vmatprep.subr.mxu0 0.0
  %663 = vmatpush1.msra.mxu0 0.0
  %664 = vmatprep.subr.mxu0 0.0
  %665 = vmatpush1.msra.mxu0 0.0
  %666 = vmatprep.subr.mxu0 0.0
  %667 = vmatpush1.msra.mxu0 0.0
  %668 = vmatprep.subr.mxu0 %v422
  %669 = vmatpush1.msra.mxu0 %v421
  %670 = vmatprep.subr.mxu0 %v378
  %671 = vmatpush1.msra.mxu0 %v377
  %672 = vmatprep.subr.mxu0 %v334
  %673 = vmatpush1.msra.mxu0 %v333
  %674 = vmatprep.subr.mxu0 %v290
  %675 = vmatpush1.msra.mxu0 %v289
  %676 = vmatprep.subr.mxu0 %v246
  %677 = vmatpush1.msra.mxu0 %v245
  %678 = vmatprep.subr.mxu0 %v202
  %679 = vmatpush1.msra.mxu0 %v201
  %680 = vmatprep.subr.mxu0 %v158
  %681 = vmatpush1.msra.mxu0 %v157
  %682 = vmatprep.subr.mxu0 %v114
  %683 = vmatpush1.msra.mxu0 %v113
  %684 = vmatprep.subr.mxu0 %v69
  %685 = vmatpush1.msra.mxu0 %v68
  %686 = vmatprep.subr.mxu0 0.0
  %687 = vmatpush2.msra.mxu0 0.0
  %688 = vmatprep.subr.mxu0 0.0
  %689 = vmatpush2.msra.mxu0 0.0
  %690 = vmatprep.subr.mxu0 0.0
  %691 = vmatpush2.msra.mxu0 0.0
  %692 = vmatprep.subr.mxu0 0.0
  %693 = vmatpush2.msra.mxu0 0.0
  %694 = vmatprep.subr.mxu0 0.0
  %695 = vmatpush2.msra.mxu0 0.0
  %696 = vmatprep.subr.mxu0 0.0
  %697 = vmatpush2.msra.mxu0 0.0
  %698 = vmatprep.subr.mxu0 0.0
  %699 = vmatpush2.msra.mxu0 0.0
  %700 = vmatprep.subr.mxu0 0.0
  %701 = vmatpush2.msra.mxu0 0.0
  %702 = vmatprep.subr.mxu0 0.0
  %703 = vmatpush2.msra.mxu0 0.0
  %704 = vmatprep.subr.mxu0 0.0
  %705 = vmatpush2.msra.mxu0 0.0
  %706 = vmatprep.subr.mxu0 0.0
  %707 = vmatpush2.msra.mxu0 0.0
  %708 = vmatprep.subr.mxu0 0.0
  %709 = vmatpush2.msra.mxu0 0.0
  %710 = vmatprep.subr.mxu0 0.0
  %711 = vmatpush2.msra.mxu0 0.0
  %712 = vmatprep.subr.mxu0 0.0
  %713 = vmatpush2.msra.mxu0 0.0
  %714 = vmatprep.subr.mxu0 0.0
  %715 = vmatpush2.msra.mxu0 0.0
  %716 = vmatprep.subr.mxu0 0.0
  %717 = vmatpush2.msra.mxu0 0.0
  %718 = vmatprep.mubr.f32.mxu0 0.0
  %719 = vmatmul.mubr.f32.gmra.mxu0 %v439
  %v720 = vpop.f32.mrf.mxu0
  %v721 = vadd.f32 0.0, %v720
  %v722 = vpop.f32.mrf.mxu0
  %v723 = vadd.f32 0.0, %v722
  %724 = vdwg.mxu0
  %725 = vmatprep.subr.mxu0 0.0
  %726 = vmatpush1.msra.mxu0 0.0
  %727 = vmatprep.subr.mxu0 0.0
  %728 = vmatpush1.msra.mxu0 0.0
  %729 = vmatprep.subr.mxu0 0.0
  %730 = vmatpush1.msra.mxu0 0.0
  %731 = vmatprep.subr.mxu0 0.0
  %732 = vmatpush1.msra.mxu0 0.0
  %733 = vmatprep.subr.mxu0 0.0
  %734 = vmatpush1.msra.mxu0 0.0
  %735 = vmatprep.subr.mxu0 0.0
  %736 = vmatpush1.msra.mxu0 0.0
  %737 = vmatprep.subr.mxu0 0.0
  %738 = vmatpush1.msra.mxu0 0.0
  %739 = vmatprep.subr.mxu0 %v424
  %740 = vmatpush1.msra.mxu0 %v423
  %741 = vmatprep.subr.mxu0 %v380
  %742 = vmatpush1.msra.mxu0 %v379
  %743 = vmatprep.subr.mxu0 %v336
  %744 = vmatpush1.msra.mxu0 %v335
  %745 = vmatprep.subr.mxu0 %v292
  %746 = vmatpush1.msra.mxu0 %v291
  %747 = vmatprep.subr.mxu0 %v248
  %748 = vmatpush1.msra.mxu0 %v247
  %749 = vmatprep.subr.mxu0 %v204
  %750 = vmatpush1.msra.mxu0 %v203
  %751 = vmatprep.subr.mxu0 %v160
  %752 = vmatpush1.msra.mxu0 %v159
  %753 = vmatprep.subr.mxu0 %v116
  %754 = vmatpush1.msra.mxu0 %v115
  %755 = vmatprep.subr.mxu0 %v71
  %756 = vmatpush1.msra.mxu0 %v70
  %757 = vmatprep.subr.mxu0 0.0
  %758 = vmatpush2.msra.mxu0 0.0
  %759 = vmatprep.subr.mxu0 0.0
  %760 = vmatpush2.msra.mxu0 0.0
  %761 = vmatprep.subr.mxu0 0.0
  %762 = vmatpush2.msra.mxu0 0.0
  %763 = vmatprep.subr.mxu0 0.0
  %764 = vmatpush2.msra.mxu0 0.0
  %765 = vmatprep.subr.mxu0 0.0
  %766 = vmatpush2.msra.mxu0 0.0
  %767 = vmatprep.subr.mxu0 0.0
  %768 = vmatpush2.msra.mxu0 0.0
  %769 = vmatprep.subr.mxu0 0.0
  %770 = vmatpush2.msra.mxu0 0.0
  %771 = vmatprep.subr.mxu0 0.0
  %772 = vmatpush2.msra.mxu0 0.0
  %773 = vmatprep.subr.mxu0 0.0
  %774 = vmatpush2.msra.mxu0 0.0
  %775 = vmatprep.subr.mxu0 0.0
  %776 = vmatpush2.msra.mxu0 0.0
  %777 = vmatprep.subr.mxu0 0.0
  %778 = vmatpush2.msra.mxu0 0.0
  %779 = vmatprep.subr.mxu0 0.0
  %780 = vmatpush2.msra.mxu0 0.0
  %781 = vmatprep.subr.mxu0 0.0
  %782 = vmatpush2.msra.mxu0 0.0
  %783 = vmatprep.subr.mxu0 0.0
  %784 = vmatpush2.msra.mxu0 0.0
  %785 = vmatprep.subr.mxu0 0.0
  %786 = vmatpush2.msra.mxu0 0.0
  %787 = vmatprep.subr.mxu0 0.0
  %788 = vmatpush2.msra.mxu0 0.0
  %789 = vmatprep.mubr.f32.mxu0 0.0
  %790 = vmatmul.mubr.f32.gmra.mxu0 %v439
  %v791 = vpop.f32.mrf.mxu0
  %v792 = vadd.f32 0.0, %v791
  %v793 = vpop.f32.mrf.mxu0
  %v794 = vadd.f32 0.0, %v793
  %795 = vdwg.mxu0
  %796 = vmatprep.subr.mxu0 0.0
  %797 = vmatpush1.msra.mxu0 0.0
  %798 = vmatprep.subr.mxu0 0.0
  %799 = vmatpush1.msra.mxu0 0.0
  %800 = vmatprep.subr.mxu0 0.0
  %801 = vmatpush1.msra.mxu0 0.0
  %802 = vmatprep.subr.mxu0 0.0
  %803 = vmatpush1.msra.mxu0 0.0
  %804 = vmatprep.subr.mxu0 0.0
  %805 = vmatpush1.msra.mxu0 0.0
  %806 = vmatprep.subr.mxu0 0.0
  %807 = vmatpush1.msra.mxu0 0.0
  %808 = vmatprep.subr.mxu0 0.0
  %809 = vmatpush1.msra.mxu0 0.0
  %810 = vmatprep.subr.mxu0 0.0
  %811 = vmatpush1.msra.mxu0 %v413
  %812 = vmatprep.subr.mxu0 0.0
  %813 = vmatpush1.msra.mxu0 %v369
  %814 = vmatprep.subr.mxu0 0.0
  %815 = vmatpush1.msra.mxu0 %v325
  %816 = vmatprep.subr.mxu0 0.0
  %817 = vmatpush1.msra.mxu0 %v281
  %818 = vmatprep.subr.mxu0 0.0
  %819 = vmatpush1.msra.mxu0 %v237
  %820 = vmatprep.subr.mxu0 0.0
  %821 = vmatpush1.msra.mxu0 %v193
  %822 = vmatprep.subr.mxu0 0.0
  %823 = vmatpush1.msra.mxu0 %v149
  %824 = vmatprep.subr.mxu0 0.0
  %825 = vmatpush1.msra.mxu0 %v105
  %826 = vmatprep.subr.mxu0 0.0
  %827 = vmatpush1.msra.mxu0 %v72
  %828 = vmatprep.subr.mxu0 0.0
  %829 = vmatpush2.msra.mxu0 0.0
  %830 = vmatprep.subr.mxu0 0.0
  %831 = vmatpush2.msra.mxu0 0.0
  %832 = vmatprep.subr.mxu0 0.0
  %833 = vmatpush2.msra.mxu0 0.0
  %834 = vmatprep.subr.mxu0 0.0
  %835 = vmatpush2.msra.mxu0 0.0
  %836 = vmatprep.subr.mxu0 0.0
  %837 = vmatpush2.msra.mxu0 0.0
  %838 = vmatprep.subr.mxu0 0.0
  %839 = vmatpush2.msra.mxu0 0.0
  %840 = vmatprep.subr.mxu0 0.0
  %841 = vmatpush2.msra.mxu0 0.0
  %842 = vmatprep.subr.mxu0 0.0
  %843 = vmatpush2.msra.mxu0 0.0
  %844 = vmatprep.subr.mxu0 0.0
  %845 = vmatpush2.msra.mxu0 0.0
  %846 = vmatprep.subr.mxu0 0.0
  %847 = vmatpush2.msra.mxu0 0.0
  %848 = vmatprep.subr.mxu0 0.0
  %849 = vmatpush2.msra.mxu0 0.0
  %850 = vmatprep.subr.mxu0 0.0
  %851 = vmatpush2.msra.mxu0 0.0
  %852 = vmatprep.subr.mxu0 0.0
  %853 = vmatpush2.msra.mxu0 0.0
  %854 = vmatprep.subr.mxu0 0.0
  %855 = vmatpush2.msra.mxu0 0.0
  %856 = vmatprep.subr.mxu0 0.0
  %857 = vmatpush2.msra.mxu0 0.0
  %858 = vmatprep.subr.mxu0 0.0
  %859 = vmatpush2.msra.mxu0 0.0
  %860 = vmatprep.mubr.f32.mxu0 0.0
  %861 = vmatmul.mubr.f32.gmra.mxu0 %v439
  %v862 = vpop.f32.mrf.mxu0
  %v863 = vadd.f32 0.0, %v862
  %v864 = vpop.f32.mrf.mxu0
  %865 = vdwg.mxu0
  %v866 = vld [vmem:[%s4] sm:$0xff]
  %v867 = vld [vmem:[%s4 + $0x8] sm:$0x7]
  %v870 = vlaneseq
  %v871 = vshrl.u32 %v870, 7
  %v872 = vsub.s32 0, %v871
  %v873 = vrot.slane %v866, %v872
  %v874 = vlaneseq
  %v875 = vshrl.u32 %v874, 7
  %v876 = vsub.s32 1, %v875
  %v877 = vrot.slane %v866, %v876
  %v878 = vlaneseq
  %v879 = vshrl.u32 %v878, 7
  %v880 = vsub.s32 2, %v879
  %v881 = vrot.slane %v866, %v880
  %v882 = vlaneseq
  %v883 = vshrl.u32 %v882, 7
  %v884 = vsub.s32 3, %v883
  %v885 = vrot.slane %v866, %v884
  %v886 = vlaneseq
  %v887 = vshrl.u32 %v886, 7
  %v888 = vsub.s32 4, %v887
  %v889 = vrot.slane %v866, %v888
  %v890 = vlaneseq
  %v891 = vshrl.u32 %v890, 7
  %v892 = vsub.s32 5, %v891
  %v893 = vrot.slane %v866, %v892
  %v894 = vlaneseq
  %v895 = vshrl.u32 %v894, 7
  %v896 = vsub.s32 6, %v895
  %v897 = vrot.slane %v866, %v896
  %v898 = vlaneseq
  %v899 = vshrl.u32 %v898, 7
  %v900 = vsub.s32 7, %v899
  %v901 = vrot.slane %v866, %v900
  %v902 = vlaneseq
  %v903 = vshrl.u32 %v902, 7
  %v904 = vsub.s32 0, %v903
  %v905 = vrot.slane %v867, %v904
  %v906 = vlaneseq
  %v907 = vshrl.u32 %v906, 7
  %v908 = vsub.s32 1, %v907
  %v909 = vrot.slane %v867, %v908
  %v910 = vlaneseq
  %v911 = vshrl.u32 %v910, 7
  %v912 = vsub.s32 2, %v911
  %v913 = vrot.slane %v867, %v912
  %v925 = vmul.f32 %v508, %v873
  %v926 = vmul.f32 %v510, %v877
  %v927 = vmul.f32 %v579, %v881
  %v928 = vmul.f32 %v581, %v885
  %v929 = vmul.f32 %v650, %v889
  %v930 = vmul.f32 %v652, %v893
  %v931 = vmul.f32 %v721, %v897
  %v932 = vmul.f32 %v723, %v901
  %v933 = vmul.f32 %v792, %v905
  %v934 = vmul.f32 %v794, %v909
  %v935 = vmul.f32 %v863, %v913
  %v936 = vadd.f32 %v925, %v926
  %v937 = vadd.f32 %v936, %v927
  %v938 = vadd.f32 %v937, %v928
  %v939 = vadd.f32 %v938, %v929
  %v940 = vadd.f32 %v939, %v930
  %v941 = vadd.f32 %v940, %v931
  %v942 = vadd.f32 %v941, %v932
  %v943 = vadd.f32 %v942, %v933
  %v944 = vadd.f32 %v943, %v934
  %vm945 = vcmask 146432
  %v946 = vsel %vm945, %v935, 0.0
  %v947 = vadd.f32 %v944, %v946
  %948 = vadd.xlane.f32.xlu0 %v947
  %v949 = vpop.xlane.xlu0 %948
  %v950 = vmul.f32 %v949, 0.00086805556
  %v951 = vmul.f32 %v925, %v508
  %v952 = vmul.f32 %v926, %v510
  %v953 = vmul.f32 %v927, %v579
  %v954 = vmul.f32 %v928, %v581
  %v955 = vmul.f32 %v929, %v650
  %v956 = vmul.f32 %v930, %v652
  %v957 = vmul.f32 %v931, %v721
  %v958 = vmul.f32 %v932, %v723
  %v959 = vmul.f32 %v933, %v792
  %v960 = vmul.f32 %v934, %v794
  %v961 = vmul.f32 %v935, %v863
  %v962 = vadd.f32 %v951, %v952
  %v963 = vadd.f32 %v962, %v953
  %v964 = vadd.f32 %v963, %v954
  %v965 = vadd.f32 %v964, %v955
  %v966 = vadd.f32 %v965, %v956
  %v967 = vadd.f32 %v966, %v957
  %v968 = vadd.f32 %v967, %v958
  %v969 = vadd.f32 %v968, %v959
  %v970 = vadd.f32 %v969, %v960
  %v971 = vsel %vm945, %v961, 0.0
  %v972 = vadd.f32 %v970, %v971
  %973 = vadd.xlane.f32.xlu0 %v972
  %v974 = vpop.xlane.xlu0 %973
  %v975 = vmul.f32 %v974, 0.00086805556
  %v976 = vmul.f32 %v950, %v950
  %v977 = vsub.f32 %v975, %v976
  %v978 = vmax.f32 %v977, 0.0
  %v979 = vld [vmem:[%s2] sm:$0xff]
  %v980 = vadd.f32 %v978, 1e-05
  %v981 = vrsqrt.pop %v980
  %v982 = vmul.f32 %v979, %v981
  %v983 = vld [vmem:[%s3] sm:$0xff]
  %v984 = vmul.f32 %v950, %v982
  %v985 = vsub.f32 %v983, %v984
  %987 = vset.pattern.permute.xlu0 0
  %988 = vperm.xlu0 %987, %v982
  %v989 = vpop.permute.xlu0 %988
  %v991 = vmul.f32 %v508, %v989
  %v992 = vmul.f32 %v510, %v989
  %v993 = vmul.f32 %v579, %v989
  %v994 = vmul.f32 %v581, %v989
  %v995 = vmul.f32 %v650, %v989
  %v996 = vmul.f32 %v652, %v989
  %v997 = vmul.f32 %v721, %v989
  %v998 = vmul.f32 %v723, %v989
  %v999 = vmul.f32 %v792, %v989
  %v1000 = vmul.f32 %v794, %v989
  %v1001 = vmul.f32 %v863, %v989
  %1003 = vset.pattern.permute.xlu0 0
  %1004 = vperm.xlu0 %1003, %v985
  %v1005 = vpop.permute.xlu0 %1004
  %v1007 = vadd.f32 %v991, %v1005
  %v1008 = vadd.f32 %v992, %v1005
  %v1009 = vadd.f32 %v993, %v1005
  %v1010 = vadd.f32 %v994, %v1005
  %v1011 = vadd.f32 %v995, %v1005
  %v1012 = vadd.f32 %v996, %v1005
  %v1013 = vadd.f32 %v997, %v1005
  %v1014 = vadd.f32 %v998, %v1005
  %v1015 = vadd.f32 %v999, %v1005
  %v1016 = vadd.f32 %v1000, %v1005
  %v1017 = vadd.f32 %v1001, %v1005
  %vm1018 = vcmp.ge.f32.partialorder %v1007, 0.0
  %vm1019 = vcmp.ge.f32.partialorder %v1008, 0.0
  %vm1020 = vcmp.ge.f32.partialorder %v1009, 0.0
  %vm1021 = vcmp.ge.f32.partialorder %v1010, 0.0
  %vm1022 = vcmp.ge.f32.partialorder %v1011, 0.0
  %vm1023 = vcmp.ge.f32.partialorder %v1012, 0.0
  %vm1024 = vcmp.ge.f32.partialorder %v1013, 0.0
  %vm1025 = vcmp.ge.f32.partialorder %v1014, 0.0
  %vm1026 = vcmp.ge.f32.partialorder %v1015, 0.0
  %vm1027 = vcmp.ge.f32.partialorder %v1016, 0.0
  %vm1028 = vcmp.ge.f32.partialorder %v1017, 0.0
  %v1029 = vmul.f32 %v1007, 0.2
  %v1030 = vmul.f32 %v1008, 0.2
  %v1031 = vmul.f32 %v1009, 0.2
  %v1032 = vmul.f32 %v1010, 0.2
  %v1033 = vmul.f32 %v1011, 0.2
  %v1034 = vmul.f32 %v1012, 0.2
  %v1035 = vmul.f32 %v1013, 0.2
  %v1036 = vmul.f32 %v1014, 0.2
  %v1037 = vmul.f32 %v1015, 0.2
  %v1038 = vmul.f32 %v1016, 0.2
  %v1039 = vmul.f32 %v1017, 0.2
  %v1040 = vsel %vm1018, %v1007, %v1029
  %v1041 = vsel %vm1019, %v1008, %v1030
  %v1042 = vsel %vm1020, %v1009, %v1031
  %v1043 = vsel %vm1021, %v1010, %v1032
  %v1044 = vsel %vm1022, %v1011, %v1033
  %v1045 = vsel %vm1023, %v1012, %v1034
  %v1046 = vsel %vm1024, %v1013, %v1035
  %v1047 = vsel %vm1025, %v1014, %v1036
  %v1048 = vsel %vm1026, %v1015, %v1037
  %v1049 = vsel %vm1027, %v1016, %v1038
  %v1050 = vsel %vm1028, %v1017, %v1039
  %v1051 = vmul.f32 %v1040, %v873
  %v1052 = vmul.f32 %v1041, %v877
  %v1053 = vmul.f32 %v1042, %v881
  %v1054 = vmul.f32 %v1043, %v885
  %v1055 = vmul.f32 %v1044, %v889
  %v1056 = vmul.f32 %v1045, %v893
  %v1057 = vmul.f32 %v1046, %v897
  %v1058 = vmul.f32 %v1047, %v901
  %v1059 = vmul.f32 %v1048, %v905
  %v1060 = vmul.f32 %v1049, %v909
  %v1061 = vmul.f32 %v1050, %v913
  %1072 = vrot.lane.b32.xlu0 %v1051, 127
  %v1073 = vpop.permute.xlu0 %1072
  %1074 = vrot.lane.b32.xlu0 %v1052, 127
  %v1075 = vpop.permute.xlu0 %1074
  %1076 = vrot.lane.b32.xlu0 %v1053, 127
  %v1077 = vpop.permute.xlu0 %1076
  %1078 = vrot.lane.b32.xlu0 %v1054, 127
  %v1079 = vpop.permute.xlu0 %1078
  %1080 = vrot.lane.b32.xlu0 %v1055, 127
  %v1081 = vpop.permute.xlu0 %1080
  %1082 = vrot.lane.b32.xlu0 %v1056, 127
  %v1083 = vpop.permute.xlu0 %1082
  %1084 = vrot.lane.b32.xlu0 %v1057, 127
  %v1085 = vpop.permute.xlu0 %1084
  %1086 = vrot.lane.b32.xlu0 %v1058, 127
  %v1087 = vpop.permute.xlu0 %1086
  %1088 = vrot.lane.b32.xlu0 %v1059, 127
  %v1089 = vpop.permute.xlu0 %1088
  %1090 = vrot.lane.b32.xlu0 %v1060, 127
  %v1091 = vpop.permute.xlu0 %1090
  %v1092 = vsel %vm106, %v1073, %v1075
  %v1093 = vsel %vm106, %v1075, %v1077
  %v1094 = vsel %vm106, %v1077, %v1079
  %v1095 = vsel %vm106, %v1079, %v1081
  %v1096 = vsel %vm106, %v1081, %v1083
  %v1097 = vsel %vm106, %v1083, %v1085
  %v1098 = vsel %vm106, %v1085, %v1087
  %v1099 = vsel %vm106, %v1087, %v1089
  %v1100 = vsel %vm106, %v1089, %v1091
  %1111 = vrot.lane.b32.xlu0 %v1051, 126
  %v1112 = vpop.permute.xlu0 %1111
  %1113 = vrot.lane.b32.xlu0 %v1052, 126
  %v1114 = vpop.permute.xlu0 %1113
  %1115 = vrot.lane.b32.xlu0 %v1053, 126
  %v1116 = vpop.permute.xlu0 %1115
  %1117 = vrot.lane.b32.xlu0 %v1054, 126
  %v1118 = vpop.permute.xlu0 %1117
  %1119 = vrot.lane.b32.xlu0 %v1055, 126
  %v1120 = vpop.permute.xlu0 %1119
  %1121 = vrot.lane.b32.xlu0 %v1056, 126
  %v1122 = vpop.permute.xlu0 %1121
  %1123 = vrot.lane.b32.xlu0 %v1057, 126
  %v1124 = vpop.permute.xlu0 %1123
  %1125 = vrot.lane.b32.xlu0 %v1058, 126
  %v1126 = vpop.permute.xlu0 %1125
  %1127 = vrot.lane.b32.xlu0 %v1059, 126
  %v1128 = vpop.permute.xlu0 %1127
  %1129 = vrot.lane.b32.xlu0 %v1060, 126
  %v1130 = vpop.permute.xlu0 %1129
  %v1131 = vsel %vm150, %v1112, %v1114
  %v1132 = vsel %vm150, %v1114, %v1116
  %v1133 = vsel %vm150, %v1116, %v1118
  %v1134 = vsel %vm150, %v1118, %v1120
  %v1135 = vsel %vm150, %v1120, %v1122
  %v1136 = vsel %vm150, %v1122, %v1124
  %v1137 = vsel %vm150, %v1124, %v1126
  %v1138 = vsel %vm150, %v1126, %v1128
  %v1139 = vsel %vm150, %v1128, %v1130
  %1150 = vrot.lane.b32.xlu0 %v1051, 102
  %v1151 = vpop.permute.xlu0 %1150
  %1152 = vrot.lane.b32.xlu0 %v1052, 102
  %v1153 = vpop.permute.xlu0 %1152
  %1154 = vrot.lane.b32.xlu0 %v1053, 102
  %v1155 = vpop.permute.xlu0 %1154
  %1156 = vrot.lane.b32.xlu0 %v1054, 102
  %v1157 = vpop.permute.xlu0 %1156
  %1158 = vrot.lane.b32.xlu0 %v1055, 102
  %v1159 = vpop.permute.xlu0 %1158
  %1160 = vrot.lane.b32.xlu0 %v1056, 102
  %v1161 = vpop.permute.xlu0 %1160
  %1162 = vrot.lane.b32.xlu0 %v1057, 102
  %v1163 = vpop.permute.xlu0 %1162
  %1164 = vrot.lane.b32.xlu0 %v1058, 102
  %v1165 = vpop.permute.xlu0 %1164
  %1166 = vrot.lane.b32.xlu0 %v1059, 102
  %v1167 = vpop.permute.xlu0 %1166
  %1168 = vrot.lane.b32.xlu0 %v1060, 102
  %v1169 = vpop.permute.xlu0 %1168
  %v1170 = vsel %vm194, %v1151, %v1153
  %v1171 = vsel %vm194, %v1153, %v1155
  %v1172 = vsel %vm194, %v1155, %v1157
  %v1173 = vsel %vm194, %v1157, %v1159
  %v1174 = vsel %vm194, %v1159, %v1161
  %v1175 = vsel %vm194, %v1161, %v1163
  %v1176 = vsel %vm194, %v1163, %v1165
  %v1177 = vsel %vm194, %v1165, %v1167
  %v1178 = vsel %vm194, %v1167, %v1169
  %1189 = vrot.lane.b32.xlu0 %v1051, 101
  %v1190 = vpop.permute.xlu0 %1189
  %1191 = vrot.lane.b32.xlu0 %v1052, 101
  %v1192 = vpop.permute.xlu0 %1191
  %1193 = vrot.lane.b32.xlu0 %v1053, 101
  %v1194 = vpop.permute.xlu0 %1193
  %1195 = vrot.lane.b32.xlu0 %v1054, 101
  %v1196 = vpop.permute.xlu0 %1195
  %1197 = vrot.lane.b32.xlu0 %v1055, 101
  %v1198 = vpop.permute.xlu0 %1197
  %1199 = vrot.lane.b32.xlu0 %v1056, 101
  %v1200 = vpop.permute.xlu0 %1199
  %1201 = vrot.lane.b32.xlu0 %v1057, 101
  %v1202 = vpop.permute.xlu0 %1201
  %1203 = vrot.lane.b32.xlu0 %v1058, 101
  %v1204 = vpop.permute.xlu0 %1203
  %1205 = vrot.lane.b32.xlu0 %v1059, 101
  %v1206 = vpop.permute.xlu0 %1205
  %1207 = vrot.lane.b32.xlu0 %v1060, 101
  %v1208 = vpop.permute.xlu0 %1207
  %v1209 = vsel %vm238, %v1190, %v1192
  %v1210 = vsel %vm238, %v1192, %v1194
  %v1211 = vsel %vm238, %v1194, %v1196
  %v1212 = vsel %vm238, %v1196, %v1198
  %v1213 = vsel %vm238, %v1198, %v1200
  %v1214 = vsel %vm238, %v1200, %v1202
  %v1215 = vsel %vm238, %v1202, %v1204
  %v1216 = vsel %vm238, %v1204, %v1206
  %v1217 = vsel %vm238, %v1206, %v1208
  %1228 = vrot.lane.b32.xlu0 %v1051, 100
  %v1229 = vpop.permute.xlu0 %1228
  %1230 = vrot.lane.b32.xlu0 %v1052, 100
  %v1231 = vpop.permute.xlu0 %1230
  %1232 = vrot.lane.b32.xlu0 %v1053, 100
  %v1233 = vpop.permute.xlu0 %1232
  %1234 = vrot.lane.b32.xlu0 %v1054, 100
  %v1235 = vpop.permute.xlu0 %1234
  %1236 = vrot.lane.b32.xlu0 %v1055, 100
  %v1237 = vpop.permute.xlu0 %1236
  %1238 = vrot.lane.b32.xlu0 %v1056, 100
  %v1239 = vpop.permute.xlu0 %1238
  %1240 = vrot.lane.b32.xlu0 %v1057, 100
  %v1241 = vpop.permute.xlu0 %1240
  %1242 = vrot.lane.b32.xlu0 %v1058, 100
  %v1243 = vpop.permute.xlu0 %1242
  %1244 = vrot.lane.b32.xlu0 %v1059, 100
  %v1245 = vpop.permute.xlu0 %1244
  %1246 = vrot.lane.b32.xlu0 %v1060, 100
  %v1247 = vpop.permute.xlu0 %1246
  %v1248 = vsel %vm282, %v1229, %v1231
  %v1249 = vsel %vm282, %v1231, %v1233
  %v1250 = vsel %vm282, %v1233, %v1235
  %v1251 = vsel %vm282, %v1235, %v1237
  %v1252 = vsel %vm282, %v1237, %v1239
  %v1253 = vsel %vm282, %v1239, %v1241
  %v1254 = vsel %vm282, %v1241, %v1243
  %v1255 = vsel %vm282, %v1243, %v1245
  %v1256 = vsel %vm282, %v1245, %v1247
  %1268 = vrot.lane.b32.xlu0 %v1051, 76
  %v1269 = vpop.permute.xlu0 %1268
  %1270 = vrot.lane.b32.xlu0 %v1052, 76
  %v1271 = vpop.permute.xlu0 %1270
  %1272 = vrot.lane.b32.xlu0 %v1053, 76
  %v1273 = vpop.permute.xlu0 %1272
  %1274 = vrot.lane.b32.xlu0 %v1054, 76
  %v1275 = vpop.permute.xlu0 %1274
  %1276 = vrot.lane.b32.xlu0 %v1055, 76
  %v1277 = vpop.permute.xlu0 %1276
  %1278 = vrot.lane.b32.xlu0 %v1056, 76
  %v1279 = vpop.permute.xlu0 %1278
  %1280 = vrot.lane.b32.xlu0 %v1057, 76
  %v1281 = vpop.permute.xlu0 %1280
  %1282 = vrot.lane.b32.xlu0 %v1058, 76
  %v1283 = vpop.permute.xlu0 %1282
  %1284 = vrot.lane.b32.xlu0 %v1059, 76
  %v1285 = vpop.permute.xlu0 %1284
  %1286 = vrot.lane.b32.xlu0 %v1060, 76
  %v1287 = vpop.permute.xlu0 %1286
  %1288 = vrot.lane.b32.xlu0 %v1061, 76
  %v1289 = vpop.permute.xlu0 %1288
  %v1290 = vsel %vm326, %v1269, %v1271
  %v1291 = vsel %vm326, %v1271, %v1273
  %v1292 = vsel %vm326, %v1273, %v1275
  %v1293 = vsel %vm326, %v1275, %v1277
  %v1294 = vsel %vm326, %v1277, %v1279
  %v1295 = vsel %vm326, %v1279, %v1281
  %v1296 = vsel %vm326, %v1281, %v1283
  %v1297 = vsel %vm326, %v1283, %v1285
  %v1298 = vsel %vm326, %v1285, %v1287
  %v1299 = vsel %vm326, %v1287, %v1289
  %1310 = vrot.lane.b32.xlu0 %v1051, 75
  %v1311 = vpop.permute.xlu0 %1310
  %1312 = vrot.lane.b32.xlu0 %v1052, 75
  %v1313 = vpop.permute.xlu0 %1312
  %1314 = vrot.lane.b32.xlu0 %v1053, 75
  %v1315 = vpop.permute.xlu0 %1314
  %1316 = vrot.lane.b32.xlu0 %v1054, 75
  %v1317 = vpop.permute.xlu0 %1316
  %1318 = vrot.lane.b32.xlu0 %v1055, 75
  %v1319 = vpop.permute.xlu0 %1318
  %1320 = vrot.lane.b32.xlu0 %v1056, 75
  %v1321 = vpop.permute.xlu0 %1320
  %1322 = vrot.lane.b32.xlu0 %v1057, 75
  %v1323 = vpop.permute.xlu0 %1322
  %1324 = vrot.lane.b32.xlu0 %v1058, 75
  %v1325 = vpop.permute.xlu0 %1324
  %1326 = vrot.lane.b32.xlu0 %v1059, 75
  %v1327 = vpop.permute.xlu0 %1326
  %1328 = vrot.lane.b32.xlu0 %v1060, 75
  %v1329 = vpop.permute.xlu0 %1328
  %1330 = vrot.lane.b32.xlu0 %v1061, 75
  %v1331 = vpop.permute.xlu0 %1330
  %v1332 = vsel %vm370, %v1311, %v1313
  %v1333 = vsel %vm370, %v1313, %v1315
  %v1334 = vsel %vm370, %v1315, %v1317
  %v1335 = vsel %vm370, %v1317, %v1319
  %v1336 = vsel %vm370, %v1319, %v1321
  %v1337 = vsel %vm370, %v1321, %v1323
  %v1338 = vsel %vm370, %v1323, %v1325
  %v1339 = vsel %vm370, %v1325, %v1327
  %v1340 = vsel %vm370, %v1327, %v1329
  %v1341 = vsel %vm370, %v1329, %v1331
  %1352 = vrot.lane.b32.xlu0 %v1051, 74
  %v1353 = vpop.permute.xlu0 %1352
  %1354 = vrot.lane.b32.xlu0 %v1052, 74
  %v1355 = vpop.permute.xlu0 %1354
  %1356 = vrot.lane.b32.xlu0 %v1053, 74
  %v1357 = vpop.permute.xlu0 %1356
  %1358 = vrot.lane.b32.xlu0 %v1054, 74
  %v1359 = vpop.permute.xlu0 %1358
  %1360 = vrot.lane.b32.xlu0 %v1055, 74
  %v1361 = vpop.permute.xlu0 %1360
  %1362 = vrot.lane.b32.xlu0 %v1056, 74
  %v1363 = vpop.permute.xlu0 %1362
  %1364 = vrot.lane.b32.xlu0 %v1057, 74
  %v1365 = vpop.permute.xlu0 %1364
  %1366 = vrot.lane.b32.xlu0 %v1058, 74
  %v1367 = vpop.permute.xlu0 %1366
  %1368 = vrot.lane.b32.xlu0 %v1059, 74
  %v1369 = vpop.permute.xlu0 %1368
  %1370 = vrot.lane.b32.xlu0 %v1060, 74
  %v1371 = vpop.permute.xlu0 %1370
  %1372 = vrot.lane.b32.xlu0 %v1061, 74
  %v1373 = vpop.permute.xlu0 %1372
  %v1374 = vsel %vm414, %v1353, %v1355
  %v1375 = vsel %vm414, %v1355, %v1357
  %v1376 = vsel %vm414, %v1357, %v1359
  %v1377 = vsel %vm414, %v1359, %v1361
  %v1378 = vsel %vm414, %v1361, %v1363
  %v1379 = vsel %vm414, %v1363, %v1365
  %v1380 = vsel %vm414, %v1365, %v1367
  %v1381 = vsel %vm414, %v1367, %v1369
  %v1382 = vsel %vm414, %v1369, %v1371
  %v1383 = vsel %vm414, %v1371, %v1373
  %v1394 = vld [vmem:[%s5] sm:$0xff]
  %v1396 = vsel %vm437, %v1394, 0
  %1398 = vmatprep.subr.mxu0 0.0
  %1399 = vmatpush1.msra.mxu0 0.0
  %1400 = vmatprep.subr.mxu0 0.0
  %1401 = vmatpush1.msra.mxu0 0.0
  %1402 = vmatprep.subr.mxu0 0.0
  %1403 = vmatpush1.msra.mxu0 0.0
  %1404 = vmatprep.subr.mxu0 0.0
  %1405 = vmatpush1.msra.mxu0 0.0
  %1406 = vmatprep.subr.mxu0 0.0
  %1407 = vmatpush1.msra.mxu0 0.0
  %1408 = vmatprep.subr.mxu0 0.0
  %1409 = vmatpush1.msra.mxu0 0.0
  %1410 = vmatprep.subr.mxu0 0.0
  %1411 = vmatpush1.msra.mxu0 0.0
  %1412 = vmatprep.subr.mxu0 %v1375
  %1413 = vmatpush1.msra.mxu0 %v1374
  %1414 = vmatprep.subr.mxu0 %v1333
  %1415 = vmatpush1.msra.mxu0 %v1332
  %1416 = vmatprep.subr.mxu0 %v1291
  %1417 = vmatpush1.msra.mxu0 %v1290
  %1418 = vmatprep.subr.mxu0 %v1249
  %1419 = vmatpush1.msra.mxu0 %v1248
  %1420 = vmatprep.subr.mxu0 %v1210
  %1421 = vmatpush1.msra.mxu0 %v1209
  %1422 = vmatprep.subr.mxu0 %v1171
  %1423 = vmatpush1.msra.mxu0 %v1170
  %1424 = vmatprep.subr.mxu0 %v1132
  %1425 = vmatpush1.msra.mxu0 %v1131
  %1426 = vmatprep.subr.mxu0 %v1093
  %1427 = vmatpush1.msra.mxu0 %v1092
  %1428 = vmatprep.subr.mxu0 %v1052
  %1429 = vmatpush1.msra.mxu0 %v1051
  %1430 = vmatprep.subr.mxu0 0.0
  %1431 = vmatpush2.msra.mxu0 0.0
  %1432 = vmatprep.subr.mxu0 0.0
  %1433 = vmatpush2.msra.mxu0 0.0
  %1434 = vmatprep.subr.mxu0 0.0
  %1435 = vmatpush2.msra.mxu0 0.0
  %1436 = vmatprep.subr.mxu0 0.0
  %1437 = vmatpush2.msra.mxu0 0.0
  %1438 = vmatprep.subr.mxu0 0.0
  %1439 = vmatpush2.msra.mxu0 0.0
  %1440 = vmatprep.subr.mxu0 0.0
  %1441 = vmatpush2.msra.mxu0 0.0
  %1442 = vmatprep.subr.mxu0 0.0
  %1443 = vmatpush2.msra.mxu0 0.0
  %1444 = vmatprep.subr.mxu0 0.0
  %1445 = vmatpush2.msra.mxu0 0.0
  %1446 = vmatprep.subr.mxu0 0.0
  %1447 = vmatpush2.msra.mxu0 0.0
  %1448 = vmatprep.subr.mxu0 0.0
  %1449 = vmatpush2.msra.mxu0 0.0
  %1450 = vmatprep.subr.mxu0 0.0
  %1451 = vmatpush2.msra.mxu0 0.0
  %1452 = vmatprep.subr.mxu0 0.0
  %1453 = vmatpush2.msra.mxu0 0.0
  %1454 = vmatprep.subr.mxu0 0.0
  %1455 = vmatpush2.msra.mxu0 0.0
  %1456 = vmatprep.subr.mxu0 0.0
  %1457 = vmatpush2.msra.mxu0 0.0
  %1458 = vmatprep.subr.mxu0 0.0
  %1459 = vmatpush2.msra.mxu0 0.0
  %1460 = vmatprep.subr.mxu0 0.0
  %1461 = vmatpush2.msra.mxu0 0.0
  %1462 = vmatprep.mubr.f32.mxu0 0.0
  %1463 = vmatmul.mubr.f32.gmra.mxu0 %v1396
  %v1464 = vpop.f32.mrf.mxu0
  %v1465 = vadd.f32 0.0, %v1464
  %v1466 = vpop.f32.mrf.mxu0
  %v1467 = vadd.f32 0.0, %v1466
  %1468 = vdwg.mxu0
  %1469 = vmatprep.subr.mxu0 0.0
  %1470 = vmatpush1.msra.mxu0 0.0
  %1471 = vmatprep.subr.mxu0 0.0
  %1472 = vmatpush1.msra.mxu0 0.0
  %1473 = vmatprep.subr.mxu0 0.0
  %1474 = vmatpush1.msra.mxu0 0.0
  %1475 = vmatprep.subr.mxu0 0.0
  %1476 = vmatpush1.msra.mxu0 0.0
  %1477 = vmatprep.subr.mxu0 0.0
  %1478 = vmatpush1.msra.mxu0 0.0
  %1479 = vmatprep.subr.mxu0 0.0
  %1480 = vmatpush1.msra.mxu0 0.0
  %1481 = vmatprep.subr.mxu0 0.0
  %1482 = vmatpush1.msra.mxu0 0.0
  %1483 = vmatprep.subr.mxu0 %v1377
  %1484 = vmatpush1.msra.mxu0 %v1376
  %1485 = vmatprep.subr.mxu0 %v1335
  %1486 = vmatpush1.msra.mxu0 %v1334
  %1487 = vmatprep.subr.mxu0 %v1293
  %1488 = vmatpush1.msra.mxu0 %v1292
  %1489 = vmatprep.subr.mxu0 %v1251
  %1490 = vmatpush1.msra.mxu0 %v1250
  %1491 = vmatprep.subr.mxu0 %v1212
  %1492 = vmatpush1.msra.mxu0 %v1211
  %1493 = vmatprep.subr.mxu0 %v1173
  %1494 = vmatpush1.msra.mxu0 %v1172
  %1495 = vmatprep.subr.mxu0 %v1134
  %1496 = vmatpush1.msra.mxu0 %v1133
  %1497 = vmatprep.subr.mxu0 %v1095
  %1498 = vmatpush1.msra.mxu0 %v1094
  %1499 = vmatprep.subr.mxu0 %v1054
  %1500 = vmatpush1.msra.mxu0 %v1053
  %1501 = vmatprep.subr.mxu0 0.0
  %1502 = vmatpush2.msra.mxu0 0.0
  %1503 = vmatprep.subr.mxu0 0.0
  %1504 = vmatpush2.msra.mxu0 0.0
  %1505 = vmatprep.subr.mxu0 0.0
  %1506 = vmatpush2.msra.mxu0 0.0
  %1507 = vmatprep.subr.mxu0 0.0
  %1508 = vmatpush2.msra.mxu0 0.0
  %1509 = vmatprep.subr.mxu0 0.0
  %1510 = vmatpush2.msra.mxu0 0.0
  %1511 = vmatprep.subr.mxu0 0.0
  %1512 = vmatpush2.msra.mxu0 0.0
  %1513 = vmatprep.subr.mxu0 0.0
  %1514 = vmatpush2.msra.mxu0 0.0
  %1515 = vmatprep.subr.mxu0 0.0
  %1516 = vmatpush2.msra.mxu0 0.0
  %1517 = vmatprep.subr.mxu0 0.0
  %1518 = vmatpush2.msra.mxu0 0.0
  %1519 = vmatprep.subr.mxu0 0.0
  %1520 = vmatpush2.msra.mxu0 0.0
  %1521 = vmatprep.subr.mxu0 0.0
  %1522 = vmatpush2.msra.mxu0 0.0
  %1523 = vmatprep.subr.mxu0 0.0
  %1524 = vmatpush2.msra.mxu0 0.0
  %1525 = vmatprep.subr.mxu0 0.0
  %1526 = vmatpush2.msra.mxu0 0.0
  %1527 = vmatprep.subr.mxu0 0.0
  %1528 = vmatpush2.msra.mxu0 0.0
  %1529 = vmatprep.subr.mxu0 0.0
  %1530 = vmatpush2.msra.mxu0 0.0
  %1531 = vmatprep.subr.mxu0 0.0
  %1532 = vmatpush2.msra.mxu0 0.0
  %1533 = vmatprep.mubr.f32.mxu0 0.0
  %1534 = vmatmul.mubr.f32.gmra.mxu0 %v1396
  %v1535 = vpop.f32.mrf.mxu0
  %v1536 = vadd.f32 0.0, %v1535
  %v1537 = vpop.f32.mrf.mxu0
  %v1538 = vadd.f32 0.0, %v1537
  %1539 = vdwg.mxu0
  %1540 = vmatprep.subr.mxu0 0.0
  %1541 = vmatpush1.msra.mxu0 0.0
  %1542 = vmatprep.subr.mxu0 0.0
  %1543 = vmatpush1.msra.mxu0 0.0
  %1544 = vmatprep.subr.mxu0 0.0
  %1545 = vmatpush1.msra.mxu0 0.0
  %1546 = vmatprep.subr.mxu0 0.0
  %1547 = vmatpush1.msra.mxu0 0.0
  %1548 = vmatprep.subr.mxu0 0.0
  %1549 = vmatpush1.msra.mxu0 0.0
  %1550 = vmatprep.subr.mxu0 0.0
  %1551 = vmatpush1.msra.mxu0 0.0
  %1552 = vmatprep.subr.mxu0 0.0
  %1553 = vmatpush1.msra.mxu0 0.0
  %1554 = vmatprep.subr.mxu0 %v1379
  %1555 = vmatpush1.msra.mxu0 %v1378
  %1556 = vmatprep.subr.mxu0 %v1337
  %1557 = vmatpush1.msra.mxu0 %v1336
  %1558 = vmatprep.subr.mxu0 %v1295
  %1559 = vmatpush1.msra.mxu0 %v1294
  %1560 = vmatprep.subr.mxu0 %v1253
  %1561 = vmatpush1.msra.mxu0 %v1252
  %1562 = vmatprep.subr.mxu0 %v1214
  %1563 = vmatpush1.msra.mxu0 %v1213
  %1564 = vmatprep.subr.mxu0 %v1175
  %1565 = vmatpush1.msra.mxu0 %v1174
  %1566 = vmatprep.subr.mxu0 %v1136
  %1567 = vmatpush1.msra.mxu0 %v1135
  %1568 = vmatprep.subr.mxu0 %v1097
  %1569 = vmatpush1.msra.mxu0 %v1096
  %1570 = vmatprep.subr.mxu0 %v1056
  %1571 = vmatpush1.msra.mxu0 %v1055
  %1572 = vmatprep.subr.mxu0 0.0
  %1573 = vmatpush2.msra.mxu0 0.0
  %1574 = vmatprep.subr.mxu0 0.0
  %1575 = vmatpush2.msra.mxu0 0.0
  %1576 = vmatprep.subr.mxu0 0.0
  %1577 = vmatpush2.msra.mxu0 0.0
  %1578 = vmatprep.subr.mxu0 0.0
  %1579 = vmatpush2.msra.mxu0 0.0
  %1580 = vmatprep.subr.mxu0 0.0
  %1581 = vmatpush2.msra.mxu0 0.0
  %1582 = vmatprep.subr.mxu0 0.0
  %1583 = vmatpush2.msra.mxu0 0.0
  %1584 = vmatprep.subr.mxu0 0.0
  %1585 = vmatpush2.msra.mxu0 0.0
  %1586 = vmatprep.subr.mxu0 0.0
  %1587 = vmatpush2.msra.mxu0 0.0
  %1588 = vmatprep.subr.mxu0 0.0
  %1589 = vmatpush2.msra.mxu0 0.0
  %1590 = vmatprep.subr.mxu0 0.0
  %1591 = vmatpush2.msra.mxu0 0.0
  %1592 = vmatprep.subr.mxu0 0.0
  %1593 = vmatpush2.msra.mxu0 0.0
  %1594 = vmatprep.subr.mxu0 0.0
  %1595 = vmatpush2.msra.mxu0 0.0
  %1596 = vmatprep.subr.mxu0 0.0
  %1597 = vmatpush2.msra.mxu0 0.0
  %1598 = vmatprep.subr.mxu0 0.0
  %1599 = vmatpush2.msra.mxu0 0.0
  %1600 = vmatprep.subr.mxu0 0.0
  %1601 = vmatpush2.msra.mxu0 0.0
  %1602 = vmatprep.subr.mxu0 0.0
  %1603 = vmatpush2.msra.mxu0 0.0
  %1604 = vmatprep.mubr.f32.mxu0 0.0
  %1605 = vmatmul.mubr.f32.gmra.mxu0 %v1396
  %v1606 = vpop.f32.mrf.mxu0
  %v1607 = vadd.f32 0.0, %v1606
  %v1608 = vpop.f32.mrf.mxu0
  %v1609 = vadd.f32 0.0, %v1608
  %1610 = vdwg.mxu0
  %1611 = vmatprep.subr.mxu0 0.0
  %1612 = vmatpush1.msra.mxu0 0.0
  %1613 = vmatprep.subr.mxu0 0.0
  %1614 = vmatpush1.msra.mxu0 0.0
  %1615 = vmatprep.subr.mxu0 0.0
  %1616 = vmatpush1.msra.mxu0 0.0
  %1617 = vmatprep.subr.mxu0 0.0
  %1618 = vmatpush1.msra.mxu0 0.0
  %1619 = vmatprep.subr.mxu0 0.0
  %1620 = vmatpush1.msra.mxu0 0.0
  %1621 = vmatprep.subr.mxu0 0.0
  %1622 = vmatpush1.msra.mxu0 0.0
  %1623 = vmatprep.subr.mxu0 0.0
  %1624 = vmatpush1.msra.mxu0 0.0
  %1625 = vmatprep.subr.mxu0 %v1381
  %1626 = vmatpush1.msra.mxu0 %v1380
  %1627 = vmatprep.subr.mxu0 %v1339
  %1628 = vmatpush1.msra.mxu0 %v1338
  %1629 = vmatprep.subr.mxu0 %v1297
  %1630 = vmatpush1.msra.mxu0 %v1296
  %1631 = vmatprep.subr.mxu0 %v1255
  %1632 = vmatpush1.msra.mxu0 %v1254
  %1633 = vmatprep.subr.mxu0 %v1216
  %1634 = vmatpush1.msra.mxu0 %v1215
  %1635 = vmatprep.subr.mxu0 %v1177
  %1636 = vmatpush1.msra.mxu0 %v1176
  %1637 = vmatprep.subr.mxu0 %v1138
  %1638 = vmatpush1.msra.mxu0 %v1137
  %1639 = vmatprep.subr.mxu0 %v1099
  %1640 = vmatpush1.msra.mxu0 %v1098
  %1641 = vmatprep.subr.mxu0 %v1058
  %1642 = vmatpush1.msra.mxu0 %v1057
  %1643 = vmatprep.subr.mxu0 0.0
  %1644 = vmatpush2.msra.mxu0 0.0
  %1645 = vmatprep.subr.mxu0 0.0
  %1646 = vmatpush2.msra.mxu0 0.0
  %1647 = vmatprep.subr.mxu0 0.0
  %1648 = vmatpush2.msra.mxu0 0.0
  %1649 = vmatprep.subr.mxu0 0.0
  %1650 = vmatpush2.msra.mxu0 0.0
  %1651 = vmatprep.subr.mxu0 0.0
  %1652 = vmatpush2.msra.mxu0 0.0
  %1653 = vmatprep.subr.mxu0 0.0
  %1654 = vmatpush2.msra.mxu0 0.0
  %1655 = vmatprep.subr.mxu0 0.0
  %1656 = vmatpush2.msra.mxu0 0.0
  %1657 = vmatprep.subr.mxu0 0.0
  %1658 = vmatpush2.msra.mxu0 0.0
  %1659 = vmatprep.subr.mxu0 0.0
  %1660 = vmatpush2.msra.mxu0 0.0
  %1661 = vmatprep.subr.mxu0 0.0
  %1662 = vmatpush2.msra.mxu0 0.0
  %1663 = vmatprep.subr.mxu0 0.0
  %1664 = vmatpush2.msra.mxu0 0.0
  %1665 = vmatprep.subr.mxu0 0.0
  %1666 = vmatpush2.msra.mxu0 0.0
  %1667 = vmatprep.subr.mxu0 0.0
  %1668 = vmatpush2.msra.mxu0 0.0
  %1669 = vmatprep.subr.mxu0 0.0
  %1670 = vmatpush2.msra.mxu0 0.0
  %1671 = vmatprep.subr.mxu0 0.0
  %1672 = vmatpush2.msra.mxu0 0.0
  %1673 = vmatprep.subr.mxu0 0.0
  %1674 = vmatpush2.msra.mxu0 0.0
  %1675 = vmatprep.mubr.f32.mxu0 0.0
  %1676 = vmatmul.mubr.f32.gmra.mxu0 %v1396
  %v1677 = vpop.f32.mrf.mxu0
  %v1678 = vadd.f32 0.0, %v1677
  %v1679 = vpop.f32.mrf.mxu0
  %v1680 = vadd.f32 0.0, %v1679
  %1681 = vdwg.mxu0
  %1682 = vmatprep.subr.mxu0 0.0
  %1683 = vmatpush1.msra.mxu0 0.0
  %1684 = vmatprep.subr.mxu0 0.0
  %1685 = vmatpush1.msra.mxu0 0.0
  %1686 = vmatprep.subr.mxu0 0.0
  %1687 = vmatpush1.msra.mxu0 0.0
  %1688 = vmatprep.subr.mxu0 0.0
  %1689 = vmatpush1.msra.mxu0 0.0
  %1690 = vmatprep.subr.mxu0 0.0
  %1691 = vmatpush1.msra.mxu0 0.0
  %1692 = vmatprep.subr.mxu0 0.0
  %1693 = vmatpush1.msra.mxu0 0.0
  %1694 = vmatprep.subr.mxu0 0.0
  %1695 = vmatpush1.msra.mxu0 0.0
  %1696 = vmatprep.subr.mxu0 %v1383
  %1697 = vmatpush1.msra.mxu0 %v1382
  %1698 = vmatprep.subr.mxu0 %v1341
  %1699 = vmatpush1.msra.mxu0 %v1340
  %1700 = vmatprep.subr.mxu0 %v1299
  %1701 = vmatpush1.msra.mxu0 %v1298
  %1702 = vmatprep.subr.mxu0 %v1247
  %1703 = vmatpush1.msra.mxu0 %v1256
  %1704 = vmatprep.subr.mxu0 %v1208
  %1705 = vmatpush1.msra.mxu0 %v1217
  %1706 = vmatprep.subr.mxu0 %v1169
  %1707 = vmatpush1.msra.mxu0 %v1178
  %1708 = vmatprep.subr.mxu0 %v1130
  %1709 = vmatpush1.msra.mxu0 %v1139
  %1710 = vmatprep.subr.mxu0 %v1091
  %1711 = vmatpush1.msra.mxu0 %v1100
  %1712 = vmatprep.subr.mxu0 %v1060
  %1713 = vmatpush1.msra.mxu0 %v1059
  %1714 = vmatprep.subr.mxu0 0.0
  %1715 = vmatpush2.msra.mxu0 0.0
  %1716 = vmatprep.subr.mxu0 0.0
  %1717 = vmatpush2.msra.mxu0 0.0
  %1718 = vmatprep.subr.mxu0 0.0
  %1719 = vmatpush2.msra.mxu0 0.0
  %1720 = vmatprep.subr.mxu0 0.0
  %1721 = vmatpush2.msra.mxu0 0.0
  %1722 = vmatprep.subr.mxu0 0.0
  %1723 = vmatpush2.msra.mxu0 0.0
  %1724 = vmatprep.subr.mxu0 0.0
  %1725 = vmatpush2.msra.mxu0 0.0
  %1726 = vmatprep.subr.mxu0 0.0
  %1727 = vmatpush2.msra.mxu0 0.0
  %1728 = vmatprep.subr.mxu0 0.0
  %1729 = vmatpush2.msra.mxu0 0.0
  %1730 = vmatprep.subr.mxu0 0.0
  %1731 = vmatpush2.msra.mxu0 0.0
  %1732 = vmatprep.subr.mxu0 0.0
  %1733 = vmatpush2.msra.mxu0 0.0
  %1734 = vmatprep.subr.mxu0 0.0
  %1735 = vmatpush2.msra.mxu0 0.0
  %1736 = vmatprep.subr.mxu0 0.0
  %1737 = vmatpush2.msra.mxu0 0.0
  %1738 = vmatprep.subr.mxu0 0.0
  %1739 = vmatpush2.msra.mxu0 0.0
  %1740 = vmatprep.subr.mxu0 0.0
  %1741 = vmatpush2.msra.mxu0 0.0
  %1742 = vmatprep.subr.mxu0 0.0
  %1743 = vmatpush2.msra.mxu0 0.0
  %1744 = vmatprep.subr.mxu0 0.0
  %1745 = vmatpush2.msra.mxu0 0.0
  %1746 = vmatprep.mubr.f32.mxu0 0.0
  %1747 = vmatmul.mubr.f32.gmra.mxu0 %v1396
  %v1748 = vpop.f32.mrf.mxu0
  %v1749 = vadd.f32 0.0, %v1748
  %v1750 = vpop.f32.mrf.mxu0
  %v1751 = vadd.f32 0.0, %v1750
  %1752 = vdwg.mxu0
  %v1753 = vld [vmem:[%s8] sm:$0xff]
  %v1754 = vld [vmem:[%s8 + $0x8] sm:$0x3]
  %v1757 = vlaneseq
  %v1758 = vshrl.u32 %v1757, 7
  %v1759 = vsub.s32 0, %v1758
  %v1760 = vrot.slane %v1753, %v1759
  %v1761 = vlaneseq
  %v1762 = vshrl.u32 %v1761, 7
  %v1763 = vsub.s32 1, %v1762
  %v1764 = vrot.slane %v1753, %v1763
  %v1765 = vlaneseq
  %v1766 = vshrl.u32 %v1765, 7
  %v1767 = vsub.s32 2, %v1766
  %v1768 = vrot.slane %v1753, %v1767
  %v1769 = vlaneseq
  %v1770 = vshrl.u32 %v1769, 7
  %v1771 = vsub.s32 3, %v1770
  %v1772 = vrot.slane %v1753, %v1771
  %v1773 = vlaneseq
  %v1774 = vshrl.u32 %v1773, 7
  %v1775 = vsub.s32 4, %v1774
  %v1776 = vrot.slane %v1753, %v1775
  %v1777 = vlaneseq
  %v1778 = vshrl.u32 %v1777, 7
  %v1779 = vsub.s32 5, %v1778
  %v1780 = vrot.slane %v1753, %v1779
  %v1781 = vlaneseq
  %v1782 = vshrl.u32 %v1781, 7
  %v1783 = vsub.s32 6, %v1782
  %v1784 = vrot.slane %v1753, %v1783
  %v1785 = vlaneseq
  %v1786 = vshrl.u32 %v1785, 7
  %v1787 = vsub.s32 7, %v1786
  %v1788 = vrot.slane %v1753, %v1787
  %v1789 = vlaneseq
  %v1790 = vshrl.u32 %v1789, 7
  %v1791 = vsub.s32 0, %v1790
  %v1792 = vrot.slane %v1754, %v1791
  %v1793 = vlaneseq
  %v1794 = vshrl.u32 %v1793, 7
  %v1795 = vsub.s32 1, %v1794
  %v1796 = vrot.slane %v1754, %v1795
  %v1807 = vmul.f32 %v1465, %v1760
  %v1808 = vmul.f32 %v1467, %v1764
  %v1809 = vmul.f32 %v1536, %v1768
  %v1810 = vmul.f32 %v1538, %v1772
  %v1811 = vmul.f32 %v1607, %v1776
  %v1812 = vmul.f32 %v1609, %v1780
  %v1813 = vmul.f32 %v1678, %v1784
  %v1814 = vmul.f32 %v1680, %v1788
  %v1815 = vmul.f32 %v1749, %v1792
  %v1816 = vmul.f32 %v1751, %v1796
  %v1817 = vadd.f32 %v1807, %v1808
  %v1818 = vadd.f32 %v1817, %v1809
  %v1819 = vadd.f32 %v1818, %v1810
  %v1820 = vadd.f32 %v1819, %v1811
  %v1821 = vadd.f32 %v1820, %v1812
  %v1822 = vadd.f32 %v1821, %v1813
  %v1823 = vadd.f32 %v1822, %v1814
  %v1824 = vadd.f32 %v1823, %v1815
  %vm1825 = vcmask 752640
  %v1826 = vsel %vm1825, %v1816, 0.0
  %v1827 = vadd.f32 %v1824, %v1826
  %1828 = vadd.xlane.f32.xlu0 %v1827
  %v1829 = vpop.xlane.xlu0 %1828
  %v1830 = vmul.f32 %v1829, 0.0010330578
  %v1831 = vmul.f32 %v1807, %v1465
  %v1832 = vmul.f32 %v1808, %v1467
  %v1833 = vmul.f32 %v1809, %v1536
  %v1834 = vmul.f32 %v1810, %v1538
  %v1835 = vmul.f32 %v1811, %v1607
  %v1836 = vmul.f32 %v1812, %v1609
  %v1837 = vmul.f32 %v1813, %v1678
  %v1838 = vmul.f32 %v1814, %v1680
  %v1839 = vmul.f32 %v1815, %v1749
  %v1840 = vmul.f32 %v1816, %v1751
  %v1841 = vadd.f32 %v1831, %v1832
  %v1842 = vadd.f32 %v1841, %v1833
  %v1843 = vadd.f32 %v1842, %v1834
  %v1844 = vadd.f32 %v1843, %v1835
  %v1845 = vadd.f32 %v1844, %v1836
  %v1846 = vadd.f32 %v1845, %v1837
  %v1847 = vadd.f32 %v1846, %v1838
  %v1848 = vadd.f32 %v1847, %v1839
  %v1849 = vsel %vm1825, %v1840, 0.0
  %v1850 = vadd.f32 %v1848, %v1849
  %1851 = vadd.xlane.f32.xlu0 %v1850
  %v1852 = vpop.xlane.xlu0 %1851
  %v1853 = vmul.f32 %v1852, 0.0010330578
  %v1854 = vmul.f32 %v1830, %v1830
  %v1855 = vsub.f32 %v1853, %v1854
  %v1856 = vmax.f32 %v1855, 0.0
  %v1857 = vld [vmem:[%s6] sm:$0xff]
  %v1858 = vadd.f32 %v1856, 1e-05
  %v1859 = vrsqrt.pop %v1858
  %v1860 = vmul.f32 %v1857, %v1859
  %v1861 = vld [vmem:[%s7] sm:$0xff]
  %v1862 = vmul.f32 %v1830, %v1860
  %v1863 = vsub.f32 %v1861, %v1862
  %1865 = vset.pattern.permute.xlu0 0
  %1866 = vperm.xlu0 %1865, %v1860
  %v1867 = vpop.permute.xlu0 %1866
  %v1869 = vmul.f32 %v1465, %v1867
  %v1870 = vmul.f32 %v1467, %v1867
  %v1871 = vmul.f32 %v1536, %v1867
  %v1872 = vmul.f32 %v1538, %v1867
  %v1873 = vmul.f32 %v1607, %v1867
  %v1874 = vmul.f32 %v1609, %v1867
  %v1875 = vmul.f32 %v1678, %v1867
  %v1876 = vmul.f32 %v1680, %v1867
  %v1877 = vmul.f32 %v1749, %v1867
  %v1878 = vmul.f32 %v1751, %v1867
  %1880 = vset.pattern.permute.xlu0 0
  %1881 = vperm.xlu0 %1880, %v1863
  %v1882 = vpop.permute.xlu0 %1881
  %v1884 = vadd.f32 %v1869, %v1882
  %v1885 = vadd.f32 %v1870, %v1882
  %v1886 = vadd.f32 %v1871, %v1882
  %v1887 = vadd.f32 %v1872, %v1882
  %v1888 = vadd.f32 %v1873, %v1882
  %v1889 = vadd.f32 %v1874, %v1882
  %v1890 = vadd.f32 %v1875, %v1882
  %v1891 = vadd.f32 %v1876, %v1882
  %v1892 = vadd.f32 %v1877, %v1882
  %v1893 = vadd.f32 %v1878, %v1882
  %vm1894 = vcmp.ge.f32.partialorder %v1884, 0.0
  %vm1895 = vcmp.ge.f32.partialorder %v1885, 0.0
  %vm1896 = vcmp.ge.f32.partialorder %v1886, 0.0
  %vm1897 = vcmp.ge.f32.partialorder %v1887, 0.0
  %vm1898 = vcmp.ge.f32.partialorder %v1888, 0.0
  %vm1899 = vcmp.ge.f32.partialorder %v1889, 0.0
  %vm1900 = vcmp.ge.f32.partialorder %v1890, 0.0
  %vm1901 = vcmp.ge.f32.partialorder %v1891, 0.0
  %vm1902 = vcmp.ge.f32.partialorder %v1892, 0.0
  %vm1903 = vcmp.ge.f32.partialorder %v1893, 0.0
  %v1904 = vmul.f32 %v1884, 0.2
  %v1905 = vmul.f32 %v1885, 0.2
  %v1906 = vmul.f32 %v1886, 0.2
  %v1907 = vmul.f32 %v1887, 0.2
  %v1908 = vmul.f32 %v1888, 0.2
  %v1909 = vmul.f32 %v1889, 0.2
  %v1910 = vmul.f32 %v1890, 0.2
  %v1911 = vmul.f32 %v1891, 0.2
  %v1912 = vmul.f32 %v1892, 0.2
  %v1913 = vmul.f32 %v1893, 0.2
  %v1914 = vsel %vm1894, %v1884, %v1904
  %v1915 = vsel %vm1895, %v1885, %v1905
  %v1916 = vsel %vm1896, %v1886, %v1906
  %v1917 = vsel %vm1897, %v1887, %v1907
  %v1918 = vsel %vm1898, %v1888, %v1908
  %v1919 = vsel %vm1899, %v1889, %v1909
  %v1920 = vsel %vm1900, %v1890, %v1910
  %v1921 = vsel %vm1901, %v1891, %v1911
  %v1922 = vsel %vm1902, %v1892, %v1912
  %v1923 = vsel %vm1903, %v1893, %v1913
  %v1924 = vmul.f32 %v1914, %v1760
  %v1925 = vmul.f32 %v1915, %v1764
  %v1926 = vmul.f32 %v1916, %v1768
  %v1927 = vmul.f32 %v1917, %v1772
  %v1928 = vmul.f32 %v1918, %v1776
  %v1929 = vmul.f32 %v1919, %v1780
  %v1930 = vmul.f32 %v1920, %v1784
  %v1931 = vmul.f32 %v1921, %v1788
  %v1932 = vmul.f32 %v1922, %v1792
  %v1933 = vmul.f32 %v1923, %v1796
  %1944 = vrot.lane.b32.xlu0 %v1924, 127
  %v1945 = vpop.permute.xlu0 %1944
  %1946 = vrot.lane.b32.xlu0 %v1925, 127
  %v1947 = vpop.permute.xlu0 %1946
  %1948 = vrot.lane.b32.xlu0 %v1926, 127
  %v1949 = vpop.permute.xlu0 %1948
  %1950 = vrot.lane.b32.xlu0 %v1927, 127
  %v1951 = vpop.permute.xlu0 %1950
  %1952 = vrot.lane.b32.xlu0 %v1928, 127
  %v1953 = vpop.permute.xlu0 %1952
  %1954 = vrot.lane.b32.xlu0 %v1929, 127
  %v1955 = vpop.permute.xlu0 %1954
  %1956 = vrot.lane.b32.xlu0 %v1930, 127
  %v1957 = vpop.permute.xlu0 %1956
  %1958 = vrot.lane.b32.xlu0 %v1931, 127
  %v1959 = vpop.permute.xlu0 %1958
  %1960 = vrot.lane.b32.xlu0 %v1932, 127
  %v1961 = vpop.permute.xlu0 %1960
  %1962 = vrot.lane.b32.xlu0 %v1933, 127
  %v1963 = vpop.permute.xlu0 %1962
  %v1964 = vsel %vm106, %v1945, %v1947
  %v1965 = vsel %vm106, %v1947, %v1949
  %v1966 = vsel %vm106, %v1949, %v1951
  %v1967 = vsel %vm106, %v1951, %v1953
  %v1968 = vsel %vm106, %v1953, %v1955
  %v1969 = vsel %vm106, %v1955, %v1957
  %v1970 = vsel %vm106, %v1957, %v1959
  %v1971 = vsel %vm106, %v1959, %v1961
  %v1972 = vsel %vm106, %v1961, %v1963
  %1983 = vrot.lane.b32.xlu0 %v1924, 126
  %v1984 = vpop.permute.xlu0 %1983
  %1985 = vrot.lane.b32.xlu0 %v1925, 126
  %v1986 = vpop.permute.xlu0 %1985
  %1987 = vrot.lane.b32.xlu0 %v1926, 126
  %v1988 = vpop.permute.xlu0 %1987
  %1989 = vrot.lane.b32.xlu0 %v1927, 126
  %v1990 = vpop.permute.xlu0 %1989
  %1991 = vrot.lane.b32.xlu0 %v1928, 126
  %v1992 = vpop.permute.xlu0 %1991
  %1993 = vrot.lane.b32.xlu0 %v1929, 126
  %v1994 = vpop.permute.xlu0 %1993
  %1995 = vrot.lane.b32.xlu0 %v1930, 126
  %v1996 = vpop.permute.xlu0 %1995
  %1997 = vrot.lane.b32.xlu0 %v1931, 126
  %v1998 = vpop.permute.xlu0 %1997
  %1999 = vrot.lane.b32.xlu0 %v1932, 126
  %v2000 = vpop.permute.xlu0 %1999
  %2001 = vrot.lane.b32.xlu0 %v1933, 126
  %v2002 = vpop.permute.xlu0 %2001
  %v2003 = vsel %vm150, %v1984, %v1986
  %v2004 = vsel %vm150, %v1986, %v1988
  %v2005 = vsel %vm150, %v1988, %v1990
  %v2006 = vsel %vm150, %v1990, %v1992
  %v2007 = vsel %vm150, %v1992, %v1994
  %v2008 = vsel %vm150, %v1994, %v1996
  %v2009 = vsel %vm150, %v1996, %v1998
  %v2010 = vsel %vm150, %v1998, %v2000
  %v2011 = vsel %vm150, %v2000, %v2002
  %2022 = vrot.lane.b32.xlu0 %v1924, 102
  %v2023 = vpop.permute.xlu0 %2022
  %2024 = vrot.lane.b32.xlu0 %v1925, 102
  %v2025 = vpop.permute.xlu0 %2024
  %2026 = vrot.lane.b32.xlu0 %v1926, 102
  %v2027 = vpop.permute.xlu0 %2026
  %2028 = vrot.lane.b32.xlu0 %v1927, 102
  %v2029 = vpop.permute.xlu0 %2028
  %2030 = vrot.lane.b32.xlu0 %v1928, 102
  %v2031 = vpop.permute.xlu0 %2030
  %2032 = vrot.lane.b32.xlu0 %v1929, 102
  %v2033 = vpop.permute.xlu0 %2032
  %2034 = vrot.lane.b32.xlu0 %v1930, 102
  %v2035 = vpop.permute.xlu0 %2034
  %2036 = vrot.lane.b32.xlu0 %v1931, 102
  %v2037 = vpop.permute.xlu0 %2036
  %2038 = vrot.lane.b32.xlu0 %v1932, 102
  %v2039 = vpop.permute.xlu0 %2038
  %2040 = vrot.lane.b32.xlu0 %v1933, 102
  %v2041 = vpop.permute.xlu0 %2040
  %v2042 = vsel %vm194, %v2023, %v2025
  %v2043 = vsel %vm194, %v2025, %v2027
  %v2044 = vsel %vm194, %v2027, %v2029
  %v2045 = vsel %vm194, %v2029, %v2031
  %v2046 = vsel %vm194, %v2031, %v2033
  %v2047 = vsel %vm194, %v2033, %v2035
  %v2048 = vsel %vm194, %v2035, %v2037
  %v2049 = vsel %vm194, %v2037, %v2039
  %v2050 = vsel %vm194, %v2039, %v2041
  %2061 = vrot.lane.b32.xlu0 %v1924, 101
  %v2062 = vpop.permute.xlu0 %2061
  %2063 = vrot.lane.b32.xlu0 %v1925, 101
  %v2064 = vpop.permute.xlu0 %2063
  %2065 = vrot.lane.b32.xlu0 %v1926, 101
  %v2066 = vpop.permute.xlu0 %2065
  %2067 = vrot.lane.b32.xlu0 %v1927, 101
  %v2068 = vpop.permute.xlu0 %2067
  %2069 = vrot.lane.b32.xlu0 %v1928, 101
  %v2070 = vpop.permute.xlu0 %2069
  %2071 = vrot.lane.b32.xlu0 %v1929, 101
  %v2072 = vpop.permute.xlu0 %2071
  %2073 = vrot.lane.b32.xlu0 %v1930, 101
  %v2074 = vpop.permute.xlu0 %2073
  %2075 = vrot.lane.b32.xlu0 %v1931, 101
  %v2076 = vpop.permute.xlu0 %2075
  %2077 = vrot.lane.b32.xlu0 %v1932, 101
  %v2078 = vpop.permute.xlu0 %2077
  %2079 = vrot.lane.b32.xlu0 %v1933, 101
  %v2080 = vpop.permute.xlu0 %2079
  %v2081 = vsel %vm238, %v2062, %v2064
  %v2082 = vsel %vm238, %v2064, %v2066
  %v2083 = vsel %vm238, %v2066, %v2068
  %v2084 = vsel %vm238, %v2068, %v2070
  %v2085 = vsel %vm238, %v2070, %v2072
  %v2086 = vsel %vm238, %v2072, %v2074
  %v2087 = vsel %vm238, %v2074, %v2076
  %v2088 = vsel %vm238, %v2076, %v2078
  %v2089 = vsel %vm238, %v2078, %v2080
  %2100 = vrot.lane.b32.xlu0 %v1924, 100
  %v2101 = vpop.permute.xlu0 %2100
  %2102 = vrot.lane.b32.xlu0 %v1925, 100
  %v2103 = vpop.permute.xlu0 %2102
  %2104 = vrot.lane.b32.xlu0 %v1926, 100
  %v2105 = vpop.permute.xlu0 %2104
  %2106 = vrot.lane.b32.xlu0 %v1927, 100
  %v2107 = vpop.permute.xlu0 %2106
  %2108 = vrot.lane.b32.xlu0 %v1928, 100
  %v2109 = vpop.permute.xlu0 %2108
  %2110 = vrot.lane.b32.xlu0 %v1929, 100
  %v2111 = vpop.permute.xlu0 %2110
  %2112 = vrot.lane.b32.xlu0 %v1930, 100
  %v2113 = vpop.permute.xlu0 %2112
  %2114 = vrot.lane.b32.xlu0 %v1931, 100
  %v2115 = vpop.permute.xlu0 %2114
  %2116 = vrot.lane.b32.xlu0 %v1932, 100
  %v2117 = vpop.permute.xlu0 %2116
  %2118 = vrot.lane.b32.xlu0 %v1933, 100
  %v2119 = vpop.permute.xlu0 %2118
  %v2120 = vsel %vm282, %v2101, %v2103
  %v2121 = vsel %vm282, %v2103, %v2105
  %v2122 = vsel %vm282, %v2105, %v2107
  %v2123 = vsel %vm282, %v2107, %v2109
  %v2124 = vsel %vm282, %v2109, %v2111
  %v2125 = vsel %vm282, %v2111, %v2113
  %v2126 = vsel %vm282, %v2113, %v2115
  %v2127 = vsel %vm282, %v2115, %v2117
  %v2128 = vsel %vm282, %v2117, %v2119
  %2139 = vrot.lane.b32.xlu0 %v1924, 76
  %v2140 = vpop.permute.xlu0 %2139
  %2141 = vrot.lane.b32.xlu0 %v1925, 76
  %v2142 = vpop.permute.xlu0 %2141
  %2143 = vrot.lane.b32.xlu0 %v1926, 76
  %v2144 = vpop.permute.xlu0 %2143
  %2145 = vrot.lane.b32.xlu0 %v1927, 76
  %v2146 = vpop.permute.xlu0 %2145
  %2147 = vrot.lane.b32.xlu0 %v1928, 76
  %v2148 = vpop.permute.xlu0 %2147
  %2149 = vrot.lane.b32.xlu0 %v1929, 76
  %v2150 = vpop.permute.xlu0 %2149
  %2151 = vrot.lane.b32.xlu0 %v1930, 76
  %v2152 = vpop.permute.xlu0 %2151
  %2153 = vrot.lane.b32.xlu0 %v1931, 76
  %v2154 = vpop.permute.xlu0 %2153
  %2155 = vrot.lane.b32.xlu0 %v1932, 76
  %v2156 = vpop.permute.xlu0 %2155
  %2157 = vrot.lane.b32.xlu0 %v1933, 76
  %v2158 = vpop.permute.xlu0 %2157
  %v2159 = vsel %vm326, %v2140, %v2142
  %v2160 = vsel %vm326, %v2142, %v2144
  %v2161 = vsel %vm326, %v2144, %v2146
  %v2162 = vsel %vm326, %v2146, %v2148
  %v2163 = vsel %vm326, %v2148, %v2150
  %v2164 = vsel %vm326, %v2150, %v2152
  %v2165 = vsel %vm326, %v2152, %v2154
  %v2166 = vsel %vm326, %v2154, %v2156
  %v2167 = vsel %vm326, %v2156, %v2158
  %2178 = vrot.lane.b32.xlu0 %v1924, 75
  %v2179 = vpop.permute.xlu0 %2178
  %2180 = vrot.lane.b32.xlu0 %v1925, 75
  %v2181 = vpop.permute.xlu0 %2180
  %2182 = vrot.lane.b32.xlu0 %v1926, 75
  %v2183 = vpop.permute.xlu0 %2182
  %2184 = vrot.lane.b32.xlu0 %v1927, 75
  %v2185 = vpop.permute.xlu0 %2184
  %2186 = vrot.lane.b32.xlu0 %v1928, 75
  %v2187 = vpop.permute.xlu0 %2186
  %2188 = vrot.lane.b32.xlu0 %v1929, 75
  %v2189 = vpop.permute.xlu0 %2188
  %2190 = vrot.lane.b32.xlu0 %v1930, 75
  %v2191 = vpop.permute.xlu0 %2190
  %2192 = vrot.lane.b32.xlu0 %v1931, 75
  %v2193 = vpop.permute.xlu0 %2192
  %2194 = vrot.lane.b32.xlu0 %v1932, 75
  %v2195 = vpop.permute.xlu0 %2194
  %2196 = vrot.lane.b32.xlu0 %v1933, 75
  %v2197 = vpop.permute.xlu0 %2196
  %v2198 = vsel %vm370, %v2179, %v2181
  %v2199 = vsel %vm370, %v2181, %v2183
  %v2200 = vsel %vm370, %v2183, %v2185
  %v2201 = vsel %vm370, %v2185, %v2187
  %v2202 = vsel %vm370, %v2187, %v2189
  %v2203 = vsel %vm370, %v2189, %v2191
  %v2204 = vsel %vm370, %v2191, %v2193
  %v2205 = vsel %vm370, %v2193, %v2195
  %v2206 = vsel %vm370, %v2195, %v2197
  %2217 = vrot.lane.b32.xlu0 %v1924, 74
  %v2218 = vpop.permute.xlu0 %2217
  %2219 = vrot.lane.b32.xlu0 %v1925, 74
  %v2220 = vpop.permute.xlu0 %2219
  %2221 = vrot.lane.b32.xlu0 %v1926, 74
  %v2222 = vpop.permute.xlu0 %2221
  %2223 = vrot.lane.b32.xlu0 %v1927, 74
  %v2224 = vpop.permute.xlu0 %2223
  %2225 = vrot.lane.b32.xlu0 %v1928, 74
  %v2226 = vpop.permute.xlu0 %2225
  %2227 = vrot.lane.b32.xlu0 %v1929, 74
  %v2228 = vpop.permute.xlu0 %2227
  %2229 = vrot.lane.b32.xlu0 %v1930, 74
  %v2230 = vpop.permute.xlu0 %2229
  %2231 = vrot.lane.b32.xlu0 %v1931, 74
  %v2232 = vpop.permute.xlu0 %2231
  %2233 = vrot.lane.b32.xlu0 %v1932, 74
  %v2234 = vpop.permute.xlu0 %2233
  %2235 = vrot.lane.b32.xlu0 %v1933, 74
  %v2236 = vpop.permute.xlu0 %2235
  %v2237 = vsel %vm414, %v2218, %v2220
  %v2238 = vsel %vm414, %v2220, %v2222
  %v2239 = vsel %vm414, %v2222, %v2224
  %v2240 = vsel %vm414, %v2224, %v2226
  %v2241 = vsel %vm414, %v2226, %v2228
  %v2242 = vsel %vm414, %v2228, %v2230
  %v2243 = vsel %vm414, %v2230, %v2232
  %v2244 = vsel %vm414, %v2232, %v2234
  %v2245 = vsel %vm414, %v2234, %v2236
  %v2256 = vld [vmem:[%s9] sm:$0xff]
  %v2258 = vsel %vm437, %v2256, 0
  %2260 = vmatprep.subr.mxu0 0.0
  %2261 = vmatpush1.msra.mxu0 0.0
  %2262 = vmatprep.subr.mxu0 0.0
  %2263 = vmatpush1.msra.mxu0 0.0
  %2264 = vmatprep.subr.mxu0 0.0
  %2265 = vmatpush1.msra.mxu0 0.0
  %2266 = vmatprep.subr.mxu0 0.0
  %2267 = vmatpush1.msra.mxu0 0.0
  %2268 = vmatprep.subr.mxu0 0.0
  %2269 = vmatpush1.msra.mxu0 0.0
  %2270 = vmatprep.subr.mxu0 0.0
  %2271 = vmatpush1.msra.mxu0 0.0
  %2272 = vmatprep.subr.mxu0 0.0
  %2273 = vmatpush1.msra.mxu0 0.0
  %2274 = vmatprep.subr.mxu0 %v2238
  %2275 = vmatpush1.msra.mxu0 %v2237
  %2276 = vmatprep.subr.mxu0 %v2199
  %2277 = vmatpush1.msra.mxu0 %v2198
  %2278 = vmatprep.subr.mxu0 %v2160
  %2279 = vmatpush1.msra.mxu0 %v2159
  %2280 = vmatprep.subr.mxu0 %v2121
  %2281 = vmatpush1.msra.mxu0 %v2120
  %2282 = vmatprep.subr.mxu0 %v2082
  %2283 = vmatpush1.msra.mxu0 %v2081
  %2284 = vmatprep.subr.mxu0 %v2043
  %2285 = vmatpush1.msra.mxu0 %v2042
  %2286 = vmatprep.subr.mxu0 %v2004
  %2287 = vmatpush1.msra.mxu0 %v2003
  %2288 = vmatprep.subr.mxu0 %v1965
  %2289 = vmatpush1.msra.mxu0 %v1964
  %2290 = vmatprep.subr.mxu0 %v1925
  %2291 = vmatpush1.msra.mxu0 %v1924
  %2292 = vmatprep.subr.mxu0 0.0
  %2293 = vmatpush2.msra.mxu0 0.0
  %2294 = vmatprep.subr.mxu0 0.0
  %2295 = vmatpush2.msra.mxu0 0.0
  %2296 = vmatprep.subr.mxu0 0.0
  %2297 = vmatpush2.msra.mxu0 0.0
  %2298 = vmatprep.subr.mxu0 0.0
  %2299 = vmatpush2.msra.mxu0 0.0
  %2300 = vmatprep.subr.mxu0 0.0
  %2301 = vmatpush2.msra.mxu0 0.0
  %2302 = vmatprep.subr.mxu0 0.0
  %2303 = vmatpush2.msra.mxu0 0.0
  %2304 = vmatprep.subr.mxu0 0.0
  %2305 = vmatpush2.msra.mxu0 0.0
  %2306 = vmatprep.subr.mxu0 0.0
  %2307 = vmatpush2.msra.mxu0 0.0
  %2308 = vmatprep.subr.mxu0 0.0
  %2309 = vmatpush2.msra.mxu0 0.0
  %2310 = vmatprep.subr.mxu0 0.0
  %2311 = vmatpush2.msra.mxu0 0.0
  %2312 = vmatprep.subr.mxu0 0.0
  %2313 = vmatpush2.msra.mxu0 0.0
  %2314 = vmatprep.subr.mxu0 0.0
  %2315 = vmatpush2.msra.mxu0 0.0
  %2316 = vmatprep.subr.mxu0 0.0
  %2317 = vmatpush2.msra.mxu0 0.0
  %2318 = vmatprep.subr.mxu0 0.0
  %2319 = vmatpush2.msra.mxu0 0.0
  %2320 = vmatprep.subr.mxu0 0.0
  %2321 = vmatpush2.msra.mxu0 0.0
  %2322 = vmatprep.subr.mxu0 0.0
  %2323 = vmatpush2.msra.mxu0 0.0
  %2324 = vmatprep.mubr.f32.mxu0 0.0
  %2325 = vmatmul.mubr.f32.gmra.mxu0 %v2258
  %v2326 = vpop.f32.mrf.mxu0
  %v2327 = vadd.f32 0.0, %v2326
  %v2328 = vpop.f32.mrf.mxu0
  %v2329 = vadd.f32 0.0, %v2328
  %2330 = vdwg.mxu0
  %2331 = vmatprep.subr.mxu0 0.0
  %2332 = vmatpush1.msra.mxu0 0.0
  %2333 = vmatprep.subr.mxu0 0.0
  %2334 = vmatpush1.msra.mxu0 0.0
  %2335 = vmatprep.subr.mxu0 0.0
  %2336 = vmatpush1.msra.mxu0 0.0
  %2337 = vmatprep.subr.mxu0 0.0
  %2338 = vmatpush1.msra.mxu0 0.0
  %2339 = vmatprep.subr.mxu0 0.0
  %2340 = vmatpush1.msra.mxu0 0.0
  %2341 = vmatprep.subr.mxu0 0.0
  %2342 = vmatpush1.msra.mxu0 0.0
  %2343 = vmatprep.subr.mxu0 0.0
  %2344 = vmatpush1.msra.mxu0 0.0
  %2345 = vmatprep.subr.mxu0 %v2240
  %2346 = vmatpush1.msra.mxu0 %v2239
  %2347 = vmatprep.subr.mxu0 %v2201
  %2348 = vmatpush1.msra.mxu0 %v2200
  %2349 = vmatprep.subr.mxu0 %v2162
  %2350 = vmatpush1.msra.mxu0 %v2161
  %2351 = vmatprep.subr.mxu0 %v2123
  %2352 = vmatpush1.msra.mxu0 %v2122
  %2353 = vmatprep.subr.mxu0 %v2084
  %2354 = vmatpush1.msra.mxu0 %v2083
  %2355 = vmatprep.subr.mxu0 %v2045
  %2356 = vmatpush1.msra.mxu0 %v2044
  %2357 = vmatprep.subr.mxu0 %v2006
  %2358 = vmatpush1.msra.mxu0 %v2005
  %2359 = vmatprep.subr.mxu0 %v1967
  %2360 = vmatpush1.msra.mxu0 %v1966
  %2361 = vmatprep.subr.mxu0 %v1927
  %2362 = vmatpush1.msra.mxu0 %v1926
  %2363 = vmatprep.subr.mxu0 0.0
  %2364 = vmatpush2.msra.mxu0 0.0
  %2365 = vmatprep.subr.mxu0 0.0
  %2366 = vmatpush2.msra.mxu0 0.0
  %2367 = vmatprep.subr.mxu0 0.0
  %2368 = vmatpush2.msra.mxu0 0.0
  %2369 = vmatprep.subr.mxu0 0.0
  %2370 = vmatpush2.msra.mxu0 0.0
  %2371 = vmatprep.subr.mxu0 0.0
  %2372 = vmatpush2.msra.mxu0 0.0
  %2373 = vmatprep.subr.mxu0 0.0
  %2374 = vmatpush2.msra.mxu0 0.0
  %2375 = vmatprep.subr.mxu0 0.0
  %2376 = vmatpush2.msra.mxu0 0.0
  %2377 = vmatprep.subr.mxu0 0.0
  %2378 = vmatpush2.msra.mxu0 0.0
  %2379 = vmatprep.subr.mxu0 0.0
  %2380 = vmatpush2.msra.mxu0 0.0
  %2381 = vmatprep.subr.mxu0 0.0
  %2382 = vmatpush2.msra.mxu0 0.0
  %2383 = vmatprep.subr.mxu0 0.0
  %2384 = vmatpush2.msra.mxu0 0.0
  %2385 = vmatprep.subr.mxu0 0.0
  %2386 = vmatpush2.msra.mxu0 0.0
  %2387 = vmatprep.subr.mxu0 0.0
  %2388 = vmatpush2.msra.mxu0 0.0
  %2389 = vmatprep.subr.mxu0 0.0
  %2390 = vmatpush2.msra.mxu0 0.0
  %2391 = vmatprep.subr.mxu0 0.0
  %2392 = vmatpush2.msra.mxu0 0.0
  %2393 = vmatprep.subr.mxu0 0.0
  %2394 = vmatpush2.msra.mxu0 0.0
  %2395 = vmatprep.mubr.f32.mxu0 0.0
  %2396 = vmatmul.mubr.f32.gmra.mxu0 %v2258
  %v2397 = vpop.f32.mrf.mxu0
  %v2398 = vadd.f32 0.0, %v2397
  %v2399 = vpop.f32.mrf.mxu0
  %v2400 = vadd.f32 0.0, %v2399
  %2401 = vdwg.mxu0
  %2402 = vmatprep.subr.mxu0 0.0
  %2403 = vmatpush1.msra.mxu0 0.0
  %2404 = vmatprep.subr.mxu0 0.0
  %2405 = vmatpush1.msra.mxu0 0.0
  %2406 = vmatprep.subr.mxu0 0.0
  %2407 = vmatpush1.msra.mxu0 0.0
  %2408 = vmatprep.subr.mxu0 0.0
  %2409 = vmatpush1.msra.mxu0 0.0
  %2410 = vmatprep.subr.mxu0 0.0
  %2411 = vmatpush1.msra.mxu0 0.0
  %2412 = vmatprep.subr.mxu0 0.0
  %2413 = vmatpush1.msra.mxu0 0.0
  %2414 = vmatprep.subr.mxu0 0.0
  %2415 = vmatpush1.msra.mxu0 0.0
  %2416 = vmatprep.subr.mxu0 %v2242
  %2417 = vmatpush1.msra.mxu0 %v2241
  %2418 = vmatprep.subr.mxu0 %v2203
  %2419 = vmatpush1.msra.mxu0 %v2202
  %2420 = vmatprep.subr.mxu0 %v2164
  %2421 = vmatpush1.msra.mxu0 %v2163
  %2422 = vmatprep.subr.mxu0 %v2125
  %2423 = vmatpush1.msra.mxu0 %v2124
  %2424 = vmatprep.subr.mxu0 %v2086
  %2425 = vmatpush1.msra.mxu0 %v2085
  %2426 = vmatprep.subr.mxu0 %v2047
  %2427 = vmatpush1.msra.mxu0 %v2046
  %2428 = vmatprep.subr.mxu0 %v2008
  %2429 = vmatpush1.msra.mxu0 %v2007
  %2430 = vmatprep.subr.mxu0 %v1969
  %2431 = vmatpush1.msra.mxu0 %v1968
  %2432 = vmatprep.subr.mxu0 %v1929
  %2433 = vmatpush1.msra.mxu0 %v1928
  %2434 = vmatprep.subr.mxu0 0.0
  %2435 = vmatpush2.msra.mxu0 0.0
  %2436 = vmatprep.subr.mxu0 0.0
  %2437 = vmatpush2.msra.mxu0 0.0
  %2438 = vmatprep.subr.mxu0 0.0
  %2439 = vmatpush2.msra.mxu0 0.0
  %2440 = vmatprep.subr.mxu0 0.0
  %2441 = vmatpush2.msra.mxu0 0.0
  %2442 = vmatprep.subr.mxu0 0.0
  %2443 = vmatpush2.msra.mxu0 0.0
  %2444 = vmatprep.subr.mxu0 0.0
  %2445 = vmatpush2.msra.mxu0 0.0
  %2446 = vmatprep.subr.mxu0 0.0
  %2447 = vmatpush2.msra.mxu0 0.0
  %2448 = vmatprep.subr.mxu0 0.0
  %2449 = vmatpush2.msra.mxu0 0.0
  %2450 = vmatprep.subr.mxu0 0.0
  %2451 = vmatpush2.msra.mxu0 0.0
  %2452 = vmatprep.subr.mxu0 0.0
  %2453 = vmatpush2.msra.mxu0 0.0
  %2454 = vmatprep.subr.mxu0 0.0
  %2455 = vmatpush2.msra.mxu0 0.0
  %2456 = vmatprep.subr.mxu0 0.0
  %2457 = vmatpush2.msra.mxu0 0.0
  %2458 = vmatprep.subr.mxu0 0.0
  %2459 = vmatpush2.msra.mxu0 0.0
  %2460 = vmatprep.subr.mxu0 0.0
  %2461 = vmatpush2.msra.mxu0 0.0
  %2462 = vmatprep.subr.mxu0 0.0
  %2463 = vmatpush2.msra.mxu0 0.0
  %2464 = vmatprep.subr.mxu0 0.0
  %2465 = vmatpush2.msra.mxu0 0.0
  %2466 = vmatprep.mubr.f32.mxu0 0.0
  %2467 = vmatmul.mubr.f32.gmra.mxu0 %v2258
  %v2468 = vpop.f32.mrf.mxu0
  %v2469 = vadd.f32 0.0, %v2468
  %v2470 = vpop.f32.mrf.mxu0
  %v2471 = vadd.f32 0.0, %v2470
  %2472 = vdwg.mxu0
  %2473 = vmatprep.subr.mxu0 0.0
  %2474 = vmatpush1.msra.mxu0 0.0
  %2475 = vmatprep.subr.mxu0 0.0
  %2476 = vmatpush1.msra.mxu0 0.0
  %2477 = vmatprep.subr.mxu0 0.0
  %2478 = vmatpush1.msra.mxu0 0.0
  %2479 = vmatprep.subr.mxu0 0.0
  %2480 = vmatpush1.msra.mxu0 0.0
  %2481 = vmatprep.subr.mxu0 0.0
  %2482 = vmatpush1.msra.mxu0 0.0
  %2483 = vmatprep.subr.mxu0 0.0
  %2484 = vmatpush1.msra.mxu0 0.0
  %2485 = vmatprep.subr.mxu0 0.0
  %2486 = vmatpush1.msra.mxu0 0.0
  %2487 = vmatprep.subr.mxu0 %v2244
  %2488 = vmatpush1.msra.mxu0 %v2243
  %2489 = vmatprep.subr.mxu0 %v2205
  %2490 = vmatpush1.msra.mxu0 %v2204
  %2491 = vmatprep.subr.mxu0 %v2166
  %2492 = vmatpush1.msra.mxu0 %v2165
  %2493 = vmatprep.subr.mxu0 %v2127
  %2494 = vmatpush1.msra.mxu0 %v2126
  %2495 = vmatprep.subr.mxu0 %v2088
  %2496 = vmatpush1.msra.mxu0 %v2087
  %2497 = vmatprep.subr.mxu0 %v2049
  %2498 = vmatpush1.msra.mxu0 %v2048
  %2499 = vmatprep.subr.mxu0 %v2010
  %2500 = vmatpush1.msra.mxu0 %v2009
  %2501 = vmatprep.subr.mxu0 %v1971
  %2502 = vmatpush1.msra.mxu0 %v1970
  %2503 = vmatprep.subr.mxu0 %v1931
  %2504 = vmatpush1.msra.mxu0 %v1930
  %2505 = vmatprep.subr.mxu0 0.0
  %2506 = vmatpush2.msra.mxu0 0.0
  %2507 = vmatprep.subr.mxu0 0.0
  %2508 = vmatpush2.msra.mxu0 0.0
  %2509 = vmatprep.subr.mxu0 0.0
  %2510 = vmatpush2.msra.mxu0 0.0
  %2511 = vmatprep.subr.mxu0 0.0
  %2512 = vmatpush2.msra.mxu0 0.0
  %2513 = vmatprep.subr.mxu0 0.0
  %2514 = vmatpush2.msra.mxu0 0.0
  %2515 = vmatprep.subr.mxu0 0.0
  %2516 = vmatpush2.msra.mxu0 0.0
  %2517 = vmatprep.subr.mxu0 0.0
  %2518 = vmatpush2.msra.mxu0 0.0
  %2519 = vmatprep.subr.mxu0 0.0
  %2520 = vmatpush2.msra.mxu0 0.0
  %2521 = vmatprep.subr.mxu0 0.0
  %2522 = vmatpush2.msra.mxu0 0.0
  %2523 = vmatprep.subr.mxu0 0.0
  %2524 = vmatpush2.msra.mxu0 0.0
  %2525 = vmatprep.subr.mxu0 0.0
  %2526 = vmatpush2.msra.mxu0 0.0
  %2527 = vmatprep.subr.mxu0 0.0
  %2528 = vmatpush2.msra.mxu0 0.0
  %2529 = vmatprep.subr.mxu0 0.0
  %2530 = vmatpush2.msra.mxu0 0.0
  %2531 = vmatprep.subr.mxu0 0.0
  %2532 = vmatpush2.msra.mxu0 0.0
  %2533 = vmatprep.subr.mxu0 0.0
  %2534 = vmatpush2.msra.mxu0 0.0
  %2535 = vmatprep.subr.mxu0 0.0
  %2536 = vmatpush2.msra.mxu0 0.0
  %2537 = vmatprep.mubr.f32.mxu0 0.0
  %2538 = vmatmul.mubr.f32.gmra.mxu0 %v2258
  %v2539 = vpop.f32.mrf.mxu0
  %v2540 = vadd.f32 0.0, %v2539
  %v2541 = vpop.f32.mrf.mxu0
  %v2542 = vadd.f32 0.0, %v2541
  %2543 = vdwg.mxu0
  %2544 = vmatprep.subr.mxu0 0.0
  %2545 = vmatpush1.msra.mxu0 0.0
  %2546 = vmatprep.subr.mxu0 0.0
  %2547 = vmatpush1.msra.mxu0 0.0
  %2548 = vmatprep.subr.mxu0 0.0
  %2549 = vmatpush1.msra.mxu0 0.0
  %2550 = vmatprep.subr.mxu0 0.0
  %2551 = vmatpush1.msra.mxu0 0.0
  %2552 = vmatprep.subr.mxu0 0.0
  %2553 = vmatpush1.msra.mxu0 0.0
  %2554 = vmatprep.subr.mxu0 0.0
  %2555 = vmatpush1.msra.mxu0 0.0
  %2556 = vmatprep.subr.mxu0 0.0
  %2557 = vmatpush1.msra.mxu0 0.0
  %2558 = vmatprep.subr.mxu0 %v2236
  %2559 = vmatpush1.msra.mxu0 %v2245
  %2560 = vmatprep.subr.mxu0 %v2197
  %2561 = vmatpush1.msra.mxu0 %v2206
  %2562 = vmatprep.subr.mxu0 %v2158
  %2563 = vmatpush1.msra.mxu0 %v2167
  %2564 = vmatprep.subr.mxu0 %v2119
  %2565 = vmatpush1.msra.mxu0 %v2128
  %2566 = vmatprep.subr.mxu0 %v2080
  %2567 = vmatpush1.msra.mxu0 %v2089
  %2568 = vmatprep.subr.mxu0 %v2041
  %2569 = vmatpush1.msra.mxu0 %v2050
  %2570 = vmatprep.subr.mxu0 %v2002
  %2571 = vmatpush1.msra.mxu0 %v2011
  %2572 = vmatprep.subr.mxu0 %v1963
  %2573 = vmatpush1.msra.mxu0 %v1972
  %2574 = vmatprep.subr.mxu0 %v1933
  %2575 = vmatpush1.msra.mxu0 %v1932
  %2576 = vmatprep.subr.mxu0 0.0
  %2577 = vmatpush2.msra.mxu0 0.0
  %2578 = vmatprep.subr.mxu0 0.0
  %2579 = vmatpush2.msra.mxu0 0.0
  %2580 = vmatprep.subr.mxu0 0.0
  %2581 = vmatpush2.msra.mxu0 0.0
  %2582 = vmatprep.subr.mxu0 0.0
  %2583 = vmatpush2.msra.mxu0 0.0
  %2584 = vmatprep.subr.mxu0 0.0
  %2585 = vmatpush2.msra.mxu0 0.0
  %2586 = vmatprep.subr.mxu0 0.0
  %2587 = vmatpush2.msra.mxu0 0.0
  %2588 = vmatprep.subr.mxu0 0.0
  %2589 = vmatpush2.msra.mxu0 0.0
  %2590 = vmatprep.subr.mxu0 0.0
  %2591 = vmatpush2.msra.mxu0 0.0
  %2592 = vmatprep.subr.mxu0 0.0
  %2593 = vmatpush2.msra.mxu0 0.0
  %2594 = vmatprep.subr.mxu0 0.0
  %2595 = vmatpush2.msra.mxu0 0.0
  %2596 = vmatprep.subr.mxu0 0.0
  %2597 = vmatpush2.msra.mxu0 0.0
  %2598 = vmatprep.subr.mxu0 0.0
  %2599 = vmatpush2.msra.mxu0 0.0
  %2600 = vmatprep.subr.mxu0 0.0
  %2601 = vmatpush2.msra.mxu0 0.0
  %2602 = vmatprep.subr.mxu0 0.0
  %2603 = vmatpush2.msra.mxu0 0.0
  %2604 = vmatprep.subr.mxu0 0.0
  %2605 = vmatpush2.msra.mxu0 0.0
  %2606 = vmatprep.subr.mxu0 0.0
  %2607 = vmatpush2.msra.mxu0 0.0
  %2608 = vmatprep.mubr.f32.mxu0 0.0
  %2609 = vmatmul.mubr.f32.gmra.mxu0 %v2258
  %v2610 = vpop.f32.mrf.mxu0
  %v2611 = vadd.f32 0.0, %v2610
  %v2612 = vpop.f32.mrf.mxu0
  %v2613 = vadd.f32 0.0, %v2612
  %2614 = vdwg.mxu0
  %v2615 = vld [vmem:[%s12] sm:$0xff]
  %v2616 = vld [vmem:[%s12 + $0x8] sm:$0x3]
  %v2619 = vlaneseq
  %v2620 = vshrl.u32 %v2619, 7
  %v2621 = vsub.s32 0, %v2620
  %v2622 = vrot.slane %v2615, %v2621
  %v2623 = vlaneseq
  %v2624 = vshrl.u32 %v2623, 7
  %v2625 = vsub.s32 1, %v2624
  %v2626 = vrot.slane %v2615, %v2625
  %v2627 = vlaneseq
  %v2628 = vshrl.u32 %v2627, 7
  %v2629 = vsub.s32 2, %v2628
  %v2630 = vrot.slane %v2615, %v2629
  %v2631 = vlaneseq
  %v2632 = vshrl.u32 %v2631, 7
  %v2633 = vsub.s32 3, %v2632
  %v2634 = vrot.slane %v2615, %v2633
  %v2635 = vlaneseq
  %v2636 = vshrl.u32 %v2635, 7
  %v2637 = vsub.s32 4, %v2636
  %v2638 = vrot.slane %v2615, %v2637
  %v2639 = vlaneseq
  %v2640 = vshrl.u32 %v2639, 7
  %v2641 = vsub.s32 5, %v2640
  %v2642 = vrot.slane %v2615, %v2641
  %v2643 = vlaneseq
  %v2644 = vshrl.u32 %v2643, 7
  %v2645 = vsub.s32 6, %v2644
  %v2646 = vrot.slane %v2615, %v2645
  %v2647 = vlaneseq
  %v2648 = vshrl.u32 %v2647, 7
  %v2649 = vsub.s32 7, %v2648
  %v2650 = vrot.slane %v2615, %v2649
  %v2651 = vlaneseq
  %v2652 = vshrl.u32 %v2651, 7
  %v2653 = vsub.s32 0, %v2652
  %v2654 = vrot.slane %v2616, %v2653
  %v2655 = vlaneseq
  %v2656 = vshrl.u32 %v2655, 7
  %v2657 = vsub.s32 1, %v2656
  %v2658 = vrot.slane %v2616, %v2657
  %v2669 = vmul.f32 %v2327, %v2622
  %v2670 = vmul.f32 %v2329, %v2626
  %v2671 = vmul.f32 %v2398, %v2630
  %v2672 = vmul.f32 %v2400, %v2634
  %v2673 = vmul.f32 %v2469, %v2638
  %v2674 = vmul.f32 %v2471, %v2642
  %v2675 = vmul.f32 %v2540, %v2646
  %v2676 = vmul.f32 %v2542, %v2650
  %v2677 = vmul.f32 %v2611, %v2654
  %v2678 = vmul.f32 %v2613, %v2658
  %v2679 = vadd.f32 %v2669, %v2670
  %v2680 = vadd.f32 %v2679, %v2671
  %v2681 = vadd.f32 %v2680, %v2672
  %v2682 = vadd.f32 %v2681, %v2673
  %v2683 = vadd.f32 %v2682, %v2674
  %v2684 = vadd.f32 %v2683, %v2675
  %v2685 = vadd.f32 %v2684, %v2676
  %v2686 = vadd.f32 %v2685, %v2677
  %vm2687 = vcmask 310272
  %v2688 = vsel %vm2687, %v2678, 0.0
  %v2689 = vadd.f32 %v2686, %v2688
  %2690 = vadd.xlane.f32.xlu0 %v2689
  %v2691 = vpop.xlane.xlu0 %2690
  %v2692 = vmul.f32 %v2691, 0.00125
  %v2693 = vmul.f32 %v2669, %v2327
  %v2694 = vmul.f32 %v2670, %v2329
  %v2695 = vmul.f32 %v2671, %v2398
  %v2696 = vmul.f32 %v2672, %v2400
  %v2697 = vmul.f32 %v2673, %v2469
  %v2698 = vmul.f32 %v2674, %v2471
  %v2699 = vmul.f32 %v2675, %v2540
  %v2700 = vmul.f32 %v2676, %v2542
  %v2701 = vmul.f32 %v2677, %v2611
  %v2702 = vmul.f32 %v2678, %v2613
  %v2703 = vadd.f32 %v2693, %v2694
  %v2704 = vadd.f32 %v2703, %v2695
  %v2705 = vadd.f32 %v2704, %v2696
  %v2706 = vadd.f32 %v2705, %v2697
  %v2707 = vadd.f32 %v2706, %v2698
  %v2708 = vadd.f32 %v2707, %v2699
  %v2709 = vadd.f32 %v2708, %v2700
  %v2710 = vadd.f32 %v2709, %v2701
  %v2711 = vsel %vm2687, %v2702, 0.0
  %v2712 = vadd.f32 %v2710, %v2711
  %2713 = vadd.xlane.f32.xlu0 %v2712
  %v2714 = vpop.xlane.xlu0 %2713
  %v2715 = vmul.f32 %v2714, 0.00125
  %v2716 = vmul.f32 %v2692, %v2692
  %v2717 = vsub.f32 %v2715, %v2716
  %v2718 = vmax.f32 %v2717, 0.0
  %v2719 = vld [vmem:[%s10] sm:$0xff]
  %v2720 = vadd.f32 %v2718, 1e-05
  %v2721 = vrsqrt.pop %v2720
  %v2722 = vmul.f32 %v2719, %v2721
  %v2723 = vld [vmem:[%s11] sm:$0xff]
  %v2724 = vmul.f32 %v2692, %v2722
  %v2725 = vsub.f32 %v2723, %v2724
  %2727 = vset.pattern.permute.xlu0 0
  %2728 = vperm.xlu0 %2727, %v2722
  %v2729 = vpop.permute.xlu0 %2728
  %v2731 = vmul.f32 %v2327, %v2729
  %v2732 = vmul.f32 %v2329, %v2729
  %v2733 = vmul.f32 %v2398, %v2729
  %v2734 = vmul.f32 %v2400, %v2729
  %v2735 = vmul.f32 %v2469, %v2729
  %v2736 = vmul.f32 %v2471, %v2729
  %v2737 = vmul.f32 %v2540, %v2729
  %v2738 = vmul.f32 %v2542, %v2729
  %v2739 = vmul.f32 %v2611, %v2729
  %v2740 = vmul.f32 %v2613, %v2729
  %2742 = vset.pattern.permute.xlu0 0
  %2743 = vperm.xlu0 %2742, %v2725
  %v2744 = vpop.permute.xlu0 %2743
  %v2746 = vadd.f32 %v2731, %v2744
  %v2747 = vadd.f32 %v2732, %v2744
  %v2748 = vadd.f32 %v2733, %v2744
  %v2749 = vadd.f32 %v2734, %v2744
  %v2750 = vadd.f32 %v2735, %v2744
  %v2751 = vadd.f32 %v2736, %v2744
  %v2752 = vadd.f32 %v2737, %v2744
  %v2753 = vadd.f32 %v2738, %v2744
  %v2754 = vadd.f32 %v2739, %v2744
  %v2755 = vadd.f32 %v2740, %v2744
  %vm2756 = vcmp.ge.f32.partialorder %v2746, 0.0
  %vm2757 = vcmp.ge.f32.partialorder %v2747, 0.0
  %vm2758 = vcmp.ge.f32.partialorder %v2748, 0.0
  %vm2759 = vcmp.ge.f32.partialorder %v2749, 0.0
  %vm2760 = vcmp.ge.f32.partialorder %v2750, 0.0
  %vm2761 = vcmp.ge.f32.partialorder %v2751, 0.0
  %vm2762 = vcmp.ge.f32.partialorder %v2752, 0.0
  %vm2763 = vcmp.ge.f32.partialorder %v2753, 0.0
  %vm2764 = vcmp.ge.f32.partialorder %v2754, 0.0
  %vm2765 = vcmp.ge.f32.partialorder %v2755, 0.0
  %v2766 = vmul.f32 %v2746, 0.2
  %v2767 = vmul.f32 %v2747, 0.2
  %v2768 = vmul.f32 %v2748, 0.2
  %v2769 = vmul.f32 %v2749, 0.2
  %v2770 = vmul.f32 %v2750, 0.2
  %v2771 = vmul.f32 %v2751, 0.2
  %v2772 = vmul.f32 %v2752, 0.2
  %v2773 = vmul.f32 %v2753, 0.2
  %v2774 = vmul.f32 %v2754, 0.2
  %v2775 = vmul.f32 %v2755, 0.2
  %v2776 = vsel %vm2756, %v2746, %v2766
  %v2777 = vsel %vm2757, %v2747, %v2767
  %v2778 = vsel %vm2758, %v2748, %v2768
  %v2779 = vsel %vm2759, %v2749, %v2769
  %v2780 = vsel %vm2760, %v2750, %v2770
  %v2781 = vsel %vm2761, %v2751, %v2771
  %v2782 = vsel %vm2762, %v2752, %v2772
  %v2783 = vsel %vm2763, %v2753, %v2773
  %v2784 = vsel %vm2764, %v2754, %v2774
  %v2785 = vsel %vm2765, %v2755, %v2775
  %v2786 = vmul.f32 %v2776, %v2622
  %v2787 = vmul.f32 %v2777, %v2626
  %v2788 = vmul.f32 %v2778, %v2630
  %v2789 = vmul.f32 %v2779, %v2634
  %v2790 = vmul.f32 %v2780, %v2638
  %v2791 = vmul.f32 %v2781, %v2642
  %v2792 = vmul.f32 %v2782, %v2646
  %v2793 = vmul.f32 %v2783, %v2650
  %v2794 = vmul.f32 %v2784, %v2654
  %v2795 = vmul.f32 %v2785, %v2658
  %2805 = vrot.lane.b32.xlu0 %v2786, 127
  %v2806 = vpop.permute.xlu0 %2805
  %2807 = vrot.lane.b32.xlu0 %v2787, 127
  %v2808 = vpop.permute.xlu0 %2807
  %2809 = vrot.lane.b32.xlu0 %v2788, 127
  %v2810 = vpop.permute.xlu0 %2809
  %2811 = vrot.lane.b32.xlu0 %v2789, 127
  %v2812 = vpop.permute.xlu0 %2811
  %2813 = vrot.lane.b32.xlu0 %v2790, 127
  %v2814 = vpop.permute.xlu0 %2813
  %2815 = vrot.lane.b32.xlu0 %v2791, 127
  %v2816 = vpop.permute.xlu0 %2815
  %2817 = vrot.lane.b32.xlu0 %v2792, 127
  %v2818 = vpop.permute.xlu0 %2817
  %2819 = vrot.lane.b32.xlu0 %v2793, 127
  %v2820 = vpop.permute.xlu0 %2819
  %2821 = vrot.lane.b32.xlu0 %v2794, 127
  %v2822 = vpop.permute.xlu0 %2821
  %v2823 = vsel %vm106, %v2806, %v2808
  %v2824 = vsel %vm106, %v2808, %v2810
  %v2825 = vsel %vm106, %v2810, %v2812
  %v2826 = vsel %vm106, %v2812, %v2814
  %v2827 = vsel %vm106, %v2814, %v2816
  %v2828 = vsel %vm106, %v2816, %v2818
  %v2829 = vsel %vm106, %v2818, %v2820
  %v2830 = vsel %vm106, %v2820, %v2822
  %2840 = vrot.lane.b32.xlu0 %v2786, 126
  %v2841 = vpop.permute.xlu0 %2840
  %2842 = vrot.lane.b32.xlu0 %v2787, 126
  %v2843 = vpop.permute.xlu0 %2842
  %2844 = vrot.lane.b32.xlu0 %v2788, 126
  %v2845 = vpop.permute.xlu0 %2844
  %2846 = vrot.lane.b32.xlu0 %v2789, 126
  %v2847 = vpop.permute.xlu0 %2846
  %2848 = vrot.lane.b32.xlu0 %v2790, 126
  %v2849 = vpop.permute.xlu0 %2848
  %2850 = vrot.lane.b32.xlu0 %v2791, 126
  %v2851 = vpop.permute.xlu0 %2850
  %2852 = vrot.lane.b32.xlu0 %v2792, 126
  %v2853 = vpop.permute.xlu0 %2852
  %2854 = vrot.lane.b32.xlu0 %v2793, 126
  %v2855 = vpop.permute.xlu0 %2854
  %2856 = vrot.lane.b32.xlu0 %v2794, 126
  %v2857 = vpop.permute.xlu0 %2856
  %v2858 = vsel %vm150, %v2841, %v2843
  %v2859 = vsel %vm150, %v2843, %v2845
  %v2860 = vsel %vm150, %v2845, %v2847
  %v2861 = vsel %vm150, %v2847, %v2849
  %v2862 = vsel %vm150, %v2849, %v2851
  %v2863 = vsel %vm150, %v2851, %v2853
  %v2864 = vsel %vm150, %v2853, %v2855
  %v2865 = vsel %vm150, %v2855, %v2857
  %2876 = vrot.lane.b32.xlu0 %v2786, 102
  %v2877 = vpop.permute.xlu0 %2876
  %2878 = vrot.lane.b32.xlu0 %v2787, 102
  %v2879 = vpop.permute.xlu0 %2878
  %2880 = vrot.lane.b32.xlu0 %v2788, 102
  %v2881 = vpop.permute.xlu0 %2880
  %2882 = vrot.lane.b32.xlu0 %v2789, 102
  %v2883 = vpop.permute.xlu0 %2882
  %2884 = vrot.lane.b32.xlu0 %v2790, 102
  %v2885 = vpop.permute.xlu0 %2884
  %2886 = vrot.lane.b32.xlu0 %v2791, 102
  %v2887 = vpop.permute.xlu0 %2886
  %2888 = vrot.lane.b32.xlu0 %v2792, 102
  %v2889 = vpop.permute.xlu0 %2888
  %2890 = vrot.lane.b32.xlu0 %v2793, 102
  %v2891 = vpop.permute.xlu0 %2890
  %2892 = vrot.lane.b32.xlu0 %v2794, 102
  %v2893 = vpop.permute.xlu0 %2892
  %2894 = vrot.lane.b32.xlu0 %v2795, 102
  %v2895 = vpop.permute.xlu0 %2894
  %v2896 = vsel %vm194, %v2877, %v2879
  %v2897 = vsel %vm194, %v2879, %v2881
  %v2898 = vsel %vm194, %v2881, %v2883
  %v2899 = vsel %vm194, %v2883, %v2885
  %v2900 = vsel %vm194, %v2885, %v2887
  %v2901 = vsel %vm194, %v2887, %v2889
  %v2902 = vsel %vm194, %v2889, %v2891
  %v2903 = vsel %vm194, %v2891, %v2893
  %v2904 = vsel %vm194, %v2893, %v2895
  %2914 = vrot.lane.b32.xlu0 %v2786, 101
  %v2915 = vpop.permute.xlu0 %2914
  %2916 = vrot.lane.b32.xlu0 %v2787, 101
  %v2917 = vpop.permute.xlu0 %2916
  %2918 = vrot.lane.b32.xlu0 %v2788, 101
  %v2919 = vpop.permute.xlu0 %2918
  %2920 = vrot.lane.b32.xlu0 %v2789, 101
  %v2921 = vpop.permute.xlu0 %2920
  %2922 = vrot.lane.b32.xlu0 %v2790, 101
  %v2923 = vpop.permute.xlu0 %2922
  %2924 = vrot.lane.b32.xlu0 %v2791, 101
  %v2925 = vpop.permute.xlu0 %2924
  %2926 = vrot.lane.b32.xlu0 %v2792, 101
  %v2927 = vpop.permute.xlu0 %2926
  %2928 = vrot.lane.b32.xlu0 %v2793, 101
  %v2929 = vpop.permute.xlu0 %2928
  %2930 = vrot.lane.b32.xlu0 %v2794, 101
  %v2931 = vpop.permute.xlu0 %2930
  %2932 = vrot.lane.b32.xlu0 %v2795, 101
  %v2933 = vpop.permute.xlu0 %2932
  %v2934 = vsel %vm238, %v2915, %v2917
  %v2935 = vsel %vm238, %v2917, %v2919
  %v2936 = vsel %vm238, %v2919, %v2921
  %v2937 = vsel %vm238, %v2921, %v2923
  %v2938 = vsel %vm238, %v2923, %v2925
  %v2939 = vsel %vm238, %v2925, %v2927
  %v2940 = vsel %vm238, %v2927, %v2929
  %v2941 = vsel %vm238, %v2929, %v2931
  %v2942 = vsel %vm238, %v2931, %v2933
  %2952 = vrot.lane.b32.xlu0 %v2786, 100
  %v2953 = vpop.permute.xlu0 %2952
  %2954 = vrot.lane.b32.xlu0 %v2787, 100
  %v2955 = vpop.permute.xlu0 %2954
  %2956 = vrot.lane.b32.xlu0 %v2788, 100
  %v2957 = vpop.permute.xlu0 %2956
  %2958 = vrot.lane.b32.xlu0 %v2789, 100
  %v2959 = vpop.permute.xlu0 %2958
  %2960 = vrot.lane.b32.xlu0 %v2790, 100
  %v2961 = vpop.permute.xlu0 %2960
  %2962 = vrot.lane.b32.xlu0 %v2791, 100
  %v2963 = vpop.permute.xlu0 %2962
  %2964 = vrot.lane.b32.xlu0 %v2792, 100
  %v2965 = vpop.permute.xlu0 %2964
  %2966 = vrot.lane.b32.xlu0 %v2793, 100
  %v2967 = vpop.permute.xlu0 %2966
  %2968 = vrot.lane.b32.xlu0 %v2794, 100
  %v2969 = vpop.permute.xlu0 %2968
  %2970 = vrot.lane.b32.xlu0 %v2795, 100
  %v2971 = vpop.permute.xlu0 %2970
  %v2972 = vsel %vm282, %v2953, %v2955
  %v2973 = vsel %vm282, %v2955, %v2957
  %v2974 = vsel %vm282, %v2957, %v2959
  %v2975 = vsel %vm282, %v2959, %v2961
  %v2976 = vsel %vm282, %v2961, %v2963
  %v2977 = vsel %vm282, %v2963, %v2965
  %v2978 = vsel %vm282, %v2965, %v2967
  %v2979 = vsel %vm282, %v2967, %v2969
  %v2980 = vsel %vm282, %v2969, %v2971
  %2990 = vrot.lane.b32.xlu0 %v2786, 76
  %v2991 = vpop.permute.xlu0 %2990
  %2992 = vrot.lane.b32.xlu0 %v2787, 76
  %v2993 = vpop.permute.xlu0 %2992
  %2994 = vrot.lane.b32.xlu0 %v2788, 76
  %v2995 = vpop.permute.xlu0 %2994
  %2996 = vrot.lane.b32.xlu0 %v2789, 76
  %v2997 = vpop.permute.xlu0 %2996
  %2998 = vrot.lane.b32.xlu0 %v2790, 76
  %v2999 = vpop.permute.xlu0 %2998
  %3000 = vrot.lane.b32.xlu0 %v2791, 76
  %v3001 = vpop.permute.xlu0 %3000
  %3002 = vrot.lane.b32.xlu0 %v2792, 76
  %v3003 = vpop.permute.xlu0 %3002
  %3004 = vrot.lane.b32.xlu0 %v2793, 76
  %v3005 = vpop.permute.xlu0 %3004
  %3006 = vrot.lane.b32.xlu0 %v2794, 76
  %v3007 = vpop.permute.xlu0 %3006
  %3008 = vrot.lane.b32.xlu0 %v2795, 76
  %v3009 = vpop.permute.xlu0 %3008
  %v3010 = vsel %vm326, %v2991, %v2993
  %v3011 = vsel %vm326, %v2993, %v2995
  %v3012 = vsel %vm326, %v2995, %v2997
  %v3013 = vsel %vm326, %v2997, %v2999
  %v3014 = vsel %vm326, %v2999, %v3001
  %v3015 = vsel %vm326, %v3001, %v3003
  %v3016 = vsel %vm326, %v3003, %v3005
  %v3017 = vsel %vm326, %v3005, %v3007
  %v3018 = vsel %vm326, %v3007, %v3009
  %3028 = vrot.lane.b32.xlu0 %v2786, 75
  %v3029 = vpop.permute.xlu0 %3028
  %3030 = vrot.lane.b32.xlu0 %v2787, 75
  %v3031 = vpop.permute.xlu0 %3030
  %3032 = vrot.lane.b32.xlu0 %v2788, 75
  %v3033 = vpop.permute.xlu0 %3032
  %3034 = vrot.lane.b32.xlu0 %v2789, 75
  %v3035 = vpop.permute.xlu0 %3034
  %3036 = vrot.lane.b32.xlu0 %v2790, 75
  %v3037 = vpop.permute.xlu0 %3036
  %3038 = vrot.lane.b32.xlu0 %v2791, 75
  %v3039 = vpop.permute.xlu0 %3038
  %3040 = vrot.lane.b32.xlu0 %v2792, 75
  %v3041 = vpop.permute.xlu0 %3040
  %3042 = vrot.lane.b32.xlu0 %v2793, 75
  %v3043 = vpop.permute.xlu0 %3042
  %3044 = vrot.lane.b32.xlu0 %v2794, 75
  %v3045 = vpop.permute.xlu0 %3044
  %3046 = vrot.lane.b32.xlu0 %v2795, 75
  %v3047 = vpop.permute.xlu0 %3046
  %v3048 = vsel %vm370, %v3029, %v3031
  %v3049 = vsel %vm370, %v3031, %v3033
  %v3050 = vsel %vm370, %v3033, %v3035
  %v3051 = vsel %vm370, %v3035, %v3037
  %v3052 = vsel %vm370, %v3037, %v3039
  %v3053 = vsel %vm370, %v3039, %v3041
  %v3054 = vsel %vm370, %v3041, %v3043
  %v3055 = vsel %vm370, %v3043, %v3045
  %v3056 = vsel %vm370, %v3045, %v3047
  %3066 = vrot.lane.b32.xlu0 %v2786, 74
  %v3067 = vpop.permute.xlu0 %3066
  %3068 = vrot.lane.b32.xlu0 %v2787, 74
  %v3069 = vpop.permute.xlu0 %3068
  %3070 = vrot.lane.b32.xlu0 %v2788, 74
  %v3071 = vpop.permute.xlu0 %3070
  %3072 = vrot.lane.b32.xlu0 %v2789, 74
  %v3073 = vpop.permute.xlu0 %3072
  %3074 = vrot.lane.b32.xlu0 %v2790, 74
  %v3075 = vpop.permute.xlu0 %3074
  %3076 = vrot.lane.b32.xlu0 %v2791, 74
  %v3077 = vpop.permute.xlu0 %3076
  %3078 = vrot.lane.b32.xlu0 %v2792, 74
  %v3079 = vpop.permute.xlu0 %3078
  %3080 = vrot.lane.b32.xlu0 %v2793, 74
  %v3081 = vpop.permute.xlu0 %3080
  %3082 = vrot.lane.b32.xlu0 %v2794, 74
  %v3083 = vpop.permute.xlu0 %3082
  %3084 = vrot.lane.b32.xlu0 %v2795, 74
  %v3085 = vpop.permute.xlu0 %3084
  %v3086 = vsel %vm414, %v3067, %v3069
  %v3087 = vsel %vm414, %v3069, %v3071
  %v3088 = vsel %vm414, %v3071, %v3073
  %v3089 = vsel %vm414, %v3073, %v3075
  %v3090 = vsel %vm414, %v3075, %v3077
  %v3091 = vsel %vm414, %v3077, %v3079
  %v3092 = vsel %vm414, %v3079, %v3081
  %v3093 = vsel %vm414, %v3081, %v3083
  %v3094 = vsel %vm414, %v3083, %v3085
  %v3104 = vld [vmem:[%s13] sm:$0xff]
  %v3106 = vsel %vm437, %v3104, 0
  %3108 = vmatprep.subr.mxu0 0.0
  %3109 = vmatpush1.msra.mxu0 0.0
  %3110 = vmatprep.subr.mxu0 0.0
  %3111 = vmatpush1.msra.mxu0 0.0
  %3112 = vmatprep.subr.mxu0 0.0
  %3113 = vmatpush1.msra.mxu0 0.0
  %3114 = vmatprep.subr.mxu0 0.0
  %3115 = vmatpush1.msra.mxu0 0.0
  %3116 = vmatprep.subr.mxu0 0.0
  %3117 = vmatpush1.msra.mxu0 0.0
  %3118 = vmatprep.subr.mxu0 0.0
  %3119 = vmatpush1.msra.mxu0 0.0
  %3120 = vmatprep.subr.mxu0 0.0
  %3121 = vmatpush1.msra.mxu0 0.0
  %3122 = vmatprep.subr.mxu0 %v3087
  %3123 = vmatpush1.msra.mxu0 %v3086
  %3124 = vmatprep.subr.mxu0 %v3049
  %3125 = vmatpush1.msra.mxu0 %v3048
  %3126 = vmatprep.subr.mxu0 %v3011
  %3127 = vmatpush1.msra.mxu0 %v3010
  %3128 = vmatprep.subr.mxu0 %v2973
  %3129 = vmatpush1.msra.mxu0 %v2972
  %3130 = vmatprep.subr.mxu0 %v2935
  %3131 = vmatpush1.msra.mxu0 %v2934
  %3132 = vmatprep.subr.mxu0 %v2897
  %3133 = vmatpush1.msra.mxu0 %v2896
  %3134 = vmatprep.subr.mxu0 %v2859
  %3135 = vmatpush1.msra.mxu0 %v2858
  %3136 = vmatprep.subr.mxu0 %v2824
  %3137 = vmatpush1.msra.mxu0 %v2823
  %3138 = vmatprep.subr.mxu0 %v2787
  %3139 = vmatpush1.msra.mxu0 %v2786
  %3140 = vmatprep.subr.mxu0 0.0
  %3141 = vmatpush2.msra.mxu0 0.0
  %3142 = vmatprep.subr.mxu0 0.0
  %3143 = vmatpush2.msra.mxu0 0.0
  %3144 = vmatprep.subr.mxu0 0.0
  %3145 = vmatpush2.msra.mxu0 0.0
  %3146 = vmatprep.subr.mxu0 0.0
  %3147 = vmatpush2.msra.mxu0 0.0
  %3148 = vmatprep.subr.mxu0 0.0
  %3149 = vmatpush2.msra.mxu0 0.0
  %3150 = vmatprep.subr.mxu0 0.0
  %3151 = vmatpush2.msra.mxu0 0.0
  %3152 = vmatprep.subr.mxu0 0.0
  %3153 = vmatpush2.msra.mxu0 0.0
  %3154 = vmatprep.subr.mxu0 0.0
  %3155 = vmatpush2.msra.mxu0 0.0
  %3156 = vmatprep.subr.mxu0 0.0
  %3157 = vmatpush2.msra.mxu0 0.0
  %3158 = vmatprep.subr.mxu0 0.0
  %3159 = vmatpush2.msra.mxu0 0.0
  %3160 = vmatprep.subr.mxu0 0.0
  %3161 = vmatpush2.msra.mxu0 0.0
  %3162 = vmatprep.subr.mxu0 0.0
  %3163 = vmatpush2.msra.mxu0 0.0
  %3164 = vmatprep.subr.mxu0 0.0
  %3165 = vmatpush2.msra.mxu0 0.0
  %3166 = vmatprep.subr.mxu0 0.0
  %3167 = vmatpush2.msra.mxu0 0.0
  %3168 = vmatprep.subr.mxu0 0.0
  %3169 = vmatpush2.msra.mxu0 0.0
  %3170 = vmatprep.subr.mxu0 0.0
  %3171 = vmatpush2.msra.mxu0 0.0
  %3172 = vmatprep.mubr.f32.mxu0 0.0
  %3173 = vmatmul.mubr.f32.gmra.mxu0 %v3106
  %v3174 = vpop.f32.mrf.mxu0
  %v3175 = vadd.f32 0.0, %v3174
  %v3176 = vpop.f32.mrf.mxu0
  %v3177 = vadd.f32 0.0, %v3176
  %3178 = vdwg.mxu0
  %3179 = vmatprep.subr.mxu0 0.0
  %3180 = vmatpush1.msra.mxu0 0.0
  %3181 = vmatprep.subr.mxu0 0.0
  %3182 = vmatpush1.msra.mxu0 0.0
  %3183 = vmatprep.subr.mxu0 0.0
  %3184 = vmatpush1.msra.mxu0 0.0
  %3185 = vmatprep.subr.mxu0 0.0
  %3186 = vmatpush1.msra.mxu0 0.0
  %3187 = vmatprep.subr.mxu0 0.0
  %3188 = vmatpush1.msra.mxu0 0.0
  %3189 = vmatprep.subr.mxu0 0.0
  %3190 = vmatpush1.msra.mxu0 0.0
  %3191 = vmatprep.subr.mxu0 0.0
  %3192 = vmatpush1.msra.mxu0 0.0
  %3193 = vmatprep.subr.mxu0 %v3089
  %3194 = vmatpush1.msra.mxu0 %v3088
  %3195 = vmatprep.subr.mxu0 %v3051
  %3196 = vmatpush1.msra.mxu0 %v3050
  %3197 = vmatprep.subr.mxu0 %v3013
  %3198 = vmatpush1.msra.mxu0 %v3012
  %3199 = vmatprep.subr.mxu0 %v2975
  %3200 = vmatpush1.msra.mxu0 %v2974
  %3201 = vmatprep.subr.mxu0 %v2937
  %3202 = vmatpush1.msra.mxu0 %v2936
  %3203 = vmatprep.subr.mxu0 %v2899
  %3204 = vmatpush1.msra.mxu0 %v2898
  %3205 = vmatprep.subr.mxu0 %v2861
  %3206 = vmatpush1.msra.mxu0 %v2860
  %3207 = vmatprep.subr.mxu0 %v2826
  %3208 = vmatpush1.msra.mxu0 %v2825
  %3209 = vmatprep.subr.mxu0 %v2789
  %3210 = vmatpush1.msra.mxu0 %v2788
  %3211 = vmatprep.subr.mxu0 0.0
  %3212 = vmatpush2.msra.mxu0 0.0
  %3213 = vmatprep.subr.mxu0 0.0
  %3214 = vmatpush2.msra.mxu0 0.0
  %3215 = vmatprep.subr.mxu0 0.0
  %3216 = vmatpush2.msra.mxu0 0.0
  %3217 = vmatprep.subr.mxu0 0.0
  %3218 = vmatpush2.msra.mxu0 0.0
  %3219 = vmatprep.subr.mxu0 0.0
  %3220 = vmatpush2.msra.mxu0 0.0
  %3221 = vmatprep.subr.mxu0 0.0
  %3222 = vmatpush2.msra.mxu0 0.0
  %3223 = vmatprep.subr.mxu0 0.0
  %3224 = vmatpush2.msra.mxu0 0.0
  %3225 = vmatprep.subr.mxu0 0.0
  %3226 = vmatpush2.msra.mxu0 0.0
  %3227 = vmatprep.subr.mxu0 0.0
  %3228 = vmatpush2.msra.mxu0 0.0
  %3229 = vmatprep.subr.mxu0 0.0
  %3230 = vmatpush2.msra.mxu0 0.0
  %3231 = vmatprep.subr.mxu0 0.0
  %3232 = vmatpush2.msra.mxu0 0.0
  %3233 = vmatprep.subr.mxu0 0.0
  %3234 = vmatpush2.msra.mxu0 0.0
  %3235 = vmatprep.subr.mxu0 0.0
  %3236 = vmatpush2.msra.mxu0 0.0
  %3237 = vmatprep.subr.mxu0 0.0
  %3238 = vmatpush2.msra.mxu0 0.0
  %3239 = vmatprep.subr.mxu0 0.0
  %3240 = vmatpush2.msra.mxu0 0.0
  %3241 = vmatprep.subr.mxu0 0.0
  %3242 = vmatpush2.msra.mxu0 0.0
  %3243 = vmatprep.mubr.f32.mxu0 0.0
  %3244 = vmatmul.mubr.f32.gmra.mxu0 %v3106
  %v3245 = vpop.f32.mrf.mxu0
  %v3246 = vadd.f32 0.0, %v3245
  %v3247 = vpop.f32.mrf.mxu0
  %v3248 = vadd.f32 0.0, %v3247
  %3249 = vdwg.mxu0
  %3250 = vmatprep.subr.mxu0 0.0
  %3251 = vmatpush1.msra.mxu0 0.0
  %3252 = vmatprep.subr.mxu0 0.0
  %3253 = vmatpush1.msra.mxu0 0.0
  %3254 = vmatprep.subr.mxu0 0.0
  %3255 = vmatpush1.msra.mxu0 0.0
  %3256 = vmatprep.subr.mxu0 0.0
  %3257 = vmatpush1.msra.mxu0 0.0
  %3258 = vmatprep.subr.mxu0 0.0
  %3259 = vmatpush1.msra.mxu0 0.0
  %3260 = vmatprep.subr.mxu0 0.0
  %3261 = vmatpush1.msra.mxu0 0.0
  %3262 = vmatprep.subr.mxu0 0.0
  %3263 = vmatpush1.msra.mxu0 0.0
  %3264 = vmatprep.subr.mxu0 %v3091
  %3265 = vmatpush1.msra.mxu0 %v3090
  %3266 = vmatprep.subr.mxu0 %v3053
  %3267 = vmatpush1.msra.mxu0 %v3052
  %3268 = vmatprep.subr.mxu0 %v3015
  %3269 = vmatpush1.msra.mxu0 %v3014
  %3270 = vmatprep.subr.mxu0 %v2977
  %3271 = vmatpush1.msra.mxu0 %v2976
  %3272 = vmatprep.subr.mxu0 %v2939
  %3273 = vmatpush1.msra.mxu0 %v2938
  %3274 = vmatprep.subr.mxu0 %v2901
  %3275 = vmatpush1.msra.mxu0 %v2900
  %3276 = vmatprep.subr.mxu0 %v2863
  %3277 = vmatpush1.msra.mxu0 %v2862
  %3278 = vmatprep.subr.mxu0 %v2828
  %3279 = vmatpush1.msra.mxu0 %v2827
  %3280 = vmatprep.subr.mxu0 %v2791
  %3281 = vmatpush1.msra.mxu0 %v2790
  %3282 = vmatprep.subr.mxu0 0.0
  %3283 = vmatpush2.msra.mxu0 0.0
  %3284 = vmatprep.subr.mxu0 0.0
  %3285 = vmatpush2.msra.mxu0 0.0
  %3286 = vmatprep.subr.mxu0 0.0
  %3287 = vmatpush2.msra.mxu0 0.0
  %3288 = vmatprep.subr.mxu0 0.0
  %3289 = vmatpush2.msra.mxu0 0.0
  %3290 = vmatprep.subr.mxu0 0.0
  %3291 = vmatpush2.msra.mxu0 0.0
  %3292 = vmatprep.subr.mxu0 0.0
  %3293 = vmatpush2.msra.mxu0 0.0
  %3294 = vmatprep.subr.mxu0 0.0
  %3295 = vmatpush2.msra.mxu0 0.0
  %3296 = vmatprep.subr.mxu0 0.0
  %3297 = vmatpush2.msra.mxu0 0.0
  %3298 = vmatprep.subr.mxu0 0.0
  %3299 = vmatpush2.msra.mxu0 0.0
  %3300 = vmatprep.subr.mxu0 0.0
  %3301 = vmatpush2.msra.mxu0 0.0
  %3302 = vmatprep.subr.mxu0 0.0
  %3303 = vmatpush2.msra.mxu0 0.0
  %3304 = vmatprep.subr.mxu0 0.0
  %3305 = vmatpush2.msra.mxu0 0.0
  %3306 = vmatprep.subr.mxu0 0.0
  %3307 = vmatpush2.msra.mxu0 0.0
  %3308 = vmatprep.subr.mxu0 0.0
  %3309 = vmatpush2.msra.mxu0 0.0
  %3310 = vmatprep.subr.mxu0 0.0
  %3311 = vmatpush2.msra.mxu0 0.0
  %3312 = vmatprep.subr.mxu0 0.0
  %3313 = vmatpush2.msra.mxu0 0.0
  %3314 = vmatprep.mubr.f32.mxu0 0.0
  %3315 = vmatmul.mubr.f32.gmra.mxu0 %v3106
  %v3316 = vpop.f32.mrf.mxu0
  %v3317 = vadd.f32 0.0, %v3316
  %v3318 = vpop.f32.mrf.mxu0
  %v3319 = vadd.f32 0.0, %v3318
  %3320 = vdwg.mxu0
  %3321 = vmatprep.subr.mxu0 0.0
  %3322 = vmatpush1.msra.mxu0 0.0
  %3323 = vmatprep.subr.mxu0 0.0
  %3324 = vmatpush1.msra.mxu0 0.0
  %3325 = vmatprep.subr.mxu0 0.0
  %3326 = vmatpush1.msra.mxu0 0.0
  %3327 = vmatprep.subr.mxu0 0.0
  %3328 = vmatpush1.msra.mxu0 0.0
  %3329 = vmatprep.subr.mxu0 0.0
  %3330 = vmatpush1.msra.mxu0 0.0
  %3331 = vmatprep.subr.mxu0 0.0
  %3332 = vmatpush1.msra.mxu0 0.0
  %3333 = vmatprep.subr.mxu0 0.0
  %3334 = vmatpush1.msra.mxu0 0.0
  %3335 = vmatprep.subr.mxu0 %v3093
  %3336 = vmatpush1.msra.mxu0 %v3092
  %3337 = vmatprep.subr.mxu0 %v3055
  %3338 = vmatpush1.msra.mxu0 %v3054
  %3339 = vmatprep.subr.mxu0 %v3017
  %3340 = vmatpush1.msra.mxu0 %v3016
  %3341 = vmatprep.subr.mxu0 %v2979
  %3342 = vmatpush1.msra.mxu0 %v2978
  %3343 = vmatprep.subr.mxu0 %v2941
  %3344 = vmatpush1.msra.mxu0 %v2940
  %3345 = vmatprep.subr.mxu0 %v2903
  %3346 = vmatpush1.msra.mxu0 %v2902
  %3347 = vmatprep.subr.mxu0 %v2865
  %3348 = vmatpush1.msra.mxu0 %v2864
  %3349 = vmatprep.subr.mxu0 %v2830
  %3350 = vmatpush1.msra.mxu0 %v2829
  %3351 = vmatprep.subr.mxu0 %v2793
  %3352 = vmatpush1.msra.mxu0 %v2792
  %3353 = vmatprep.subr.mxu0 0.0
  %3354 = vmatpush2.msra.mxu0 0.0
  %3355 = vmatprep.subr.mxu0 0.0
  %3356 = vmatpush2.msra.mxu0 0.0
  %3357 = vmatprep.subr.mxu0 0.0
  %3358 = vmatpush2.msra.mxu0 0.0
  %3359 = vmatprep.subr.mxu0 0.0
  %3360 = vmatpush2.msra.mxu0 0.0
  %3361 = vmatprep.subr.mxu0 0.0
  %3362 = vmatpush2.msra.mxu0 0.0
  %3363 = vmatprep.subr.mxu0 0.0
  %3364 = vmatpush2.msra.mxu0 0.0
  %3365 = vmatprep.subr.mxu0 0.0
  %3366 = vmatpush2.msra.mxu0 0.0
  %3367 = vmatprep.subr.mxu0 0.0
  %3368 = vmatpush2.msra.mxu0 0.0
  %3369 = vmatprep.subr.mxu0 0.0
  %3370 = vmatpush2.msra.mxu0 0.0
  %3371 = vmatprep.subr.mxu0 0.0
  %3372 = vmatpush2.msra.mxu0 0.0
  %3373 = vmatprep.subr.mxu0 0.0
  %3374 = vmatpush2.msra.mxu0 0.0
  %3375 = vmatprep.subr.mxu0 0.0
  %3376 = vmatpush2.msra.mxu0 0.0
  %3377 = vmatprep.subr.mxu0 0.0
  %3378 = vmatpush2.msra.mxu0 0.0
  %3379 = vmatprep.subr.mxu0 0.0
  %3380 = vmatpush2.msra.mxu0 0.0
  %3381 = vmatprep.subr.mxu0 0.0
  %3382 = vmatpush2.msra.mxu0 0.0
  %3383 = vmatprep.subr.mxu0 0.0
  %3384 = vmatpush2.msra.mxu0 0.0
  %3385 = vmatprep.mubr.f32.mxu0 0.0
  %3386 = vmatmul.mubr.f32.gmra.mxu0 %v3106
  %v3387 = vpop.f32.mrf.mxu0
  %v3388 = vadd.f32 0.0, %v3387
  %v3389 = vpop.f32.mrf.mxu0
  %v3390 = vadd.f32 0.0, %v3389
  %3391 = vdwg.mxu0
  %3392 = vmatprep.subr.mxu0 0.0
  %3393 = vmatpush1.msra.mxu0 0.0
  %3394 = vmatprep.subr.mxu0 0.0
  %3395 = vmatpush1.msra.mxu0 0.0
  %3396 = vmatprep.subr.mxu0 0.0
  %3397 = vmatpush1.msra.mxu0 0.0
  %3398 = vmatprep.subr.mxu0 0.0
  %3399 = vmatpush1.msra.mxu0 0.0
  %3400 = vmatprep.subr.mxu0 0.0
  %3401 = vmatpush1.msra.mxu0 0.0
  %3402 = vmatprep.subr.mxu0 0.0
  %3403 = vmatpush1.msra.mxu0 0.0
  %3404 = vmatprep.subr.mxu0 0.0
  %3405 = vmatpush1.msra.mxu0 0.0
  %3406 = vmatprep.subr.mxu0 0.0
  %3407 = vmatpush1.msra.mxu0 %v3094
  %3408 = vmatprep.subr.mxu0 0.0
  %3409 = vmatpush1.msra.mxu0 %v3056
  %3410 = vmatprep.subr.mxu0 0.0
  %3411 = vmatpush1.msra.mxu0 %v3018
  %3412 = vmatprep.subr.mxu0 0.0
  %3413 = vmatpush1.msra.mxu0 %v2980
  %3414 = vmatprep.subr.mxu0 0.0
  %3415 = vmatpush1.msra.mxu0 %v2942
  %3416 = vmatprep.subr.mxu0 0.0
  %3417 = vmatpush1.msra.mxu0 %v2904
  %3418 = vmatprep.subr.mxu0 0.0
  %3419 = vmatpush1.msra.mxu0 %v2857
  %3420 = vmatprep.subr.mxu0 0.0
  %3421 = vmatpush1.msra.mxu0 %v2822
  %3422 = vmatprep.subr.mxu0 0.0
  %3423 = vmatpush1.msra.mxu0 %v2794
  %3424 = vmatprep.subr.mxu0 0.0
  %3425 = vmatpush2.msra.mxu0 0.0
  %3426 = vmatprep.subr.mxu0 0.0
  %3427 = vmatpush2.msra.mxu0 0.0
  %3428 = vmatprep.subr.mxu0 0.0
  %3429 = vmatpush2.msra.mxu0 0.0
  %3430 = vmatprep.subr.mxu0 0.0
  %3431 = vmatpush2.msra.mxu0 0.0
  %3432 = vmatprep.subr.mxu0 0.0
  %3433 = vmatpush2.msra.mxu0 0.0
  %3434 = vmatprep.subr.mxu0 0.0
  %3435 = vmatpush2.msra.mxu0 0.0
  %3436 = vmatprep.subr.mxu0 0.0
  %3437 = vmatpush2.msra.mxu0 0.0
  %3438 = vmatprep.subr.mxu0 0.0
  %3439 = vmatpush2.msra.mxu0 0.0
  %3440 = vmatprep.subr.mxu0 0.0
  %3441 = vmatpush2.msra.mxu0 0.0
  %3442 = vmatprep.subr.mxu0 0.0
  %3443 = vmatpush2.msra.mxu0 0.0
  %3444 = vmatprep.subr.mxu0 0.0
  %3445 = vmatpush2.msra.mxu0 0.0
  %3446 = vmatprep.subr.mxu0 0.0
  %3447 = vmatpush2.msra.mxu0 0.0
  %3448 = vmatprep.subr.mxu0 0.0
  %3449 = vmatpush2.msra.mxu0 0.0
  %3450 = vmatprep.subr.mxu0 0.0
  %3451 = vmatpush2.msra.mxu0 0.0
  %3452 = vmatprep.subr.mxu0 0.0
  %3453 = vmatpush2.msra.mxu0 0.0
  %3454 = vmatprep.subr.mxu0 0.0
  %3455 = vmatpush2.msra.mxu0 0.0
  %3456 = vmatprep.mubr.f32.mxu0 0.0
  %3457 = vmatmul.mubr.f32.gmra.mxu0 %v3106
  %v3458 = vpop.f32.mrf.mxu0
  %v3459 = vadd.f32 0.0, %v3458
  %v3460 = vpop.f32.mrf.mxu0
  %3461 = vdwg.mxu0
  %v3462 = vld [vmem:[%s16] sm:$0xff]
  %v3463 = vld [vmem:[%s16 + $0x8] sm:$0x1]
  %v3466 = vlaneseq
  %v3467 = vshrl.u32 %v3466, 7
  %v3468 = vsub.s32 0, %v3467
  %v3469 = vrot.slane %v3462, %v3468
  %v3470 = vlaneseq
  %v3471 = vshrl.u32 %v3470, 7
  %v3472 = vsub.s32 1, %v3471
  %v3473 = vrot.slane %v3462, %v3472
  %v3474 = vlaneseq
  %v3475 = vshrl.u32 %v3474, 7
  %v3476 = vsub.s32 2, %v3475
  %v3477 = vrot.slane %v3462, %v3476
  %v3478 = vlaneseq
  %v3479 = vshrl.u32 %v3478, 7
  %v3480 = vsub.s32 3, %v3479
  %v3481 = vrot.slane %v3462, %v3480
  %v3482 = vlaneseq
  %v3483 = vshrl.u32 %v3482, 7
  %v3484 = vsub.s32 4, %v3483
  %v3485 = vrot.slane %v3462, %v3484
  %v3486 = vlaneseq
  %v3487 = vshrl.u32 %v3486, 7
  %v3488 = vsub.s32 5, %v3487
  %v3489 = vrot.slane %v3462, %v3488
  %v3490 = vlaneseq
  %v3491 = vshrl.u32 %v3490, 7
  %v3492 = vsub.s32 6, %v3491
  %v3493 = vrot.slane %v3462, %v3492
  %v3494 = vlaneseq
  %v3495 = vshrl.u32 %v3494, 7
  %v3496 = vsub.s32 7, %v3495
  %v3497 = vrot.slane %v3462, %v3496
  %v3498 = vlaneseq
  %v3499 = vshrl.u32 %v3498, 7
  %v3500 = vsub.s32 0, %v3499
  %v3501 = vrot.slane %v3463, %v3500
  %v3511 = vmul.f32 %v3175, %v3469
  %v3512 = vmul.f32 %v3177, %v3473
  %v3513 = vmul.f32 %v3246, %v3477
  %v3514 = vmul.f32 %v3248, %v3481
  %v3515 = vmul.f32 %v3317, %v3485
  %v3516 = vmul.f32 %v3319, %v3489
  %v3517 = vmul.f32 %v3388, %v3493
  %v3518 = vmul.f32 %v3390, %v3497
  %v3519 = vmul.f32 %v3459, %v3501
  %v3520 = vadd.f32 %v3511, %v3512
  %v3521 = vadd.f32 %v3520, %v3513
  %v3522 = vadd.f32 %v3521, %v3514
  %v3523 = vadd.f32 %v3522, %v3515
  %v3524 = vadd.f32 %v3523, %v3516
  %v3525 = vadd.f32 %v3524, %v3517
  %v3526 = vadd.f32 %v3525, %v3518
  %vm3527 = vcmask 916480
  %v3528 = vsel %vm3527, %v3519, 0.0
  %v3529 = vadd.f32 %v3526, %v3528
  %3530 = vadd.xlane.f32.xlu0 %v3529
  %v3531 = vpop.xlane.xlu0 %3530
  %v3532 = vmul.f32 %v3531, 0.0015432099
  %v3533 = vmul.f32 %v3511, %v3175
  %v3534 = vmul.f32 %v3512, %v3177
  %v3535 = vmul.f32 %v3513, %v3246
  %v3536 = vmul.f32 %v3514, %v3248
  %v3537 = vmul.f32 %v3515, %v3317
  %v3538 = vmul.f32 %v3516, %v3319
  %v3539 = vmul.f32 %v3517, %v3388
  %v3540 = vmul.f32 %v3518, %v3390
  %v3541 = vmul.f32 %v3519, %v3459
  %v3542 = vadd.f32 %v3533, %v3534
  %v3543 = vadd.f32 %v3542, %v3535
  %v3544 = vadd.f32 %v3543, %v3536
  %v3545 = vadd.f32 %v3544, %v3537
  %v3546 = vadd.f32 %v3545, %v3538
  %v3547 = vadd.f32 %v3546, %v3539
  %v3548 = vadd.f32 %v3547, %v3540
  %v3549 = vsel %vm3527, %v3541, 0.0
  %v3550 = vadd.f32 %v3548, %v3549
  %3551 = vadd.xlane.f32.xlu0 %v3550
  %v3552 = vpop.xlane.xlu0 %3551
  %v3553 = vmul.f32 %v3552, 0.0015432099
  %v3554 = vmul.f32 %v3532, %v3532
  %v3555 = vsub.f32 %v3553, %v3554
  %v3556 = vmax.f32 %v3555, 0.0
  %v3557 = vld [vmem:[%s14] sm:$0xff]
  %v3558 = vadd.f32 %v3556, 1e-05
  %v3559 = vrsqrt.pop %v3558
  %v3560 = vmul.f32 %v3557, %v3559
  %v3561 = vld [vmem:[%s15] sm:$0xff]
  %v3562 = vmul.f32 %v3532, %v3560
  %v3563 = vsub.f32 %v3561, %v3562
  %3565 = vset.pattern.permute.xlu0 0
  %3566 = vperm.xlu0 %3565, %v3560
  %v3567 = vpop.permute.xlu0 %3566
  %v3569 = vmul.f32 %v3175, %v3567
  %v3570 = vmul.f32 %v3177, %v3567
  %v3571 = vmul.f32 %v3246, %v3567
  %v3572 = vmul.f32 %v3248, %v3567
  %v3573 = vmul.f32 %v3317, %v3567
  %v3574 = vmul.f32 %v3319, %v3567
  %v3575 = vmul.f32 %v3388, %v3567
  %v3576 = vmul.f32 %v3390, %v3567
  %v3577 = vmul.f32 %v3459, %v3567
  %3579 = vset.pattern.permute.xlu0 0
  %3580 = vperm.xlu0 %3579, %v3563
  %v3581 = vpop.permute.xlu0 %3580
  %v3583 = vadd.f32 %v3569, %v3581
  %v3584 = vadd.f32 %v3570, %v3581
  %v3585 = vadd.f32 %v3571, %v3581
  %v3586 = vadd.f32 %v3572, %v3581
  %v3587 = vadd.f32 %v3573, %v3581
  %v3588 = vadd.f32 %v3574, %v3581
  %v3589 = vadd.f32 %v3575, %v3581
  %v3590 = vadd.f32 %v3576, %v3581
  %v3591 = vadd.f32 %v3577, %v3581
  %vm3592 = vcmp.ge.f32.partialorder %v3583, 0.0
  %vm3593 = vcmp.ge.f32.partialorder %v3584, 0.0
  %vm3594 = vcmp.ge.f32.partialorder %v3585, 0.0
  %vm3595 = vcmp.ge.f32.partialorder %v3586, 0.0
  %vm3596 = vcmp.ge.f32.partialorder %v3587, 0.0
  %vm3597 = vcmp.ge.f32.partialorder %v3588, 0.0
  %vm3598 = vcmp.ge.f32.partialorder %v3589, 0.0
  %vm3599 = vcmp.ge.f32.partialorder %v3590, 0.0
  %vm3600 = vcmp.ge.f32.partialorder %v3591, 0.0
  %v3601 = vmul.f32 %v3583, 0.2
  %v3602 = vmul.f32 %v3584, 0.2
  %v3603 = vmul.f32 %v3585, 0.2
  %v3604 = vmul.f32 %v3586, 0.2
  %v3605 = vmul.f32 %v3587, 0.2
  %v3606 = vmul.f32 %v3588, 0.2
  %v3607 = vmul.f32 %v3589, 0.2
  %v3608 = vmul.f32 %v3590, 0.2
  %v3609 = vmul.f32 %v3591, 0.2
  %v3610 = vsel %vm3592, %v3583, %v3601
  %v3611 = vsel %vm3593, %v3584, %v3602
  %v3612 = vsel %vm3594, %v3585, %v3603
  %v3613 = vsel %vm3595, %v3586, %v3604
  %v3614 = vsel %vm3596, %v3587, %v3605
  %v3615 = vsel %vm3597, %v3588, %v3606
  %v3616 = vsel %vm3598, %v3589, %v3607
  %v3617 = vsel %vm3599, %v3590, %v3608
  %v3618 = vsel %vm3600, %v3591, %v3609
  %v3619 = vmul.f32 %v3610, %v3469
  %v3620 = vmul.f32 %v3611, %v3473
  %v3621 = vmul.f32 %v3612, %v3477
  %v3622 = vmul.f32 %v3613, %v3481
  %v3623 = vmul.f32 %v3614, %v3485
  %v3624 = vmul.f32 %v3615, %v3489
  %v3625 = vmul.f32 %v3616, %v3493
  %v3626 = vmul.f32 %v3617, %v3497
  %v3627 = vmul.f32 %v3618, %v3501
  %3637 = vrot.lane.b32.xlu0 %v3619, 127
  %v3638 = vpop.permute.xlu0 %3637
  %3639 = vrot.lane.b32.xlu0 %v3620, 127
  %v3640 = vpop.permute.xlu0 %3639
  %3641 = vrot.lane.b32.xlu0 %v3621, 127
  %v3642 = vpop.permute.xlu0 %3641
  %3643 = vrot.lane.b32.xlu0 %v3622, 127
  %v3644 = vpop.permute.xlu0 %3643
  %3645 = vrot.lane.b32.xlu0 %v3623, 127
  %v3646 = vpop.permute.xlu0 %3645
  %3647 = vrot.lane.b32.xlu0 %v3624, 127
  %v3648 = vpop.permute.xlu0 %3647
  %3649 = vrot.lane.b32.xlu0 %v3625, 127
  %v3650 = vpop.permute.xlu0 %3649
  %3651 = vrot.lane.b32.xlu0 %v3626, 127
  %v3652 = vpop.permute.xlu0 %3651
  %3653 = vrot.lane.b32.xlu0 %v3627, 127
  %v3654 = vpop.permute.xlu0 %3653
  %v3655 = vsel %vm106, %v3638, %v3640
  %v3656 = vsel %vm106, %v3640, %v3642
  %v3657 = vsel %vm106, %v3642, %v3644
  %v3658 = vsel %vm106, %v3644, %v3646
  %v3659 = vsel %vm106, %v3646, %v3648
  %v3660 = vsel %vm106, %v3648, %v3650
  %v3661 = vsel %vm106, %v3650, %v3652
  %v3662 = vsel %vm106, %v3652, %v3654
  %3672 = vrot.lane.b32.xlu0 %v3619, 126
  %v3673 = vpop.permute.xlu0 %3672
  %3674 = vrot.lane.b32.xlu0 %v3620, 126
  %v3675 = vpop.permute.xlu0 %3674
  %3676 = vrot.lane.b32.xlu0 %v3621, 126
  %v3677 = vpop.permute.xlu0 %3676
  %3678 = vrot.lane.b32.xlu0 %v3622, 126
  %v3679 = vpop.permute.xlu0 %3678
  %3680 = vrot.lane.b32.xlu0 %v3623, 126
  %v3681 = vpop.permute.xlu0 %3680
  %3682 = vrot.lane.b32.xlu0 %v3624, 126
  %v3683 = vpop.permute.xlu0 %3682
  %3684 = vrot.lane.b32.xlu0 %v3625, 126
  %v3685 = vpop.permute.xlu0 %3684
  %3686 = vrot.lane.b32.xlu0 %v3626, 126
  %v3687 = vpop.permute.xlu0 %3686
  %3688 = vrot.lane.b32.xlu0 %v3627, 126
  %v3689 = vpop.permute.xlu0 %3688
  %v3690 = vsel %vm150, %v3673, %v3675
  %v3691 = vsel %vm150, %v3675, %v3677
  %v3692 = vsel %vm150, %v3677, %v3679
  %v3693 = vsel %vm150, %v3679, %v3681
  %v3694 = vsel %vm150, %v3681, %v3683
  %v3695 = vsel %vm150, %v3683, %v3685
  %v3696 = vsel %vm150, %v3685, %v3687
  %v3697 = vsel %vm150, %v3687, %v3689
  %3707 = vrot.lane.b32.xlu0 %v3619, 102
  %v3708 = vpop.permute.xlu0 %3707
  %3709 = vrot.lane.b32.xlu0 %v3620, 102
  %v3710 = vpop.permute.xlu0 %3709
  %3711 = vrot.lane.b32.xlu0 %v3621, 102
  %v3712 = vpop.permute.xlu0 %3711
  %3713 = vrot.lane.b32.xlu0 %v3622, 102
  %v3714 = vpop.permute.xlu0 %3713
  %3715 = vrot.lane.b32.xlu0 %v3623, 102
  %v3716 = vpop.permute.xlu0 %3715
  %3717 = vrot.lane.b32.xlu0 %v3624, 102
  %v3718 = vpop.permute.xlu0 %3717
  %3719 = vrot.lane.b32.xlu0 %v3625, 102
  %v3720 = vpop.permute.xlu0 %3719
  %3721 = vrot.lane.b32.xlu0 %v3626, 102
  %v3722 = vpop.permute.xlu0 %3721
  %3723 = vrot.lane.b32.xlu0 %v3627, 102
  %v3724 = vpop.permute.xlu0 %3723
  %v3725 = vsel %vm194, %v3708, %v3710
  %v3726 = vsel %vm194, %v3710, %v3712
  %v3727 = vsel %vm194, %v3712, %v3714
  %v3728 = vsel %vm194, %v3714, %v3716
  %v3729 = vsel %vm194, %v3716, %v3718
  %v3730 = vsel %vm194, %v3718, %v3720
  %v3731 = vsel %vm194, %v3720, %v3722
  %v3732 = vsel %vm194, %v3722, %v3724
  %3742 = vrot.lane.b32.xlu0 %v3619, 101
  %v3743 = vpop.permute.xlu0 %3742
  %3744 = vrot.lane.b32.xlu0 %v3620, 101
  %v3745 = vpop.permute.xlu0 %3744
  %3746 = vrot.lane.b32.xlu0 %v3621, 101
  %v3747 = vpop.permute.xlu0 %3746
  %3748 = vrot.lane.b32.xlu0 %v3622, 101
  %v3749 = vpop.permute.xlu0 %3748
  %3750 = vrot.lane.b32.xlu0 %v3623, 101
  %v3751 = vpop.permute.xlu0 %3750
  %3752 = vrot.lane.b32.xlu0 %v3624, 101
  %v3753 = vpop.permute.xlu0 %3752
  %3754 = vrot.lane.b32.xlu0 %v3625, 101
  %v3755 = vpop.permute.xlu0 %3754
  %3756 = vrot.lane.b32.xlu0 %v3626, 101
  %v3757 = vpop.permute.xlu0 %3756
  %3758 = vrot.lane.b32.xlu0 %v3627, 101
  %v3759 = vpop.permute.xlu0 %3758
  %v3760 = vsel %vm238, %v3743, %v3745
  %v3761 = vsel %vm238, %v3745, %v3747
  %v3762 = vsel %vm238, %v3747, %v3749
  %v3763 = vsel %vm238, %v3749, %v3751
  %v3764 = vsel %vm238, %v3751, %v3753
  %v3765 = vsel %vm238, %v3753, %v3755
  %v3766 = vsel %vm238, %v3755, %v3757
  %v3767 = vsel %vm238, %v3757, %v3759
  %3777 = vrot.lane.b32.xlu0 %v3619, 100
  %v3778 = vpop.permute.xlu0 %3777
  %3779 = vrot.lane.b32.xlu0 %v3620, 100
  %v3780 = vpop.permute.xlu0 %3779
  %3781 = vrot.lane.b32.xlu0 %v3621, 100
  %v3782 = vpop.permute.xlu0 %3781
  %3783 = vrot.lane.b32.xlu0 %v3622, 100
  %v3784 = vpop.permute.xlu0 %3783
  %3785 = vrot.lane.b32.xlu0 %v3623, 100
  %v3786 = vpop.permute.xlu0 %3785
  %3787 = vrot.lane.b32.xlu0 %v3624, 100
  %v3788 = vpop.permute.xlu0 %3787
  %3789 = vrot.lane.b32.xlu0 %v3625, 100
  %v3790 = vpop.permute.xlu0 %3789
  %3791 = vrot.lane.b32.xlu0 %v3626, 100
  %v3792 = vpop.permute.xlu0 %3791
  %3793 = vrot.lane.b32.xlu0 %v3627, 100
  %v3794 = vpop.permute.xlu0 %3793
  %v3795 = vsel %vm282, %v3778, %v3780
  %v3796 = vsel %vm282, %v3780, %v3782
  %v3797 = vsel %vm282, %v3782, %v3784
  %v3798 = vsel %vm282, %v3784, %v3786
  %v3799 = vsel %vm282, %v3786, %v3788
  %v3800 = vsel %vm282, %v3788, %v3790
  %v3801 = vsel %vm282, %v3790, %v3792
  %v3802 = vsel %vm282, %v3792, %v3794
  %3812 = vrot.lane.b32.xlu0 %v3619, 76
  %v3813 = vpop.permute.xlu0 %3812
  %3814 = vrot.lane.b32.xlu0 %v3620, 76
  %v3815 = vpop.permute.xlu0 %3814
  %3816 = vrot.lane.b32.xlu0 %v3621, 76
  %v3817 = vpop.permute.xlu0 %3816
  %3818 = vrot.lane.b32.xlu0 %v3622, 76
  %v3819 = vpop.permute.xlu0 %3818
  %3820 = vrot.lane.b32.xlu0 %v3623, 76
  %v3821 = vpop.permute.xlu0 %3820
  %3822 = vrot.lane.b32.xlu0 %v3624, 76
  %v3823 = vpop.permute.xlu0 %3822
  %3824 = vrot.lane.b32.xlu0 %v3625, 76
  %v3825 = vpop.permute.xlu0 %3824
  %3826 = vrot.lane.b32.xlu0 %v3626, 76
  %v3827 = vpop.permute.xlu0 %3826
  %3828 = vrot.lane.b32.xlu0 %v3627, 76
  %v3829 = vpop.permute.xlu0 %3828
  %v3830 = vsel %vm326, %v3813, %v3815
  %v3831 = vsel %vm326, %v3815, %v3817
  %v3832 = vsel %vm326, %v3817, %v3819
  %v3833 = vsel %vm326, %v3819, %v3821
  %v3834 = vsel %vm326, %v3821, %v3823
  %v3835 = vsel %vm326, %v3823, %v3825
  %v3836 = vsel %vm326, %v3825, %v3827
  %v3837 = vsel %vm326, %v3827, %v3829
  %3847 = vrot.lane.b32.xlu0 %v3619, 75
  %v3848 = vpop.permute.xlu0 %3847
  %3849 = vrot.lane.b32.xlu0 %v3620, 75
  %v3850 = vpop.permute.xlu0 %3849
  %3851 = vrot.lane.b32.xlu0 %v3621, 75
  %v3852 = vpop.permute.xlu0 %3851
  %3853 = vrot.lane.b32.xlu0 %v3622, 75
  %v3854 = vpop.permute.xlu0 %3853
  %3855 = vrot.lane.b32.xlu0 %v3623, 75
  %v3856 = vpop.permute.xlu0 %3855
  %3857 = vrot.lane.b32.xlu0 %v3624, 75
  %v3858 = vpop.permute.xlu0 %3857
  %3859 = vrot.lane.b32.xlu0 %v3625, 75
  %v3860 = vpop.permute.xlu0 %3859
  %3861 = vrot.lane.b32.xlu0 %v3626, 75
  %v3862 = vpop.permute.xlu0 %3861
  %3863 = vrot.lane.b32.xlu0 %v3627, 75
  %v3864 = vpop.permute.xlu0 %3863
  %v3865 = vsel %vm370, %v3848, %v3850
  %v3866 = vsel %vm370, %v3850, %v3852
  %v3867 = vsel %vm370, %v3852, %v3854
  %v3868 = vsel %vm370, %v3854, %v3856
  %v3869 = vsel %vm370, %v3856, %v3858
  %v3870 = vsel %vm370, %v3858, %v3860
  %v3871 = vsel %vm370, %v3860, %v3862
  %v3872 = vsel %vm370, %v3862, %v3864
  %3882 = vrot.lane.b32.xlu0 %v3619, 74
  %v3883 = vpop.permute.xlu0 %3882
  %3884 = vrot.lane.b32.xlu0 %v3620, 74
  %v3885 = vpop.permute.xlu0 %3884
  %3886 = vrot.lane.b32.xlu0 %v3621, 74
  %v3887 = vpop.permute.xlu0 %3886
  %3888 = vrot.lane.b32.xlu0 %v3622, 74
  %v3889 = vpop.permute.xlu0 %3888
  %3890 = vrot.lane.b32.xlu0 %v3623, 74
  %v3891 = vpop.permute.xlu0 %3890
  %3892 = vrot.lane.b32.xlu0 %v3624, 74
  %v3893 = vpop.permute.xlu0 %3892
  %3894 = vrot.lane.b32.xlu0 %v3625, 74
  %v3895 = vpop.permute.xlu0 %3894
  %3896 = vrot.lane.b32.xlu0 %v3626, 74
  %v3897 = vpop.permute.xlu0 %3896
  %3898 = vrot.lane.b32.xlu0 %v3627, 74
  %v3899 = vpop.permute.xlu0 %3898
  %v3900 = vsel %vm414, %v3883, %v3885
  %v3901 = vsel %vm414, %v3885, %v3887
  %v3902 = vsel %vm414, %v3887, %v3889
  %v3903 = vsel %vm414, %v3889, %v3891
  %v3904 = vsel %vm414, %v3891, %v3893
  %v3905 = vsel %vm414, %v3893, %v3895
  %v3906 = vsel %vm414, %v3895, %v3897
  %v3907 = vsel %vm414, %v3897, %v3899
  %v3917 = vld [vmem:[%s17] sm:$0x7]
  %v3918 = vld [vmem:[%s18] sm:$0x7]
  %3920 = vset.pattern.permute.xlu0 0
  %3921 = vperm.xlu0 %3920, %v3918
  %v3922 = vpop.permute.xlu0 %3921
  %v3925 = vsel %vm437, %v3917, 0
  %3927 = vmatprep.subr.mxu0 0.0
  %3928 = vmatpush1.msra.mxu0 0.0
  %3929 = vmatprep.subr.mxu0 0.0
  %3930 = vmatpush1.msra.mxu0 0.0
  %3931 = vmatprep.subr.mxu0 0.0
  %3932 = vmatpush1.msra.mxu0 0.0
  %3933 = vmatprep.subr.mxu0 0.0
  %3934 = vmatpush1.msra.mxu0 0.0
  %3935 = vmatprep.subr.mxu0 0.0
  %3936 = vmatpush1.msra.mxu0 0.0
  %3937 = vmatprep.subr.mxu0 0.0
  %3938 = vmatpush1.msra.mxu0 0.0
  %3939 = vmatprep.subr.mxu0 0.0
  %3940 = vmatpush1.msra.mxu0 0.0
  %3941 = vmatprep.subr.mxu0 %v3901
  %3942 = vmatpush1.msra.mxu0 %v3900
  %3943 = vmatprep.subr.mxu0 %v3866
  %3944 = vmatpush1.msra.mxu0 %v3865
  %3945 = vmatprep.subr.mxu0 %v3831
  %3946 = vmatpush1.msra.mxu0 %v3830
  %3947 = vmatprep.subr.mxu0 %v3796
  %3948 = vmatpush1.msra.mxu0 %v3795
  %3949 = vmatprep.subr.mxu0 %v3761
  %3950 = vmatpush1.msra.mxu0 %v3760
  %3951 = vmatprep.subr.mxu0 %v3726
  %3952 = vmatpush1.msra.mxu0 %v3725
  %3953 = vmatprep.subr.mxu0 %v3691
  %3954 = vmatpush1.msra.mxu0 %v3690
  %3955 = vmatprep.subr.mxu0 %v3656
  %3956 = vmatpush1.msra.mxu0 %v3655
  %3957 = vmatprep.subr.mxu0 %v3620
  %3958 = vmatpush1.msra.mxu0 %v3619
  %3959 = vmatprep.subr.mxu0 0.0
  %3960 = vmatpush2.msra.mxu0 0.0
  %3961 = vmatprep.subr.mxu0 0.0
  %3962 = vmatpush2.msra.mxu0 0.0
  %3963 = vmatprep.subr.mxu0 0.0
  %3964 = vmatpush2.msra.mxu0 0.0
  %3965 = vmatprep.subr.mxu0 0.0
  %3966 = vmatpush2.msra.mxu0 0.0
  %3967 = vmatprep.subr.mxu0 0.0
  %3968 = vmatpush2.msra.mxu0 0.0
  %3969 = vmatprep.subr.mxu0 0.0
  %3970 = vmatpush2.msra.mxu0 0.0
  %3971 = vmatprep.subr.mxu0 0.0
  %3972 = vmatpush2.msra.mxu0 0.0
  %3973 = vmatprep.subr.mxu0 0.0
  %3974 = vmatpush2.msra.mxu0 0.0
  %3975 = vmatprep.subr.mxu0 0.0
  %3976 = vmatpush2.msra.mxu0 0.0
  %3977 = vmatprep.subr.mxu0 0.0
  %3978 = vmatpush2.msra.mxu0 0.0
  %3979 = vmatprep.subr.mxu0 0.0
  %3980 = vmatpush2.msra.mxu0 0.0
  %3981 = vmatprep.subr.mxu0 0.0
  %3982 = vmatpush2.msra.mxu0 0.0
  %3983 = vmatprep.subr.mxu0 0.0
  %3984 = vmatpush2.msra.mxu0 0.0
  %3985 = vmatprep.subr.mxu0 0.0
  %3986 = vmatpush2.msra.mxu0 0.0
  %3987 = vmatprep.subr.mxu0 0.0
  %3988 = vmatpush2.msra.mxu0 0.0
  %3989 = vmatprep.subr.mxu0 0.0
  %3990 = vmatpush2.msra.mxu0 0.0
  %3991 = vmatprep.mubr.f32.mxu0 0.0
  %3992 = vmatmul.mubr.f32.gmra.mxu0 %v3925
  %v3993 = vpop.f32.mrf.mxu0
  %v3994 = vadd.f32 %v3922, %v3993
  %v3995 = vpop.f32.mrf.mxu0
  %v3996 = vadd.f32 %v3922, %v3995
  %3997 = vdwg.mxu0
  %3998 = vmatprep.subr.mxu0 0.0
  %3999 = vmatpush1.msra.mxu0 0.0
  %4000 = vmatprep.subr.mxu0 0.0
  %4001 = vmatpush1.msra.mxu0 0.0
  %4002 = vmatprep.subr.mxu0 0.0
  %4003 = vmatpush1.msra.mxu0 0.0
  %4004 = vmatprep.subr.mxu0 0.0
  %4005 = vmatpush1.msra.mxu0 0.0
  %4006 = vmatprep.subr.mxu0 0.0
  %4007 = vmatpush1.msra.mxu0 0.0
  %4008 = vmatprep.subr.mxu0 0.0
  %4009 = vmatpush1.msra.mxu0 0.0
  %4010 = vmatprep.subr.mxu0 0.0
  %4011 = vmatpush1.msra.mxu0 0.0
  %4012 = vmatprep.subr.mxu0 %v3903
  %4013 = vmatpush1.msra.mxu0 %v3902
  %4014 = vmatprep.subr.mxu0 %v3868
  %4015 = vmatpush1.msra.mxu0 %v3867
  %4016 = vmatprep.subr.mxu0 %v3833
  %4017 = vmatpush1.msra.mxu0 %v3832
  %4018 = vmatprep.subr.mxu0 %v3798
  %4019 = vmatpush1.msra.mxu0 %v3797
  %4020 = vmatprep.subr.mxu0 %v3763
  %4021 = vmatpush1.msra.mxu0 %v3762
  %4022 = vmatprep.subr.mxu0 %v3728
  %4023 = vmatpush1.msra.mxu0 %v3727
  %4024 = vmatprep.subr.mxu0 %v3693
  %4025 = vmatpush1.msra.mxu0 %v3692
  %4026 = vmatprep.subr.mxu0 %v3658
  %4027 = vmatpush1.msra.mxu0 %v3657
  %4028 = vmatprep.subr.mxu0 %v3622
  %4029 = vmatpush1.msra.mxu0 %v3621
  %4030 = vmatprep.subr.mxu0 0.0
  %4031 = vmatpush2.msra.mxu0 0.0
  %4032 = vmatprep.subr.mxu0 0.0
  %4033 = vmatpush2.msra.mxu0 0.0
  %4034 = vmatprep.subr.mxu0 0.0
  %4035 = vmatpush2.msra.mxu0 0.0
  %4036 = vmatprep.subr.mxu0 0.0
  %4037 = vmatpush2.msra.mxu0 0.0
  %4038 = vmatprep.subr.mxu0 0.0
  %4039 = vmatpush2.msra.mxu0 0.0
  %4040 = vmatprep.subr.mxu0 0.0
  %4041 = vmatpush2.msra.mxu0 0.0
  %4042 = vmatprep.subr.mxu0 0.0
  %4043 = vmatpush2.msra.mxu0 0.0
  %4044 = vmatprep.subr.mxu0 0.0
  %4045 = vmatpush2.msra.mxu0 0.0
  %4046 = vmatprep.subr.mxu0 0.0
  %4047 = vmatpush2.msra.mxu0 0.0
  %4048 = vmatprep.subr.mxu0 0.0
  %4049 = vmatpush2.msra.mxu0 0.0
  %4050 = vmatprep.subr.mxu0 0.0
  %4051 = vmatpush2.msra.mxu0 0.0
  %4052 = vmatprep.subr.mxu0 0.0
  %4053 = vmatpush2.msra.mxu0 0.0
  %4054 = vmatprep.subr.mxu0 0.0
  %4055 = vmatpush2.msra.mxu0 0.0
  %4056 = vmatprep.subr.mxu0 0.0
  %4057 = vmatpush2.msra.mxu0 0.0
  %4058 = vmatprep.subr.mxu0 0.0
  %4059 = vmatpush2.msra.mxu0 0.0
  %4060 = vmatprep.subr.mxu0 0.0
  %4061 = vmatpush2.msra.mxu0 0.0
  %4062 = vmatprep.mubr.f32.mxu0 0.0
  %4063 = vmatmul.mubr.f32.gmra.mxu0 %v3925
  %v4064 = vpop.f32.mrf.mxu0
  %v4065 = vadd.f32 %v3922, %v4064
  %v4066 = vpop.f32.mrf.mxu0
  %v4067 = vadd.f32 %v3922, %v4066
  %4068 = vdwg.mxu0
  %4069 = vmatprep.subr.mxu0 0.0
  %4070 = vmatpush1.msra.mxu0 0.0
  %4071 = vmatprep.subr.mxu0 0.0
  %4072 = vmatpush1.msra.mxu0 0.0
  %4073 = vmatprep.subr.mxu0 0.0
  %4074 = vmatpush1.msra.mxu0 0.0
  %4075 = vmatprep.subr.mxu0 0.0
  %4076 = vmatpush1.msra.mxu0 0.0
  %4077 = vmatprep.subr.mxu0 0.0
  %4078 = vmatpush1.msra.mxu0 0.0
  %4079 = vmatprep.subr.mxu0 0.0
  %4080 = vmatpush1.msra.mxu0 0.0
  %4081 = vmatprep.subr.mxu0 0.0
  %4082 = vmatpush1.msra.mxu0 0.0
  %4083 = vmatprep.subr.mxu0 %v3905
  %4084 = vmatpush1.msra.mxu0 %v3904
  %4085 = vmatprep.subr.mxu0 %v3870
  %4086 = vmatpush1.msra.mxu0 %v3869
  %4087 = vmatprep.subr.mxu0 %v3835
  %4088 = vmatpush1.msra.mxu0 %v3834
  %4089 = vmatprep.subr.mxu0 %v3800
  %4090 = vmatpush1.msra.mxu0 %v3799
  %4091 = vmatprep.subr.mxu0 %v3765
  %4092 = vmatpush1.msra.mxu0 %v3764
  %4093 = vmatprep.subr.mxu0 %v3730
  %4094 = vmatpush1.msra.mxu0 %v3729
  %4095 = vmatprep.subr.mxu0 %v3695
  %4096 = vmatpush1.msra.mxu0 %v3694
  %4097 = vmatprep.subr.mxu0 %v3660
  %4098 = vmatpush1.msra.mxu0 %v3659
  %4099 = vmatprep.subr.mxu0 %v3624
  %4100 = vmatpush1.msra.mxu0 %v3623
  %4101 = vmatprep.subr.mxu0 0.0
  %4102 = vmatpush2.msra.mxu0 0.0
  %4103 = vmatprep.subr.mxu0 0.0
  %4104 = vmatpush2.msra.mxu0 0.0
  %4105 = vmatprep.subr.mxu0 0.0
  %4106 = vmatpush2.msra.mxu0 0.0
  %4107 = vmatprep.subr.mxu0 0.0
  %4108 = vmatpush2.msra.mxu0 0.0
  %4109 = vmatprep.subr.mxu0 0.0
  %4110 = vmatpush2.msra.mxu0 0.0
  %4111 = vmatprep.subr.mxu0 0.0
  %4112 = vmatpush2.msra.mxu0 0.0
  %4113 = vmatprep.subr.mxu0 0.0
  %4114 = vmatpush2.msra.mxu0 0.0
  %4115 = vmatprep.subr.mxu0 0.0
  %4116 = vmatpush2.msra.mxu0 0.0
  %4117 = vmatprep.subr.mxu0 0.0
  %4118 = vmatpush2.msra.mxu0 0.0
  %4119 = vmatprep.subr.mxu0 0.0
  %4120 = vmatpush2.msra.mxu0 0.0
  %4121 = vmatprep.subr.mxu0 0.0
  %4122 = vmatpush2.msra.mxu0 0.0
  %4123 = vmatprep.subr.mxu0 0.0
  %4124 = vmatpush2.msra.mxu0 0.0
  %4125 = vmatprep.subr.mxu0 0.0
  %4126 = vmatpush2.msra.mxu0 0.0
  %4127 = vmatprep.subr.mxu0 0.0
  %4128 = vmatpush2.msra.mxu0 0.0
  %4129 = vmatprep.subr.mxu0 0.0
  %4130 = vmatpush2.msra.mxu0 0.0
  %4131 = vmatprep.subr.mxu0 0.0
  %4132 = vmatpush2.msra.mxu0 0.0
  %4133 = vmatprep.mubr.f32.mxu0 0.0
  %4134 = vmatmul.mubr.f32.gmra.mxu0 %v3925
  %v4135 = vpop.f32.mrf.mxu0
  %v4136 = vadd.f32 %v3922, %v4135
  %v4137 = vpop.f32.mrf.mxu0
  %v4138 = vadd.f32 %v3922, %v4137
  %4139 = vdwg.mxu0
  %4140 = vmatprep.subr.mxu0 0.0
  %4141 = vmatpush1.msra.mxu0 0.0
  %4142 = vmatprep.subr.mxu0 0.0
  %4143 = vmatpush1.msra.mxu0 0.0
  %4144 = vmatprep.subr.mxu0 0.0
  %4145 = vmatpush1.msra.mxu0 0.0
  %4146 = vmatprep.subr.mxu0 0.0
  %4147 = vmatpush1.msra.mxu0 0.0
  %4148 = vmatprep.subr.mxu0 0.0
  %4149 = vmatpush1.msra.mxu0 0.0
  %4150 = vmatprep.subr.mxu0 0.0
  %4151 = vmatpush1.msra.mxu0 0.0
  %4152 = vmatprep.subr.mxu0 0.0
  %4153 = vmatpush1.msra.mxu0 0.0
  %4154 = vmatprep.subr.mxu0 %v3907
  %4155 = vmatpush1.msra.mxu0 %v3906
  %4156 = vmatprep.subr.mxu0 %v3872
  %4157 = vmatpush1.msra.mxu0 %v3871
  %4158 = vmatprep.subr.mxu0 %v3837
  %4159 = vmatpush1.msra.mxu0 %v3836
  %4160 = vmatprep.subr.mxu0 %v3802
  %4161 = vmatpush1.msra.mxu0 %v3801
  %4162 = vmatprep.subr.mxu0 %v3767
  %4163 = vmatpush1.msra.mxu0 %v3766
  %4164 = vmatprep.subr.mxu0 %v3732
  %4165 = vmatpush1.msra.mxu0 %v3731
  %4166 = vmatprep.subr.mxu0 %v3697
  %4167 = vmatpush1.msra.mxu0 %v3696
  %4168 = vmatprep.subr.mxu0 %v3662
  %4169 = vmatpush1.msra.mxu0 %v3661
  %4170 = vmatprep.subr.mxu0 %v3626
  %4171 = vmatpush1.msra.mxu0 %v3625
  %4172 = vmatprep.subr.mxu0 0.0
  %4173 = vmatpush2.msra.mxu0 0.0
  %4174 = vmatprep.subr.mxu0 0.0
  %4175 = vmatpush2.msra.mxu0 0.0
  %4176 = vmatprep.subr.mxu0 0.0
  %4177 = vmatpush2.msra.mxu0 0.0
  %4178 = vmatprep.subr.mxu0 0.0
  %4179 = vmatpush2.msra.mxu0 0.0
  %4180 = vmatprep.subr.mxu0 0.0
  %4181 = vmatpush2.msra.mxu0 0.0
  %4182 = vmatprep.subr.mxu0 0.0
  %4183 = vmatpush2.msra.mxu0 0.0
  %4184 = vmatprep.subr.mxu0 0.0
  %4185 = vmatpush2.msra.mxu0 0.0
  %4186 = vmatprep.subr.mxu0 0.0
  %4187 = vmatpush2.msra.mxu0 0.0
  %4188 = vmatprep.subr.mxu0 0.0
  %4189 = vmatpush2.msra.mxu0 0.0
  %4190 = vmatprep.subr.mxu0 0.0
  %4191 = vmatpush2.msra.mxu0 0.0
  %4192 = vmatprep.subr.mxu0 0.0
  %4193 = vmatpush2.msra.mxu0 0.0
  %4194 = vmatprep.subr.mxu0 0.0
  %4195 = vmatpush2.msra.mxu0 0.0
  %4196 = vmatprep.subr.mxu0 0.0
  %4197 = vmatpush2.msra.mxu0 0.0
  %4198 = vmatprep.subr.mxu0 0.0
  %4199 = vmatpush2.msra.mxu0 0.0
  %4200 = vmatprep.subr.mxu0 0.0
  %4201 = vmatpush2.msra.mxu0 0.0
  %4202 = vmatprep.subr.mxu0 0.0
  %4203 = vmatpush2.msra.mxu0 0.0
  %4204 = vmatprep.mubr.f32.mxu0 0.0
  %4205 = vmatmul.mubr.f32.gmra.mxu0 %v3925
  %v4206 = vpop.f32.mrf.mxu0
  %v4207 = vadd.f32 %v3922, %v4206
  %v4208 = vpop.f32.mrf.mxu0
  %v4209 = vadd.f32 %v3922, %v4208
  %4210 = vdwg.mxu0
  %4211 = vmatprep.subr.mxu0 0.0
  %4212 = vmatpush1.msra.mxu0 0.0
  %4213 = vmatprep.subr.mxu0 0.0
  %4214 = vmatpush1.msra.mxu0 0.0
  %4215 = vmatprep.subr.mxu0 0.0
  %4216 = vmatpush1.msra.mxu0 0.0
  %4217 = vmatprep.subr.mxu0 0.0
  %4218 = vmatpush1.msra.mxu0 0.0
  %4219 = vmatprep.subr.mxu0 0.0
  %4220 = vmatpush1.msra.mxu0 0.0
  %4221 = vmatprep.subr.mxu0 0.0
  %4222 = vmatpush1.msra.mxu0 0.0
  %4223 = vmatprep.subr.mxu0 0.0
  %4224 = vmatpush1.msra.mxu0 0.0
  %4225 = vmatprep.subr.mxu0 0.0
  %4226 = vmatpush1.msra.mxu0 %v3899
  %4227 = vmatprep.subr.mxu0 0.0
  %4228 = vmatpush1.msra.mxu0 %v3864
  %4229 = vmatprep.subr.mxu0 0.0
  %4230 = vmatpush1.msra.mxu0 %v3829
  %4231 = vmatprep.subr.mxu0 0.0
  %4232 = vmatpush1.msra.mxu0 %v3794
  %4233 = vmatprep.subr.mxu0 0.0
  %4234 = vmatpush1.msra.mxu0 %v3759
  %4235 = vmatprep.subr.mxu0 0.0
  %4236 = vmatpush1.msra.mxu0 %v3724
  %4237 = vmatprep.subr.mxu0 0.0
  %4238 = vmatpush1.msra.mxu0 %v3689
  %4239 = vmatprep.subr.mxu0 0.0
  %4240 = vmatpush1.msra.mxu0 %v3654
  %4241 = vmatprep.subr.mxu0 0.0
  %4242 = vmatpush1.msra.mxu0 %v3627
  %4243 = vmatprep.subr.mxu0 0.0
  %4244 = vmatpush2.msra.mxu0 0.0
  %4245 = vmatprep.subr.mxu0 0.0
  %4246 = vmatpush2.msra.mxu0 0.0
  %4247 = vmatprep.subr.mxu0 0.0
  %4248 = vmatpush2.msra.mxu0 0.0
  %4249 = vmatprep.subr.mxu0 0.0
  %4250 = vmatpush2.msra.mxu0 0.0
  %4251 = vmatprep.subr.mxu0 0.0
  %4252 = vmatpush2.msra.mxu0 0.0
  %4253 = vmatprep.subr.mxu0 0.0
  %4254 = vmatpush2.msra.mxu0 0.0
  %4255 = vmatprep.subr.mxu0 0.0
  %4256 = vmatpush2.msra.mxu0 0.0
  %4257 = vmatprep.subr.mxu0 0.0
  %4258 = vmatpush2.msra.mxu0 0.0
  %4259 = vmatprep.subr.mxu0 0.0
  %4260 = vmatpush2.msra.mxu0 0.0
  %4261 = vmatprep.subr.mxu0 0.0
  %4262 = vmatpush2.msra.mxu0 0.0
  %4263 = vmatprep.subr.mxu0 0.0
  %4264 = vmatpush2.msra.mxu0 0.0
  %4265 = vmatprep.subr.mxu0 0.0
  %4266 = vmatpush2.msra.mxu0 0.0
  %4267 = vmatprep.subr.mxu0 0.0
  %4268 = vmatpush2.msra.mxu0 0.0
  %4269 = vmatprep.subr.mxu0 0.0
  %4270 = vmatpush2.msra.mxu0 0.0
  %4271 = vmatprep.subr.mxu0 0.0
  %4272 = vmatpush2.msra.mxu0 0.0
  %4273 = vmatprep.subr.mxu0 0.0
  %4274 = vmatpush2.msra.mxu0 0.0
  %4275 = vmatprep.mubr.f32.mxu0 0.0
  %4276 = vmatmul.mubr.f32.gmra.mxu0 %v3925
  %v4277 = vpop.f32.mrf.mxu0
  %v4278 = vadd.f32 %v3922, %v4277
  %v4279 = vpop.f32.mrf.mxu0
  %4280 = vdwg.mxu0
  %v4281 = vtanh.pop %v3994
  %v4282 = vtanh.pop %v3996
  %v4283 = vtanh.pop %v4065
  %v4284 = vtanh.pop %v4067
  %v4285 = vtanh.pop %v4136
  %v4286 = vtanh.pop %v4138
  %v4287 = vtanh.pop %v4207
  %v4288 = vtanh.pop %v4209
  %v4289 = vtanh.pop %v4278
  %v4298 = vcombine.low %v4281, %v4282
  %v4299 = vcombine.low %v4283, %v4284
  %v4300 = vcombine.low %v4285, %v4286
  %v4301 = vcombine.low %v4287, %v4288
  %4306 = vst [vmem:[%s19] sm:$0x77] %v4298
  %4307 = vst [vmem:[%s19 + $0x8] sm:$0x77] %v4299
  %4308 = vst [vmem:[%s19 + $0x10] sm:$0x77] %v4300
  %4309 = vst [vmem:[%s19 + $0x18] sm:$0x77] %v4301
  %vm4310 = vcmask 468992
  %4311 = vst.msk [vmem:[%s19 + $0x20] sm:$0x7] %vm4310, %v4289
  // Predicated region
  $region78: #{generator_forward.1} parent=0 // pred_check
    _
  $region79: #{generator_forward.1} parent=0 // pred_check_branch
    %4313 = sbr.rel (0) target = $region81
  $region80: #{generator_forward.1} parent=0 // pred_region
    _
  $region81: #{generator_forward.1} parent=0 // pred_fallthru
    _
  // Predicated region
  $region82: #{generator_forward.1} parent=0 // pred_check
    _
  $region83: #{generator_forward.1} parent=0 // pred_check_branch
    %4315 = sbr.rel (0) target = $region85
  $region84: #{generator_forward.1} parent=0 // pred_region
    _
  $region85: #{generator_forward.1} parent=0 // pred_fallthru
    _

</llo_original>
